<compile_context>
chip_gen: v7x
topology: tpu7x:2x2x1
jax: 0.10.0
libtpu: 0.0.40
codegen_flags: <defaults>
</compile_context>

<pallas_src>
import jax
import jax.numpy as jnp
from jax.experimental import pallas as pl
from jax.experimental.pallas import tpu as pltpu


def _round_up(n, m):
    return ((n + m - 1) // m) * m


# --------------------------------------------------------------------------
# Parameter init (deterministic, synthetic; PyTorch-like layouts).
# --------------------------------------------------------------------------
def init_params(key, input_hw, conv_structure, pool_depth,
                expert_hidden, expert_out, mlp_factor, mlp_out):
    H, W = input_hw
    C = conv_structure[-1]
    Hc = H // (2 ** pool_depth)
    Wc = W // (2 ** pool_depth)
    keys = iter(jax.random.split(key, 16))
    params = {}

    convs = []
    prev = 1
    for c in conv_structure:
        wk = jax.random.normal(next(keys), (c, prev, 3, 3), jnp.float32) * 0.1
        bk = jax.random.normal(next(keys), (c,), jnp.float32) * 0.01
        convs.append((wk, bk))
        prev = c
    params["convs"] = convs

    params["attn_w"] = jax.random.normal(next(keys), (Hc * Wc, 1), jnp.float32) * 0.1
    params["attn_b"] = jnp.zeros((1,), jnp.float32)

    params["e_w1"] = jax.random.normal(next(keys), (C, Wc, expert_hidden), jnp.float32) * 0.2
    params["e_b1"] = jax.random.normal(next(keys), (C, expert_hidden), jnp.float32) * 0.01
    params["e_w2"] = jax.random.normal(next(keys), (C, expert_hidden, expert_out), jnp.float32) * 0.2
    params["e_b2"] = jax.random.normal(next(keys), (C, expert_out), jnp.float32) * 0.01

    fin = C * expert_out
    hid = fin * mlp_factor
    params["m_w1"] = jax.random.normal(next(keys), (fin, hid), jnp.float32) * 0.1
    params["m_b1"] = jnp.zeros((hid,), jnp.float32)
    params["m_w2"] = jax.random.normal(next(keys), (hid, mlp_out), jnp.float32) * 0.1
    params["m_b2"] = jnp.zeros((mlp_out,), jnp.float32)
    return params


# --------------------------------------------------------------------------
# One-time host-side packing of ALL weights into a single lane-dense slab.
# --------------------------------------------------------------------------
def pack_params(params, input_hw, pool_depth):
    H, W = input_hw
    convs = params["convs"]
    conv_channels = tuple(int(w.shape[0]) for (w, _) in convs)
    C = conv_channels[-1]
    Hc, Wc = H // (2 ** pool_depth), W // (2 ** pool_depth)
    Hd = int(params["e_w1"].shape[2])
    Eo = int(params["e_w2"].shape[2])
    mlp_out = int(params["m_w2"].shape[1])

    mats = {}
    cin = 1
    for l, (w, b) in enumerate(convs):
        cout = int(w.shape[0])
        # rows ordered (tap, cin) to match the in-kernel tap concatenation
        mats[f"cw{l}"] = jnp.asarray(w).transpose(2, 3, 1, 0).reshape(9 * cin, cout)
        mats[f"cb{l}"] = jnp.asarray(b).reshape(1, cout)
        cin = cout

    mats["attn_w"] = jnp.asarray(params["attn_w"]).reshape(Hc * Wc, 1)
    # attn_b is a single scalar added to every channel score before softmax ->
    # shift-invariant no-op, intentionally not packed.

    eyeC = jnp.eye(C, dtype=jnp.float32)
    e_w1 = jnp.asarray(params["e_w1"])
    e_w2 = jnp.asarray(params["e_w2"])
    # block-diagonal expert weights: rows (w*C + c), cols (c*Hd + hd)
    mats["ew1"] = (eyeC[None, :, :, None]
                   * e_w1.transpose(1, 0, 2)[:, :, None, :]).reshape(Wc * C, C * Hd)
    mats["eb1"] = jnp.asarray(params["e_b1"]).reshape(1, C * Hd)
    # rows (c*Hd + hd), cols (c*Eo + eo)
    mats["ew2"] = (eyeC[:, None, :, None]
                   * e_w2[:, :, None, :]).reshape(C * Hd, C * Eo)
    mats["eb2"] = jnp.asarray(params["e_b2"]).reshape(1, C * Eo)
    mats["expand"] = jnp.repeat(eyeC, Eo, axis=1)          # attn -> per-output gate

    mats["mw1"] = jnp.asarray(params["m_w1"])
    mats["mb1"] = jnp.asarray(params["m_b1"]).reshape(1, -1)
    mats["mw2"] = jnp.asarray(params["m_w2"])
    mats["mb2"] = jnp.asarray(params["m_b2"]).reshape(1, -1)

    slab_w = _round_up(max(int(m.shape[1]) for m in mats.values()), 128)
    layout = {}
    off = 0
    for name, m in mats.items():
        layout[name] = (off, int(m.shape[0]), int(m.shape[1]))
        off += _round_up(int(m.shape[0]), 8)               # keep 8-sublane alignment
    rows = _round_up(off, 8)

    slab = jnp.zeros((rows, slab_w), jnp.float32)
    for name, m in mats.items():
        r0, nr, nc = layout[name]
        slab = slab.at[r0:r0 + nr, 0:nc].set(m.astype(jnp.float32))

    meta = dict(H=H, W=W, conv_channels=conv_channels, pool_depth=pool_depth,
                C=C, Hc=Hc, Wc=Wc, Hd=Hd, Eo=Eo, mlp_out=mlp_out,
                layout=layout, slab_rows=rows, slab_w=slab_w)
    return slab, meta


# --------------------------------------------------------------------------
# Fused kernel: conv stack + pools + attention + experts + MLP for ONE batch
# element (the grid iterates / parallelizes over batch).
# --------------------------------------------------------------------------
def _make_kernel(meta):
    H, W = meta["H"], meta["W"]
    conv_channels = meta["conv_channels"]
    pool_depth = meta["pool_depth"]
    C, Hc, Wc = meta["C"], meta["Hc"], meta["Wc"]
    mlp_out = meta["mlp_out"]
    layout = meta["layout"]

    def kernel(x_ref, slab_ref, out_ref):
        def read(name):
            r0, nr, nc = layout[name]
            return slab_ref[r0:r0 + nr, 0:nc]

        # ---------------- CNNBlock: [Conv3x3(pad=1) + ReLU] * n_conv ----------
        f = x_ref[...]                                     # (1, H, W, 1) NHWC
        cin = 1
        for l, cout in enumerate(conv_channels):
            w = read(f"cw{l}")                             # (9*cin, cout)
            b = read(f"cb{l}")                             # (1, cout)
            # zero-pad border at value level (no scratch, no masked stores)
            zr = jnp.zeros((1, 1, W, cin), jnp.float32)
            zc = jnp.zeros((1, H + 2, 1, cin), jnp.float32)
            fp = jnp.concatenate([zr, f, zr], axis=1)
            fp = jnp.concatenate([zc, fp, zc], axis=2)     # (1, H+2, W+2, cin)
            if cin == 1:
                # 9 shifted broadcast-FMAs on the VPU (cin == 1 -> scalar per cout)
                acc = jnp.zeros((1, H, W, cout), jnp.float32)
                for t in range(9):
                    di, dj = t // 3, t % 3
                    acc = acc + fp[:, di:di + H, dj:dj + W, :] * w[t:t + 1, :]
                y = acc + b
            else:
                taps = [fp[:, di:di + H, dj:dj + W, :]
                        for di in range(3) for dj in range(3)]
                patches = jnp.concatenate(taps, axis=-1)   # (1, H, W, 9*cin)
                p2 = patches.reshape(H * W, 9 * cin)
                y = (jnp.dot(p2, w, preferred_element_type=jnp.float32) + b
                     ).reshape(1, H, W, cout)
            f = jnp.maximum(y, 0.0)
            cin = cout

        # ---------------- pool_depth x MaxPool2d(2x2, stride 2) ---------------
        h, wd = H, W
        for _ in range(pool_depth):
            cols = [jnp.maximum(f[:, :, 2 * j:2 * j + 1, :],
                                f[:, :, 2 * j + 1:2 * j + 2, :])
                    for j in range(wd // 2)]
            f = jnp.concatenate(cols, axis=2)
            rows_ = [jnp.maximum(f[:, 2 * i:2 * i + 1, :, :],
                                 f[:, 2 * i + 1:2 * i + 2, :, :])
                     for i in range(h // 2)]
            f = jnp.concatenate(rows_, axis=1)
            h, wd = h // 2, wd // 2
        # f: (1, Hc, Wc, C)

        # ---------------- AttentionBlock: shared score + softmax over channels -
        aw = read("attn_w")                                # (Hc*Wc, 1)
        f2 = f.reshape(Hc * Wc, C)
        scores = jnp.sum(f2 * aw, axis=0, keepdims=True)   # (1, C)
        # (attn_b omitted: adding one scalar to every score is a softmax no-op)
        m = jnp.max(scores, axis=-1, keepdims=True)
        e = jnp.exp(scores - m)
        attn = e / jnp.sum(e, axis=-1, keepdims=True)      # (1, C)

        # ---------------- Experts: block-diagonal lane-dense matmuls ----------
        # xcat[h, w*C + c] = f[0, h, w, c]
        xcat = jnp.concatenate([f[:, :, j, :] for j in range(Wc)], axis=-1)
        x2 = xcat.reshape(Hc, Wc * C)
        h1 = jnp.maximum(
            jnp.dot(x2, read("ew1"), preferred_element_type=jnp.float32)
            + read("eb1"), 0.0)                            # (Hc, C*Hd)
        hm = jnp.mean(h1, axis=0, keepdims=True)           # (1, C*Hd)
        y2 = jnp.dot(hm, read("ew2"),
                     preferred_element_type=jnp.float32) + read("eb2")   # (1, C*Eo)
        gate = jnp.dot(attn, read("expand"),
                       preferred_element_type=jnp.float32)               # (1, C*Eo)
        y3 = y2 * gate

        # ---------------- VeryBasicMLP ----------------------------------------
        hmid = jnp.maximum(
            jnp.dot(y3, read("mw1"), preferred_element_type=jnp.float32)
            + read("mb1"), 0.0)
        res = jnp.dot(hmid, read("mw2"),
                      preferred_element_type=jnp.float32) + read("mb2")  # (1, mlp_out)
        out_ref[...] = res.reshape(1, 1, mlp_out)

    return kernel


def make_forward(meta):
    H, W = meta["H"], meta["W"]
    mlp_out = meta["mlp_out"]
    rows, slab_w = meta["slab_rows"], meta["slab_w"]
    kernel = _make_kernel(meta)

    def forward(x, slab):
        B = x.shape[0]
        x4 = x[:, :, :, None].astype(jnp.float32)          # (B, H, W, 1) NHWC
        out = pl.pallas_call(
            kernel,
            out_shape=jax.ShapeDtypeStruct((B, 1, mlp_out), jnp.float32),
            grid=(B,),
            in_specs=[
                pl.BlockSpec((1, H, W, 1), lambda b: (b, 0, 0, 0)),
                # constant block index -> the weight slab is fetched once and
                # stays resident across all grid steps.
                pl.BlockSpec((rows, slab_w), lambda b: (0, 0)),
            ],
            out_specs=pl.BlockSpec((1, 1, mlp_out), lambda b: (b, 0, 0)),
            compiler_params=pltpu.CompilerParams(
                dimension_semantics=("parallel",)),        # splits batch across TCs on v7x
        )(x4, slab)
        return out.reshape(B, mlp_out)

    return forward


# --------------------------------------------------------------------------
# Pure-JAX reference (same canonical module assumption) for correctness check.
# --------------------------------------------------------------------------
def reference_forward(params, x, pool_depth):
    f = x[:, :, :, None]
    for (w, b) in params["convs"]:
        f = jax.lax.conv_general_dilated(
            f, w.transpose(2, 3, 1, 0), window_strides=(1, 1), padding="SAME",
            dimension_numbers=("NHWC", "HWIO", "NHWC"))
        f = jnp.maximum(f + b, 0.0)
    for _ in range(pool_depth):
        Bb, h, wd, c = f.shape
        f = f.reshape(Bb, h // 2, 2, wd // 2, 2, c).max(axis=(2, 4))
    Bb, Hc, Wc, C = f.shape
    aw = params["attn_w"].reshape(Hc, Wc)
    scores = jnp.einsum("bhwc,hw->bc", f, aw) + params["attn_b"]
    attn = jax.nn.softmax(scores, axis=-1)
    h1 = jnp.maximum(jnp.einsum("bhwc,cwd->bhcd", f, params["e_w1"])
                     + params["e_b1"][None, None], 0.0)
    hm = h1.mean(axis=1)                                   # (B, C, Hd)
    y2 = jnp.einsum("bcd,cdo->bco", hm, params["e_w2"]) + params["e_b2"][None]
    y3 = (y2 * attn[:, :, None]).reshape(Bb, -1)
    hmid = jnp.maximum(y3 @ params["m_w1"] + params["m_b1"], 0.0)
    return hmid @ params["m_w2"] + params["m_b2"]


if __name__ == "__main__":
    B, H, W = 2, 16, 16
    conv_structure = [4, 8]
    pool_depth = 2
    expert_hidden = 16
    expert_out = 8
    mlp_factor = 2
    mlp_out = 8

    key = jax.random.PRNGKey(0)
    kx, kp = jax.random.split(key)
    x = jax.random.normal(kx, (B, H, W), jnp.float32)
    params = init_params(kp, (H, W), conv_structure, pool_depth,
                         expert_hidden, expert_out, mlp_factor, mlp_out)

    # one-time host-side weight packing (outside jit)
    slab, meta = pack_params(params, (H, W), pool_depth)
    fwd = jax.jit(make_forward(meta))

    out = jax.block_until_ready(fwd(x, slab))
    assert out.shape == (B, mlp_out), out.shape
    assert bool(jnp.all(jnp.isfinite(out)))

    ref = reference_forward(params, x, pool_depth)
    err = float(jnp.max(jnp.abs(out - ref)))
    scale = float(jnp.max(jnp.abs(ref)))
    assert err <= 1e-3 * max(1.0, scale), (err, scale)

    print("KERNEL_OK")
</pallas_src>

<mosaic_0001>
module attributes {stable_mosaic.version = 11 : i64} {
  func.func @kernel(%arg0: i32, %arg1: memref<1x16x16x1xf32, #tpu.memory_space<vmem>>, %arg2: memref<480x128xf32, #tpu.memory_space<vmem>>, %arg3: memref<1x1x8xf32, #tpu.memory_space<vmem>>) attributes {dimension_semantics = [#tpu.dimension_semantics<parallel>], iteration_bounds = array<i64: 2>, scalar_prefetch = 0 : i64, scratch_operands = 0 : i64, tpu.core_type = #tpu.core_type<tc>, window_params = [{transform_indices = @transform_0, window_bounds = array<i64: 1, 16, 16, 1>}, {pipeline_mode = #tpu.pipeline_mode<synchronous>, transform_indices = @transform_1, window_bounds = array<i64: 480, 128>}, {transform_indices = @transform_2, window_bounds = array<i64: 1, 1, 8>}]} {
    %c0 = arith.constant 0 : index
    %c0_0 = arith.constant 0 : index
    %c0_1 = arith.constant 0 : index
    %c0_2 = arith.constant 0 : index
    %0 = vector.load %arg1[%c0, %c0_0, %c0_1, %c0_2] : memref<1x16x16x1xf32, #tpu.memory_space<vmem>>, vector<1x16x16x1xf32>
    %c0_3 = arith.constant 0 : index
    %c0_4 = arith.constant 0 : index
    %1 = vector.load %arg2[%c0_3, %c0_4] : memref<480x128xf32, #tpu.memory_space<vmem>>, vector<9x4xf32>
    %c16 = arith.constant 16 : index
    %c0_5 = arith.constant 0 : index
    %2 = vector.load %arg2[%c16, %c0_5] : memref<480x128xf32, #tpu.memory_space<vmem>>, vector<1x4xf32>
    %cst = arith.constant 0.000000e+00 : f32
    %3 = vector.broadcast %cst : f32 to vector<1x1x16x1xf32>
    %cst_6 = arith.constant 0.000000e+00 : f32
    %4 = vector.broadcast %cst_6 : f32 to vector<1x18x1x1xf32>
    %5 = tpu.concatenate %3, %0, %3 in 1 : vector<1x1x16x1xf32>, vector<1x16x16x1xf32>, vector<1x1x16x1xf32> -> vector<1x18x16x1xf32>
    %6 = tpu.concatenate %4, %5, %4 in 2 : vector<1x18x1x1xf32>, vector<1x18x16x1xf32>, vector<1x18x1x1xf32> -> vector<1x18x18x1xf32>
    %cst_7 = arith.constant 0.000000e+00 : f32
    %7 = vector.broadcast %cst_7 : f32 to vector<1x16x16x4xf32>
    %8 = vector.extract_strided_slice %6 {offsets = [0, 0, 0, 0], sizes = [1, 16, 16, 1], strides = [1, 1, 1, 1]} : vector<1x18x18x1xf32> to vector<1x16x16x1xf32>
    %9 = vector.extract_strided_slice %1 {offsets = [0, 0], sizes = [1, 4], strides = [1, 1]} : vector<9x4xf32> to vector<1x4xf32>
    %10 = vector.shape_cast %9 : vector<1x4xf32> to vector<1x1x1x4xf32>
    %11 = vector.broadcast %8 : vector<1x16x16x1xf32> to vector<1x16x16x4xf32>
    %12 = vector.broadcast %10 : vector<1x1x1x4xf32> to vector<1x16x16x4xf32>
    %13 = arith.mulf %11, %12 : vector<1x16x16x4xf32>
    %14 = arith.addf %7, %13 : vector<1x16x16x4xf32>
    %15 = vector.extract_strided_slice %6 {offsets = [0, 0, 1, 0], sizes = [1, 16, 16, 1], strides = [1, 1, 1, 1]} : vector<1x18x18x1xf32> to vector<1x16x16x1xf32>
    %16 = vector.extract_strided_slice %1 {offsets = [1, 0], sizes = [1, 4], strides = [1, 1]} : vector<9x4xf32> to vector<1x4xf32>
    %17 = vector.shape_cast %16 : vector<1x4xf32> to vector<1x1x1x4xf32>
    %18 = vector.broadcast %15 : vector<1x16x16x1xf32> to vector<1x16x16x4xf32>
    %19 = vector.broadcast %17 : vector<1x1x1x4xf32> to vector<1x16x16x4xf32>
    %20 = arith.mulf %18, %19 : vector<1x16x16x4xf32>
    %21 = arith.addf %14, %20 : vector<1x16x16x4xf32>
    %22 = vector.extract_strided_slice %6 {offsets = [0, 0, 2, 0], sizes = [1, 16, 16, 1], strides = [1, 1, 1, 1]} : vector<1x18x18x1xf32> to vector<1x16x16x1xf32>
    %23 = vector.extract_strided_slice %1 {offsets = [2, 0], sizes = [1, 4], strides = [1, 1]} : vector<9x4xf32> to vector<1x4xf32>
    %24 = vector.shape_cast %23 : vector<1x4xf32> to vector<1x1x1x4xf32>
    %25 = vector.broadcast %22 : vector<1x16x16x1xf32> to vector<1x16x16x4xf32>
    %26 = vector.broadcast %24 : vector<1x1x1x4xf32> to vector<1x16x16x4xf32>
    %27 = arith.mulf %25, %26 : vector<1x16x16x4xf32>
    %28 = arith.addf %21, %27 : vector<1x16x16x4xf32>
    %29 = vector.extract_strided_slice %6 {offsets = [0, 1, 0, 0], sizes = [1, 16, 16, 1], strides = [1, 1, 1, 1]} : vector<1x18x18x1xf32> to vector<1x16x16x1xf32>
    %30 = vector.extract_strided_slice %1 {offsets = [3, 0], sizes = [1, 4], strides = [1, 1]} : vector<9x4xf32> to vector<1x4xf32>
    %31 = vector.shape_cast %30 : vector<1x4xf32> to vector<1x1x1x4xf32>
    %32 = vector.broadcast %29 : vector<1x16x16x1xf32> to vector<1x16x16x4xf32>
    %33 = vector.broadcast %31 : vector<1x1x1x4xf32> to vector<1x16x16x4xf32>
    %34 = arith.mulf %32, %33 : vector<1x16x16x4xf32>
    %35 = arith.addf %28, %34 : vector<1x16x16x4xf32>
    %36 = vector.extract_strided_slice %6 {offsets = [0, 1, 1, 0], sizes = [1, 16, 16, 1], strides = [1, 1, 1, 1]} : vector<1x18x18x1xf32> to vector<1x16x16x1xf32>
    %37 = vector.extract_strided_slice %1 {offsets = [4, 0], sizes = [1, 4], strides = [1, 1]} : vector<9x4xf32> to vector<1x4xf32>
    %38 = vector.shape_cast %37 : vector<1x4xf32> to vector<1x1x1x4xf32>
    %39 = vector.broadcast %36 : vector<1x16x16x1xf32> to vector<1x16x16x4xf32>
    %40 = vector.broadcast %38 : vector<1x1x1x4xf32> to vector<1x16x16x4xf32>
    %41 = arith.mulf %39, %40 : vector<1x16x16x4xf32>
    %42 = arith.addf %35, %41 : vector<1x16x16x4xf32>
    %43 = vector.extract_strided_slice %6 {offsets = [0, 1, 2, 0], sizes = [1, 16, 16, 1], strides = [1, 1, 1, 1]} : vector<1x18x18x1xf32> to vector<1x16x16x1xf32>
    %44 = vector.extract_strided_slice %1 {offsets = [5, 0], sizes = [1, 4], strides = [1, 1]} : vector<9x4xf32> to vector<1x4xf32>
    %45 = vector.shape_cast %44 : vector<1x4xf32> to vector<1x1x1x4xf32>
    %46 = vector.broadcast %43 : vector<1x16x16x1xf32> to vector<1x16x16x4xf32>
    %47 = vector.broadcast %45 : vector<1x1x1x4xf32> to vector<1x16x16x4xf32>
    %48 = arith.mulf %46, %47 : vector<1x16x16x4xf32>
    %49 = arith.addf %42, %48 : vector<1x16x16x4xf32>
    %50 = vector.extract_strided_slice %6 {offsets = [0, 2, 0, 0], sizes = [1, 16, 16, 1], strides = [1, 1, 1, 1]} : vector<1x18x18x1xf32> to vector<1x16x16x1xf32>
    %51 = vector.extract_strided_slice %1 {offsets = [6, 0], sizes = [1, 4], strides = [1, 1]} : vector<9x4xf32> to vector<1x4xf32>
    %52 = vector.shape_cast %51 : vector<1x4xf32> to vector<1x1x1x4xf32>
    %53 = vector.broadcast %50 : vector<1x16x16x1xf32> to vector<1x16x16x4xf32>
    %54 = vector.broadcast %52 : vector<1x1x1x4xf32> to vector<1x16x16x4xf32>
    %55 = arith.mulf %53, %54 : vector<1x16x16x4xf32>
    %56 = arith.addf %49, %55 : vector<1x16x16x4xf32>
    %57 = vector.extract_strided_slice %6 {offsets = [0, 2, 1, 0], sizes = [1, 16, 16, 1], strides = [1, 1, 1, 1]} : vector<1x18x18x1xf32> to vector<1x16x16x1xf32>
    %58 = vector.extract_strided_slice %1 {offsets = [7, 0], sizes = [1, 4], strides = [1, 1]} : vector<9x4xf32> to vector<1x4xf32>
    %59 = vector.shape_cast %58 : vector<1x4xf32> to vector<1x1x1x4xf32>
    %60 = vector.broadcast %57 : vector<1x16x16x1xf32> to vector<1x16x16x4xf32>
    %61 = vector.broadcast %59 : vector<1x1x1x4xf32> to vector<1x16x16x4xf32>
    %62 = arith.mulf %60, %61 : vector<1x16x16x4xf32>
    %63 = arith.addf %56, %62 : vector<1x16x16x4xf32>
    %64 = vector.extract_strided_slice %6 {offsets = [0, 2, 2, 0], sizes = [1, 16, 16, 1], strides = [1, 1, 1, 1]} : vector<1x18x18x1xf32> to vector<1x16x16x1xf32>
    %65 = vector.extract_strided_slice %1 {offsets = [8, 0], sizes = [1, 4], strides = [1, 1]} : vector<9x4xf32> to vector<1x4xf32>
    %66 = vector.shape_cast %65 : vector<1x4xf32> to vector<1x1x1x4xf32>
    %67 = vector.broadcast %64 : vector<1x16x16x1xf32> to vector<1x16x16x4xf32>
    %68 = vector.broadcast %66 : vector<1x1x1x4xf32> to vector<1x16x16x4xf32>
    %69 = arith.mulf %67, %68 : vector<1x16x16x4xf32>
    %70 = arith.addf %63, %69 : vector<1x16x16x4xf32>
    %71 = vector.shape_cast %2 : vector<1x4xf32> to vector<1x1x1x4xf32>
    %72 = vector.broadcast %71 : vector<1x1x1x4xf32> to vector<1x16x16x4xf32>
    %73 = arith.addf %70, %72 : vector<1x16x16x4xf32>
    %cst_8 = arith.constant 0.000000e+00 : f32
    %74 = vector.broadcast %cst_8 : f32 to vector<1x16x16x4xf32>
    %75 = arith.maximumf %73, %74 : vector<1x16x16x4xf32>
    %c24 = arith.constant 24 : index
    %c0_9 = arith.constant 0 : index
    %76 = vector.load %arg2[%c24, %c0_9] : memref<480x128xf32, #tpu.memory_space<vmem>>, vector<36x8xf32>
    %c64 = arith.constant 64 : index
    %c0_10 = arith.constant 0 : index
    %77 = vector.load %arg2[%c64, %c0_10] : memref<480x128xf32, #tpu.memory_space<vmem>>, vector<1x8xf32>
    %cst_11 = arith.constant 0.000000e+00 : f32
    %78 = vector.broadcast %cst_11 : f32 to vector<1x1x16x4xf32>
    %cst_12 = arith.constant 0.000000e+00 : f32
    %79 = vector.broadcast %cst_12 : f32 to vector<1x18x1x4xf32>
    %80 = tpu.concatenate %78, %75, %78 in 1 : vector<1x1x16x4xf32>, vector<1x16x16x4xf32>, vector<1x1x16x4xf32> -> vector<1x18x16x4xf32>
    %81 = tpu.concatenate %79, %80, %79 in 2 : vector<1x18x1x4xf32>, vector<1x18x16x4xf32>, vector<1x18x1x4xf32> -> vector<1x18x18x4xf32>
    %82 = vector.extract_strided_slice %81 {offsets = [0, 0, 0, 0], sizes = [1, 16, 16, 4], strides = [1, 1, 1, 1]} : vector<1x18x18x4xf32> to vector<1x16x16x4xf32>
    %83 = vector.extract_strided_slice %81 {offsets = [0, 0, 1, 0], sizes = [1, 16, 16, 4], strides = [1, 1, 1, 1]} : vector<1x18x18x4xf32> to vector<1x16x16x4xf32>
    %84 = vector.extract_strided_slice %81 {offsets = [0, 0, 2, 0], sizes = [1, 16, 16, 4], strides = [1, 1, 1, 1]} : vector<1x18x18x4xf32> to vector<1x16x16x4xf32>
    %85 = vector.extract_strided_slice %81 {offsets = [0, 1, 0, 0], sizes = [1, 16, 16, 4], strides = [1, 1, 1, 1]} : vector<1x18x18x4xf32> to vector<1x16x16x4xf32>
    %86 = vector.extract_strided_slice %81 {offsets = [0, 1, 1, 0], sizes = [1, 16, 16, 4], strides = [1, 1, 1, 1]} : vector<1x18x18x4xf32> to vector<1x16x16x4xf32>
    %87 = vector.extract_strided_slice %81 {offsets = [0, 1, 2, 0], sizes = [1, 16, 16, 4], strides = [1, 1, 1, 1]} : vector<1x18x18x4xf32> to vector<1x16x16x4xf32>
    %88 = vector.extract_strided_slice %81 {offsets = [0, 2, 0, 0], sizes = [1, 16, 16, 4], strides = [1, 1, 1, 1]} : vector<1x18x18x4xf32> to vector<1x16x16x4xf32>
    %89 = vector.extract_strided_slice %81 {offsets = [0, 2, 1, 0], sizes = [1, 16, 16, 4], strides = [1, 1, 1, 1]} : vector<1x18x18x4xf32> to vector<1x16x16x4xf32>
    %90 = vector.extract_strided_slice %81 {offsets = [0, 2, 2, 0], sizes = [1, 16, 16, 4], strides = [1, 1, 1, 1]} : vector<1x18x18x4xf32> to vector<1x16x16x4xf32>
    %91 = tpu.concatenate %82, %83, %84, %85, %86, %87, %88, %89, %90 in 3 : vector<1x16x16x4xf32>, vector<1x16x16x4xf32>, vector<1x16x16x4xf32>, vector<1x16x16x4xf32>, vector<1x16x16x4xf32>, vector<1x16x16x4xf32>, vector<1x16x16x4xf32>, vector<1x16x16x4xf32>, vector<1x16x16x4xf32> -> vector<1x16x16x36xf32>
    %92 = vector.shape_cast %91 : vector<1x16x16x36xf32> to vector<256x36xf32>
    %cst_13 = arith.constant dense<0.000000e+00> : vector<256x8xf32>
    %93 = tpu.matmul %92, %76, %cst_13 {dimension_numbers = #tpu.dot_dimension_numbers<[1], [0], [0], [1], [0, 0, 1, 1], [], []>} : vector<256x36xf32>, vector<36x8xf32>, vector<256x8xf32> -> vector<256x8xf32>
    %94 = vector.broadcast %77 : vector<1x8xf32> to vector<256x8xf32>
    %95 = arith.addf %93, %94 : vector<256x8xf32>
    %96 = vector.shape_cast %95 : vector<256x8xf32> to vector<1x16x16x8xf32>
    %cst_14 = arith.constant 0.000000e+00 : f32
    %97 = vector.broadcast %cst_14 : f32 to vector<1x16x16x8xf32>
    %98 = arith.maximumf %96, %97 : vector<1x16x16x8xf32>
    %99 = vector.extract_strided_slice %98 {offsets = [0, 0, 0, 0], sizes = [1, 16, 1, 8], strides = [1, 1, 1, 1]} : vector<1x16x16x8xf32> to vector<1x16x1x8xf32>
    %100 = vector.extract_strided_slice %98 {offsets = [0, 0, 1, 0], sizes = [1, 16, 1, 8], strides = [1, 1, 1, 1]} : vector<1x16x16x8xf32> to vector<1x16x1x8xf32>
    %101 = arith.maximumf %99, %100 : vector<1x16x1x8xf32>
    %102 = vector.extract_strided_slice %98 {offsets = [0, 0, 2, 0], sizes = [1, 16, 1, 8], strides = [1, 1, 1, 1]} : vector<1x16x16x8xf32> to vector<1x16x1x8xf32>
    %103 = vector.extract_strided_slice %98 {offsets = [0, 0, 3, 0], sizes = [1, 16, 1, 8], strides = [1, 1, 1, 1]} : vector<1x16x16x8xf32> to vector<1x16x1x8xf32>
    %104 = arith.maximumf %102, %103 : vector<1x16x1x8xf32>
    %105 = vector.extract_strided_slice %98 {offsets = [0, 0, 4, 0], sizes = [1, 16, 1, 8], strides = [1, 1, 1, 1]} : vector<1x16x16x8xf32> to vector<1x16x1x8xf32>
    %106 = vector.extract_strided_slice %98 {offsets = [0, 0, 5, 0], sizes = [1, 16, 1, 8], strides = [1, 1, 1, 1]} : vector<1x16x16x8xf32> to vector<1x16x1x8xf32>
    %107 = arith.maximumf %105, %106 : vector<1x16x1x8xf32>
    %108 = vector.extract_strided_slice %98 {offsets = [0, 0, 6, 0], sizes = [1, 16, 1, 8], strides = [1, 1, 1, 1]} : vector<1x16x16x8xf32> to vector<1x16x1x8xf32>
    %109 = vector.extract_strided_slice %98 {offsets = [0, 0, 7, 0], sizes = [1, 16, 1, 8], strides = [1, 1, 1, 1]} : vector<1x16x16x8xf32> to vector<1x16x1x8xf32>
    %110 = arith.maximumf %108, %109 : vector<1x16x1x8xf32>
    %111 = vector.extract_strided_slice %98 {offsets = [0, 0, 8, 0], sizes = [1, 16, 1, 8], strides = [1, 1, 1, 1]} : vector<1x16x16x8xf32> to vector<1x16x1x8xf32>
    %112 = vector.extract_strided_slice %98 {offsets = [0, 0, 9, 0], sizes = [1, 16, 1, 8], strides = [1, 1, 1, 1]} : vector<1x16x16x8xf32> to vector<1x16x1x8xf32>
    %113 = arith.maximumf %111, %112 : vector<1x16x1x8xf32>
    %114 = vector.extract_strided_slice %98 {offsets = [0, 0, 10, 0], sizes = [1, 16, 1, 8], strides = [1, 1, 1, 1]} : vector<1x16x16x8xf32> to vector<1x16x1x8xf32>
    %115 = vector.extract_strided_slice %98 {offsets = [0, 0, 11, 0], sizes = [1, 16, 1, 8], strides = [1, 1, 1, 1]} : vector<1x16x16x8xf32> to vector<1x16x1x8xf32>
    %116 = arith.maximumf %114, %115 : vector<1x16x1x8xf32>
    %117 = vector.extract_strided_slice %98 {offsets = [0, 0, 12, 0], sizes = [1, 16, 1, 8], strides = [1, 1, 1, 1]} : vector<1x16x16x8xf32> to vector<1x16x1x8xf32>
    %118 = vector.extract_strided_slice %98 {offsets = [0, 0, 13, 0], sizes = [1, 16, 1, 8], strides = [1, 1, 1, 1]} : vector<1x16x16x8xf32> to vector<1x16x1x8xf32>
    %119 = arith.maximumf %117, %118 : vector<1x16x1x8xf32>
    %120 = vector.extract_strided_slice %98 {offsets = [0, 0, 14, 0], sizes = [1, 16, 1, 8], strides = [1, 1, 1, 1]} : vector<1x16x16x8xf32> to vector<1x16x1x8xf32>
    %121 = vector.extract_strided_slice %98 {offsets = [0, 0, 15, 0], sizes = [1, 16, 1, 8], strides = [1, 1, 1, 1]} : vector<1x16x16x8xf32> to vector<1x16x1x8xf32>
    %122 = arith.maximumf %120, %121 : vector<1x16x1x8xf32>
    %123 = tpu.concatenate %101, %104, %107, %110, %113, %116, %119, %122 in 2 : vector<1x16x1x8xf32>, vector<1x16x1x8xf32>, vector<1x16x1x8xf32>, vector<1x16x1x8xf32>, vector<1x16x1x8xf32>, vector<1x16x1x8xf32>, vector<1x16x1x8xf32>, vector<1x16x1x8xf32> -> vector<1x16x8x8xf32>
    %124 = vector.extract_strided_slice %123 {offsets = [0, 0, 0, 0], sizes = [1, 1, 8, 8], strides = [1, 1, 1, 1]} : vector<1x16x8x8xf32> to vector<1x1x8x8xf32>
    %125 = vector.extract_strided_slice %123 {offsets = [0, 1, 0, 0], sizes = [1, 1, 8, 8], strides = [1, 1, 1, 1]} : vector<1x16x8x8xf32> to vector<1x1x8x8xf32>
    %126 = arith.maximumf %124, %125 : vector<1x1x8x8xf32>
    %127 = vector.extract_strided_slice %123 {offsets = [0, 2, 0, 0], sizes = [1, 1, 8, 8], strides = [1, 1, 1, 1]} : vector<1x16x8x8xf32> to vector<1x1x8x8xf32>
    %128 = vector.extract_strided_slice %123 {offsets = [0, 3, 0, 0], sizes = [1, 1, 8, 8], strides = [1, 1, 1, 1]} : vector<1x16x8x8xf32> to vector<1x1x8x8xf32>
    %129 = arith.maximumf %127, %128 : vector<1x1x8x8xf32>
    %130 = vector.extract_strided_slice %123 {offsets = [0, 4, 0, 0], sizes = [1, 1, 8, 8], strides = [1, 1, 1, 1]} : vector<1x16x8x8xf32> to vector<1x1x8x8xf32>
    %131 = vector.extract_strided_slice %123 {offsets = [0, 5, 0, 0], sizes = [1, 1, 8, 8], strides = [1, 1, 1, 1]} : vector<1x16x8x8xf32> to vector<1x1x8x8xf32>
    %132 = arith.maximumf %130, %131 : vector<1x1x8x8xf32>
    %133 = vector.extract_strided_slice %123 {offsets = [0, 6, 0, 0], sizes = [1, 1, 8, 8], strides = [1, 1, 1, 1]} : vector<1x16x8x8xf32> to vector<1x1x8x8xf32>
    %134 = vector.extract_strided_slice %123 {offsets = [0, 7, 0, 0], sizes = [1, 1, 8, 8], strides = [1, 1, 1, 1]} : vector<1x16x8x8xf32> to vector<1x1x8x8xf32>
    %135 = arith.maximumf %133, %134 : vector<1x1x8x8xf32>
    %136 = vector.extract_strided_slice %123 {offsets = [0, 8, 0, 0], sizes = [1, 1, 8, 8], strides = [1, 1, 1, 1]} : vector<1x16x8x8xf32> to vector<1x1x8x8xf32>
    %137 = vector.extract_strided_slice %123 {offsets = [0, 9, 0, 0], sizes = [1, 1, 8, 8], strides = [1, 1, 1, 1]} : vector<1x16x8x8xf32> to vector<1x1x8x8xf32>
    %138 = arith.maximumf %136, %137 : vector<1x1x8x8xf32>
    %139 = vector.extract_strided_slice %123 {offsets = [0, 10, 0, 0], sizes = [1, 1, 8, 8], strides = [1, 1, 1, 1]} : vector<1x16x8x8xf32> to vector<1x1x8x8xf32>
    %140 = vector.extract_strided_slice %123 {offsets = [0, 11, 0, 0], sizes = [1, 1, 8, 8], strides = [1, 1, 1, 1]} : vector<1x16x8x8xf32> to vector<1x1x8x8xf32>
    %141 = arith.maximumf %139, %140 : vector<1x1x8x8xf32>
    %142 = vector.extract_strided_slice %123 {offsets = [0, 12, 0, 0], sizes = [1, 1, 8, 8], strides = [1, 1, 1, 1]} : vector<1x16x8x8xf32> to vector<1x1x8x8xf32>
    %143 = vector.extract_strided_slice %123 {offsets = [0, 13, 0, 0], sizes = [1, 1, 8, 8], strides = [1, 1, 1, 1]} : vector<1x16x8x8xf32> to vector<1x1x8x8xf32>
    %144 = arith.maximumf %142, %143 : vector<1x1x8x8xf32>
    %145 = vector.extract_strided_slice %123 {offsets = [0, 14, 0, 0], sizes = [1, 1, 8, 8], strides = [1, 1, 1, 1]} : vector<1x16x8x8xf32> to vector<1x1x8x8xf32>
    %146 = vector.extract_strided_slice %123 {offsets = [0, 15, 0, 0], sizes = [1, 1, 8, 8], strides = [1, 1, 1, 1]} : vector<1x16x8x8xf32> to vector<1x1x8x8xf32>
    %147 = arith.maximumf %145, %146 : vector<1x1x8x8xf32>
    %148 = tpu.concatenate %126, %129, %132, %135, %138, %141, %144, %147 in 1 : vector<1x1x8x8xf32>, vector<1x1x8x8xf32>, vector<1x1x8x8xf32>, vector<1x1x8x8xf32>, vector<1x1x8x8xf32>, vector<1x1x8x8xf32>, vector<1x1x8x8xf32>, vector<1x1x8x8xf32> -> vector<1x8x8x8xf32>
    %149 = vector.extract_strided_slice %148 {offsets = [0, 0, 0, 0], sizes = [1, 8, 1, 8], strides = [1, 1, 1, 1]} : vector<1x8x8x8xf32> to vector<1x8x1x8xf32>
    %150 = vector.extract_strided_slice %148 {offsets = [0, 0, 1, 0], sizes = [1, 8, 1, 8], strides = [1, 1, 1, 1]} : vector<1x8x8x8xf32> to vector<1x8x1x8xf32>
    %151 = arith.maximumf %149, %150 : vector<1x8x1x8xf32>
    %152 = vector.extract_strided_slice %148 {offsets = [0, 0, 2, 0], sizes = [1, 8, 1, 8], strides = [1, 1, 1, 1]} : vector<1x8x8x8xf32> to vector<1x8x1x8xf32>
    %153 = vector.extract_strided_slice %148 {offsets = [0, 0, 3, 0], sizes = [1, 8, 1, 8], strides = [1, 1, 1, 1]} : vector<1x8x8x8xf32> to vector<1x8x1x8xf32>
    %154 = arith.maximumf %152, %153 : vector<1x8x1x8xf32>
    %155 = vector.extract_strided_slice %148 {offsets = [0, 0, 4, 0], sizes = [1, 8, 1, 8], strides = [1, 1, 1, 1]} : vector<1x8x8x8xf32> to vector<1x8x1x8xf32>
    %156 = vector.extract_strided_slice %148 {offsets = [0, 0, 5, 0], sizes = [1, 8, 1, 8], strides = [1, 1, 1, 1]} : vector<1x8x8x8xf32> to vector<1x8x1x8xf32>
    %157 = arith.maximumf %155, %156 : vector<1x8x1x8xf32>
    %158 = vector.extract_strided_slice %148 {offsets = [0, 0, 6, 0], sizes = [1, 8, 1, 8], strides = [1, 1, 1, 1]} : vector<1x8x8x8xf32> to vector<1x8x1x8xf32>
    %159 = vector.extract_strided_slice %148 {offsets = [0, 0, 7, 0], sizes = [1, 8, 1, 8], strides = [1, 1, 1, 1]} : vector<1x8x8x8xf32> to vector<1x8x1x8xf32>
    %160 = arith.maximumf %158, %159 : vector<1x8x1x8xf32>
    %161 = tpu.concatenate %151, %154, %157, %160 in 2 : vector<1x8x1x8xf32>, vector<1x8x1x8xf32>, vector<1x8x1x8xf32>, vector<1x8x1x8xf32> -> vector<1x8x4x8xf32>
    %162 = vector.extract_strided_slice %161 {offsets = [0, 0, 0, 0], sizes = [1, 1, 4, 8], strides = [1, 1, 1, 1]} : vector<1x8x4x8xf32> to vector<1x1x4x8xf32>
    %163 = vector.extract_strided_slice %161 {offsets = [0, 1, 0, 0], sizes = [1, 1, 4, 8], strides = [1, 1, 1, 1]} : vector<1x8x4x8xf32> to vector<1x1x4x8xf32>
    %164 = arith.maximumf %162, %163 : vector<1x1x4x8xf32>
    %165 = vector.extract_strided_slice %161 {offsets = [0, 2, 0, 0], sizes = [1, 1, 4, 8], strides = [1, 1, 1, 1]} : vector<1x8x4x8xf32> to vector<1x1x4x8xf32>
    %166 = vector.extract_strided_slice %161 {offsets = [0, 3, 0, 0], sizes = [1, 1, 4, 8], strides = [1, 1, 1, 1]} : vector<1x8x4x8xf32> to vector<1x1x4x8xf32>
    %167 = arith.maximumf %165, %166 : vector<1x1x4x8xf32>
    %168 = vector.extract_strided_slice %161 {offsets = [0, 4, 0, 0], sizes = [1, 1, 4, 8], strides = [1, 1, 1, 1]} : vector<1x8x4x8xf32> to vector<1x1x4x8xf32>
    %169 = vector.extract_strided_slice %161 {offsets = [0, 5, 0, 0], sizes = [1, 1, 4, 8], strides = [1, 1, 1, 1]} : vector<1x8x4x8xf32> to vector<1x1x4x8xf32>
    %170 = arith.maximumf %168, %169 : vector<1x1x4x8xf32>
    %171 = vector.extract_strided_slice %161 {offsets = [0, 6, 0, 0], sizes = [1, 1, 4, 8], strides = [1, 1, 1, 1]} : vector<1x8x4x8xf32> to vector<1x1x4x8xf32>
    %172 = vector.extract_strided_slice %161 {offsets = [0, 7, 0, 0], sizes = [1, 1, 4, 8], strides = [1, 1, 1, 1]} : vector<1x8x4x8xf32> to vector<1x1x4x8xf32>
    %173 = arith.maximumf %171, %172 : vector<1x1x4x8xf32>
    %174 = tpu.concatenate %164, %167, %170, %173 in 1 : vector<1x1x4x8xf32>, vector<1x1x4x8xf32>, vector<1x1x4x8xf32>, vector<1x1x4x8xf32> -> vector<1x4x4x8xf32>
    %c72 = arith.constant 72 : index
    %c0_15 = arith.constant 0 : index
    %175 = vector.load %arg2[%c72, %c0_15] : memref<480x128xf32, #tpu.memory_space<vmem>>, vector<16x1xf32>
    %176 = vector.shape_cast %174 : vector<1x4x4x8xf32> to vector<16x8xf32>
    %177 = vector.broadcast %175 : vector<16x1xf32> to vector<16x8xf32>
    %178 = arith.mulf %176, %177 : vector<16x8xf32>
    %cst_16 = arith.constant dense<0.000000e+00> : vector<8xf32>
    %179 = vector.multi_reduction <add>, %178, %cst_16 [0] : vector<16x8xf32> to vector<8xf32>
    %180 = vector.shape_cast %179 : vector<8xf32> to vector<1x8xf32>
    %cst_17 = arith.constant dense<0xFF800000> : vector<1xf32>
    %181 = vector.multi_reduction <maximumf>, %180, %cst_17 [1] : vector<1x8xf32> to vector<1xf32>
    %182 = vector.shape_cast %181 : vector<1xf32> to vector<1x1xf32>
    %183 = vector.broadcast %182 : vector<1x1xf32> to vector<1x8xf32>
    %184 = arith.subf %180, %183 : vector<1x8xf32>
    %185 = math.exp %184 : vector<1x8xf32>
    %cst_18 = arith.constant dense<0.000000e+00> : vector<1xf32>
    %186 = vector.multi_reduction <add>, %185, %cst_18 [1] : vector<1x8xf32> to vector<1xf32>
    %187 = vector.shape_cast %186 : vector<1xf32> to vector<1x1xf32>
    %188 = vector.broadcast %187 : vector<1x1xf32> to vector<1x8xf32>
    %189 = arith.divf %185, %188 : vector<1x8xf32>
    %190 = vector.extract_strided_slice %174 {offsets = [0, 0, 0, 0], sizes = [1, 4, 1, 8], strides = [1, 1, 1, 1]} : vector<1x4x4x8xf32> to vector<1x4x1x8xf32>
    %191 = vector.shape_cast %190 : vector<1x4x1x8xf32> to vector<1x4x8xf32>
    %192 = vector.extract_strided_slice %174 {offsets = [0, 0, 1, 0], sizes = [1, 4, 1, 8], strides = [1, 1, 1, 1]} : vector<1x4x4x8xf32> to vector<1x4x1x8xf32>
    %193 = vector.shape_cast %192 : vector<1x4x1x8xf32> to vector<1x4x8xf32>
    %194 = vector.extract_strided_slice %174 {offsets = [0, 0, 2, 0], sizes = [1, 4, 1, 8], strides = [1, 1, 1, 1]} : vector<1x4x4x8xf32> to vector<1x4x1x8xf32>
    %195 = vector.shape_cast %194 : vector<1x4x1x8xf32> to vector<1x4x8xf32>
    %196 = vector.extract_strided_slice %174 {offsets = [0, 0, 3, 0], sizes = [1, 4, 1, 8], strides = [1, 1, 1, 1]} : vector<1x4x4x8xf32> to vector<1x4x1x8xf32>
    %197 = vector.shape_cast %196 : vector<1x4x1x8xf32> to vector<1x4x8xf32>
    %198 = tpu.concatenate %191, %193, %195, %197 in 2 : vector<1x4x8xf32>, vector<1x4x8xf32>, vector<1x4x8xf32>, vector<1x4x8xf32> -> vector<1x4x32xf32>
    %199 = vector.shape_cast %198 : vector<1x4x32xf32> to vector<4x32xf32>
    %c88 = arith.constant 88 : index
    %c0_19 = arith.constant 0 : index
    %200 = vector.load %arg2[%c88, %c0_19] : memref<480x128xf32, #tpu.memory_space<vmem>>, vector<32x128xf32>
    %cst_20 = arith.constant dense<0.000000e+00> : vector<4x128xf32>
    %201 = tpu.matmul %199, %200, %cst_20 {dimension_numbers = #tpu.dot_dimension_numbers<[1], [0], [0], [1], [0, 0, 1, 1], [], []>} : vector<4x32xf32>, vector<32x128xf32>, vector<4x128xf32> -> vector<4x128xf32>
    %c120 = arith.constant 120 : index
    %c0_21 = arith.constant 0 : index
    %202 = vector.load %arg2[%c120, %c0_21] : memref<480x128xf32, #tpu.memory_space<vmem>>, vector<1x128xf32>
    %203 = vector.broadcast %202 : vector<1x128xf32> to vector<4x128xf32>
    %204 = arith.addf %201, %203 : vector<4x128xf32>
    %cst_22 = arith.constant 0.000000e+00 : f32
    %205 = vector.broadcast %cst_22 : f32 to vector<4x128xf32>
    %206 = arith.maximumf %204, %205 : vector<4x128xf32>
    %cst_23 = arith.constant dense<0.000000e+00> : vector<128xf32>
    %207 = vector.multi_reduction <add>, %206, %cst_23 [0] : vector<4x128xf32> to vector<128xf32>
    %208 = vector.shape_cast %207 : vector<128xf32> to vector<1x128xf32>
    %cst_24 = arith.constant 4.000000e+00 : f32
    %209 = vector.broadcast %cst_24 : f32 to vector<1x128xf32>
    %210 = arith.divf %208, %209 : vector<1x128xf32>
    %c128 = arith.constant 128 : index
    %c0_25 = arith.constant 0 : index
    %211 = vector.load %arg2[%c128, %c0_25] : memref<480x128xf32, #tpu.memory_space<vmem>>, vector<128x64xf32>
    %cst_26 = arith.constant dense<0.000000e+00> : vector<1x64xf32>
    %212 = tpu.matmul %210, %211, %cst_26 {dimension_numbers = #tpu.dot_dimension_numbers<[1], [0], [0], [1], [0, 0, 1, 1], [], []>} : vector<1x128xf32>, vector<128x64xf32>, vector<1x64xf32> -> vector<1x64xf32>
    %c256 = arith.constant 256 : index
    %c0_27 = arith.constant 0 : index
    %213 = vector.load %arg2[%c256, %c0_27] : memref<480x128xf32, #tpu.memory_space<vmem>>, vector<1x64xf32>
    %214 = arith.addf %212, %213 : vector<1x64xf32>
    %c264 = arith.constant 264 : index
    %c0_28 = arith.constant 0 : index
    %215 = vector.load %arg2[%c264, %c0_28] : memref<480x128xf32, #tpu.memory_space<vmem>>, vector<8x64xf32>
    %cst_29 = arith.constant dense<0.000000e+00> : vector<1x64xf32>
    %216 = tpu.matmul %189, %215, %cst_29 {dimension_numbers = #tpu.dot_dimension_numbers<[1], [0], [0], [1], [0, 0, 1, 1], [], []>} : vector<1x8xf32>, vector<8x64xf32>, vector<1x64xf32> -> vector<1x64xf32>
    %217 = arith.mulf %214, %216 : vector<1x64xf32>
    %c272 = arith.constant 272 : index
    %c0_30 = arith.constant 0 : index
    %218 = vector.load %arg2[%c272, %c0_30] : memref<480x128xf32, #tpu.memory_space<vmem>>, vector<64x128xf32>
    %cst_31 = arith.constant dense<0.000000e+00> : vector<1x128xf32>
    %219 = tpu.matmul %217, %218, %cst_31 {dimension_numbers = #tpu.dot_dimension_numbers<[1], [0], [0], [1], [0, 0, 1, 1], [], []>} : vector<1x64xf32>, vector<64x128xf32>, vector<1x128xf32> -> vector<1x128xf32>
    %c336 = arith.constant 336 : index
    %c0_32 = arith.constant 0 : index
    %220 = vector.load %arg2[%c336, %c0_32] : memref<480x128xf32, #tpu.memory_space<vmem>>, vector<1x128xf32>
    %221 = arith.addf %219, %220 : vector<1x128xf32>
    %cst_33 = arith.constant 0.000000e+00 : f32
    %222 = vector.broadcast %cst_33 : f32 to vector<1x128xf32>
    %223 = arith.maximumf %221, %222 : vector<1x128xf32>
    %c344 = arith.constant 344 : index
    %c0_34 = arith.constant 0 : index
    %224 = vector.load %arg2[%c344, %c0_34] : memref<480x128xf32, #tpu.memory_space<vmem>>, vector<128x8xf32>
    %cst_35 = arith.constant dense<0.000000e+00> : vector<1x8xf32>
    %225 = tpu.matmul %223, %224, %cst_35 {dimension_numbers = #tpu.dot_dimension_numbers<[1], [0], [0], [1], [0, 0, 1, 1], [], []>} : vector<1x128xf32>, vector<128x8xf32>, vector<1x8xf32> -> vector<1x8xf32>
    %c472 = arith.constant 472 : index
    %c0_36 = arith.constant 0 : index
    %226 = vector.load %arg2[%c472, %c0_36] : memref<480x128xf32, #tpu.memory_space<vmem>>, vector<1x8xf32>
    %227 = arith.addf %225, %226 : vector<1x8xf32>
    %228 = vector.shape_cast %227 : vector<1x8xf32> to vector<1x1x8xf32>
    %c0_37 = arith.constant 0 : index
    %c0_38 = arith.constant 0 : index
    %c0_39 = arith.constant 0 : index
    %229 = vector.load %arg3[%c0_37, %c0_38, %c0_39] : memref<1x1x8xf32, #tpu.memory_space<vmem>>, vector<1x1x8xf32>
    tpu.vector_store %arg3[%c0_37, %c0_38, %c0_39], %228 {strides = array<i32>} : memref<1x1x8xf32, #tpu.memory_space<vmem>>, vector<1x1x8xf32>,
    return
  }
  func.func @transform_0(%arg0: i32) -> (i32, i32, i32, i32) {
    %c0_i32 = arith.constant 0 : i32
    %c0_i32_0 = arith.constant 0 : i32
    %c0_i32_1 = arith.constant 0 : i32
    %c0_i32_2 = arith.constant 0 : i32
    return %arg0, %c0_i32, %c0_i32_0, %c0_i32_1 : i32, i32, i32, i32
  }
  func.func @transform_1(%arg0: i32) -> (i32, i32) {
    %c0_i32 = arith.constant 0 : i32
    %c0_i32_0 = arith.constant 0 : i32
    %c0_i32_1 = arith.constant 0 : i32
    return %c0_i32, %c0_i32_0 : i32, i32
  }
  func.func @transform_2(%arg0: i32) -> (i32, i32, i32) {
    %c0_i32 = arith.constant 0 : i32
    %c0_i32_0 = arith.constant 0 : i32
    %c0_i32_1 = arith.constant 0 : i32
    return %arg0, %c0_i32, %c0_i32_0 : i32, i32, i32
  }
}

</mosaic_0001>

<llo_original>
// kernel: forward.1
$region0: #{forward.1}
  #allocation0 [shape = 'u32[]', space=smem, size = 0x4, offset = 0x4, fixed_abs, tag = 'smem constant byte address 0x4 - core index']
  #allocation1 [shape = 'u32[144,128]{1,0:T(1,128)}', space=vmem, size = 0x12000, scoped, tag = 'internal scratch']
  %s0 = inlined_call_operand.vmem [shape: f32[2,16,16,1], index: 0, kind: input, shape index: {}]
  %s1 = inlined_call_operand.vmem [shape: f32[480,128], index: 1, kind: input, shape index: {}]
  %s2 = inlined_call_operand.hbm [shape: f32[2,1,8], index: 2, kind: output, shape index: {}]
  %s3 = sld [smem:[#allocation0]]
  $region41: #{forward.1} parent=0
    _
  %s5 = ssub.s32 1, %s3
  %s6 = scalar_select 0, %s5, %s3
  $region1: #{forward.1} parent=0
    #allocation2 [shape = 'u8[1024]{0}', space=vmem, size = 0x400, scoped, tag = 'output window, operand 0']
    #allocation3 [shape = 's32[2]{0}', space=sflag, size = 0x8, scoped, tag = 'scoped memory for forward.1']
    %7 = vsyncpa [#allocation3], 0
    %s8 = scalar_lea.sflag [#allocation3], 1
    %9 = vsyncpa %s8, 0
    loop: start=0, step=1, limit=4
    $region2: #{forward.1} parent=1 // loop_pre_header
      _
    $region3: #{forward.1} parent=1 // loop_header
      %s11 = sphi 0, %s15
      %p12 = scmp.ge.s32.totalorder %s11, 4
      %s21 = sphi 0, %s23
      %s24 = sphi 0, %s21
      %s25 = sphi 0, %s24
      %s41 = sphi 0, %s25
      %s45 = sphi 0, %s45
      %s47 = sphi 0, %s45
      %s48 = sphi 0, %s47
      %s62 = sphi 0, %s48
      %s68 = sphi 0, %s70
      %s71 = sphi 0, %s68
      %s72 = sphi 0, %s71
      %s88 = sphi 0, %s72
    $region4: #{forward.1} parent=1 // loop_header_branch
      %14 = sbr.rel (%p12) target = $region8
    $region5: #{forward.1} parent=1 // loop_body
      %s16 = ssub.s32 %s11, 1
      %s17 = ssub.s32 %s11, 2
      %s18 = sadd.s32 %s11, 1
      %s19 = ssub.s32 %s11, %s18
      %p20 = scmp.eq.s32.totalorder %s19, 0
      %s22 = sadd.s32 %s21, 1
      %s23 = scalar_select %p20, %s21, %s22
      %p26 = pneg %p20
      %p27 = scmp.eq.s32.totalorder %s11, 1
      %p28 = por %p26, %p27
      %p29 = scmp.ne.s32.totalorder %s21, %s24
      %p30 = scmp.eq.s32.totalorder %s11, 0
      %p31 = por %p29, %p30
      %p32 = scmp.ne.s32.totalorder %s21, %s24
      %p33 = scmp.eq.s32.totalorder %s16, 1
      %p34 = por %p32, %p33
      %p35 = scmp.ne.s32.totalorder %s24, %s25
      %p36 = scmp.eq.s32.totalorder %s16, 0
      %p37 = por %p35, %p36
      %p38 = scmp.ne.s32.totalorder %s24, %s25
      %p39 = scmp.eq.s32.totalorder %s17, 1
      %p40 = por %p38, %p39
      %p42 = scmp.ne.s32.totalorder %s25, %s41
      %p43 = scmp.eq.s32.totalorder %s17, 0
      %p44 = por %p42, %p43
      %s46 = sadd.s32 %s45, 1
      %p49 = scmp.eq.s32.totalorder %s11, 1
      %p50 = scmp.ne.s32.totalorder %s45, %s47
      %p51 = scmp.eq.s32.totalorder %s11, 0
      %p52 = por %p50, %p51
      %p53 = scmp.ne.s32.totalorder %s45, %s47
      %p54 = scmp.eq.s32.totalorder %s16, 1
      %p55 = por %p53, %p54
      %p56 = scmp.ne.s32.totalorder %s47, %s48
      %p57 = scmp.eq.s32.totalorder %s16, 0
      %p58 = por %p56, %p57
      %p59 = scmp.ne.s32.totalorder %s47, %s48
      %p60 = scmp.eq.s32.totalorder %s17, 1
      %p61 = por %p59, %p60
      %p63 = scmp.ne.s32.totalorder %s48, %s62
      %p64 = scmp.eq.s32.totalorder %s17, 0
      %p65 = por %p63, %p64
      %s66 = ssub.s32 %s11, %s18
      %p67 = scmp.eq.s32.totalorder %s66, 0
      %s69 = sadd.s32 %s68, 1
      %s70 = scalar_select %p67, %s68, %s69
      %p73 = pneg %p67
      %p74 = scmp.eq.s32.totalorder %s11, 1
      %p75 = por %p73, %p74
      %p76 = scmp.ne.s32.totalorder %s68, %s71
      %p77 = scmp.eq.s32.totalorder %s11, 0
      %p78 = por %p76, %p77
      %p79 = scmp.ne.s32.totalorder %s68, %s71
      %p80 = scmp.eq.s32.totalorder %s16, 1
      %p81 = por %p79, %p80
      %p82 = scmp.ne.s32.totalorder %s71, %s72
      %p83 = scmp.eq.s32.totalorder %s16, 0
      %p84 = por %p82, %p83
      %p85 = scmp.ne.s32.totalorder %s71, %s72
      %p86 = scmp.eq.s32.totalorder %s17, 1
      %p87 = por %p85, %p86
      %p89 = scmp.ne.s32.totalorder %s72, %s88
      %p90 = scmp.eq.s32.totalorder %s17, 0
      %p91 = por %p89, %p90
      %p92 = scmp.le.s32.totalorder 1, %s11
      %p93 = scmp.lt.s32.totalorder %s11, 3
      %p94 = pnand %p92, %p93
      %p95 = pneg %p94
      // Predicated region
      $region9: #{forward.1} parent=5 // pred_check
        _
      $region10: #{forward.1} parent=5 // pred_check_branch
        %97 = sbr.rel (%p94) target = $region12
      $region11: #{forward.1} parent=5 // pred_region
        %s98 = ssub.s32 %s11, 1
        // Predicated region
        $region13: #{forward.1} parent=11 // pred_check
          %p99 = pneg %p58
        $region14: #{forward.1} parent=11 // pred_check_branch
          %101 = sbr.rel (%p99) target = $region16
        $region15: #{forward.1} parent=11 // pred_region
          _
        $region16: #{forward.1} parent=11 // pred_fallthru
          _
      $region12: #{forward.1} parent=5 // pred_fallthru
        _
      %p102 = scmp.lt.s32.totalorder %s11, 2
      // Predicated region
      $region17: #{forward.1} parent=5 // pred_check
        %p103 = pneg %p102
      $region18: #{forward.1} parent=5 // pred_check_branch
        %105 = sbr.rel (%p103) target = $region20
      $region19: #{forward.1} parent=5 // pred_region
        // Predicated region
        $region21: #{forward.1} parent=19 // pred_check
          %p106 = pneg %p31
        $region22: #{forward.1} parent=19 // pred_check_branch
          %108 = sbr.rel (%p106) target = $region24
        $region23: #{forward.1} parent=19 // pred_region
          %p109 = scmp.lt.s32.totalorder %s11, 1
          %s110 = scalar_select %p109, %s11, 1
          %s111 = smul.addr %s110, 32
          %s112 = smul.addr %s111, 8
          %s113 = scalar_lea.vmem %s0, %s112
        $region24: #{forward.1} parent=19 // pred_fallthru
          _
      $region20: #{forward.1} parent=5 // pred_fallthru
        _
      %p114 = scmp.le.s32.totalorder 1, %s11
      %p115 = scmp.lt.s32.totalorder %s11, 3
      %p116 = pnand %p114, %p115
      %p117 = pneg %p116
      // Predicated region
      $region25: #{forward.1} parent=5 // pred_check
        _
      $region26: #{forward.1} parent=5 // pred_check_branch
        %119 = sbr.rel (%p116) target = $region28
      $region27: #{forward.1} parent=5 // pred_region
        %s120 = ssub.s32 %s11, 1
        %p121 = scmp.lt.s32.totalorder %s16, 1
        %s122 = scalar_select %p121, %s16, 1
        %s123 = smul.addr %s122, 32
        %s124 = smul.addr %s123, 8
        %s125 = scalar_lea.vmem %s0, %s124
        %p126 = pneg %p37
        %p127 = pneg %p34
        %p128 = pneg %p58
        %p129 = pneg %p55
        %p130 = pneg %p84
        %p131 = pneg %p81
        %s132 = sand.u32 %s71, 1
        %s133 = scalar_lea.sflag [#allocation3], %s132
        %s134 = sand.u32 %s71, 1
        %s135 = scalar_lea.vmem [#allocation2], %s134
        %p136 = scmp.lt.s32.totalorder %s16, 1
        %s137 = scalar_select %p136, %s16, 1
        %s138 = smul.addr %s137, 32
        %s139 = smul.addr %s138, 8
        %s140 = scalar_lea.vmem %s0, %s139
        %v141 = vld [vmem:[%s140] sm:$0xff]
        %v142 = vld [vmem:[%s140 + $0x8] sm:$0xff]
        %v143 = vld [vmem:[%s140 + $0x10] sm:$0xff]
        %v144 = vld [vmem:[%s140 + $0x18] sm:$0xff]
        %v145 = vld [vmem:[%s140 + $0x20] sm:$0xff]
        %v146 = vld [vmem:[%s140 + $0x28] sm:$0xff]
        %v147 = vld [vmem:[%s140 + $0x30] sm:$0xff]
        %v148 = vld [vmem:[%s140 + $0x38] sm:$0xff]
        %v149 = vld [vmem:[%s140 + $0x40] sm:$0xff]
        %v150 = vld [vmem:[%s140 + $0x48] sm:$0xff]
        %v151 = vld [vmem:[%s140 + $0x50] sm:$0xff]
        %v152 = vld [vmem:[%s140 + $0x58] sm:$0xff]
        %v153 = vld [vmem:[%s140 + $0x60] sm:$0xff]
        %v154 = vld [vmem:[%s140 + $0x68] sm:$0xff]
        %v155 = vld [vmem:[%s140 + $0x70] sm:$0xff]
        %v156 = vld [vmem:[%s140 + $0x78] sm:$0xff]
        %v157 = vld [vmem:[%s140 + $0x80] sm:$0xff]
        %v158 = vld [vmem:[%s140 + $0x88] sm:$0xff]
        %v159 = vld [vmem:[%s140 + $0x90] sm:$0xff]
        %v160 = vld [vmem:[%s140 + $0x98] sm:$0xff]
        %v161 = vld [vmem:[%s140 + $0xa0] sm:$0xff]
        %v162 = vld [vmem:[%s140 + $0xa8] sm:$0xff]
        %v163 = vld [vmem:[%s140 + $0xb0] sm:$0xff]
        %v164 = vld [vmem:[%s140 + $0xb8] sm:$0xff]
        %v165 = vld [vmem:[%s140 + $0xc0] sm:$0xff]
        %v166 = vld [vmem:[%s140 + $0xc8] sm:$0xff]
        %v167 = vld [vmem:[%s140 + $0xd0] sm:$0xff]
        %v168 = vld [vmem:[%s140 + $0xd8] sm:$0xff]
        %v169 = vld [vmem:[%s140 + $0xe0] sm:$0xff]
        %v170 = vld [vmem:[%s140 + $0xe8] sm:$0xff]
        %v171 = vld [vmem:[%s140 + $0xf0] sm:$0xff]
        %v172 = vld [vmem:[%s140 + $0xf8] sm:$0xff]
        %v173 = vld [vmem:[%s1] sm:$0xff]
        %v174 = vld [vmem:[%s1 + $0x8] sm:$0x1]
        %v175 = vld [vmem:[%s1 + $0x10] sm:$0x1]
        %vm209 = vcmask 1040384
        %v210 = vrot.slane 0.0, 7
        %v211 = vsel %vm209, %v210, %v210
        %v212 = vrot.slane %v141, 7
        %v213 = vrot.slane %v142, 7
        %v214 = vsel %vm209, %v212, %v213
        %v215 = vrot.slane %v143, 7
        %v216 = vrot.slane %v144, 7
        %v217 = vsel %vm209, %v215, %v216
        %v218 = vrot.slane %v145, 7
        %v219 = vrot.slane %v146, 7
        %v220 = vsel %vm209, %v218, %v219
        %v221 = vrot.slane %v147, 7
        %v222 = vrot.slane %v148, 7
        %v223 = vsel %vm209, %v221, %v222
        %v224 = vrot.slane %v149, 7
        %v225 = vrot.slane %v150, 7
        %v226 = vsel %vm209, %v224, %v225
        %v227 = vrot.slane %v151, 7
        %v228 = vrot.slane %v152, 7
        %v229 = vsel %vm209, %v227, %v228
        %v230 = vrot.slane %v153, 7
        %v231 = vrot.slane %v154, 7
        %v232 = vsel %vm209, %v230, %v231
        %v233 = vrot.slane %v155, 7
        %v234 = vrot.slane %v156, 7
        %v235 = vsel %vm209, %v233, %v234
        %v236 = vrot.slane %v157, 7
        %v237 = vrot.slane %v158, 7
        %v238 = vsel %vm209, %v236, %v237
        %v239 = vrot.slane %v159, 7
        %v240 = vrot.slane %v160, 7
        %v241 = vsel %vm209, %v239, %v240
        %v242 = vrot.slane %v161, 7
        %v243 = vrot.slane %v162, 7
        %v244 = vsel %vm209, %v242, %v243
        %v245 = vrot.slane %v163, 7
        %v246 = vrot.slane %v164, 7
        %v247 = vsel %vm209, %v245, %v246
        %v248 = vrot.slane %v165, 7
        %v249 = vrot.slane %v166, 7
        %v250 = vsel %vm209, %v248, %v249
        %v251 = vrot.slane %v167, 7
        %v252 = vrot.slane %v168, 7
        %v253 = vsel %vm209, %v251, %v252
        %v254 = vrot.slane %v169, 7
        %v255 = vrot.slane %v170, 7
        %v256 = vsel %vm209, %v254, %v255
        %v257 = vrot.slane %v171, 7
        %v258 = vrot.slane %v172, 7
        %v259 = vsel %vm209, %v257, %v258
        %v293 = vsel %vm209, 0.0, %v210
        %v294 = vsel %vm209, 0.0, %v212
        %v295 = vsel %vm209, 0.0, %v215
        %v296 = vsel %vm209, 0.0, %v218
        %v297 = vsel %vm209, 0.0, %v221
        %v298 = vsel %vm209, 0.0, %v224
        %v299 = vsel %vm209, 0.0, %v227
        %v300 = vsel %vm209, 0.0, %v230
        %v301 = vsel %vm209, 0.0, %v233
        %v302 = vsel %vm209, 0.0, %v236
        %v303 = vsel %vm209, 0.0, %v239
        %v304 = vsel %vm209, 0.0, %v242
        %v305 = vsel %vm209, 0.0, %v245
        %v306 = vsel %vm209, 0.0, %v248
        %v307 = vsel %vm209, 0.0, %v251
        %v308 = vsel %vm209, 0.0, %v254
        %v309 = vsel %vm209, 0.0, %v257
        %v310 = vsel %vm209, %v210, 0.0
        %v311 = vsel %vm209, %v213, 0.0
        %v312 = vsel %vm209, %v216, 0.0
        %v313 = vsel %vm209, %v219, 0.0
        %v314 = vsel %vm209, %v222, 0.0
        %v315 = vsel %vm209, %v225, 0.0
        %v316 = vsel %vm209, %v228, 0.0
        %v317 = vsel %vm209, %v231, 0.0
        %v318 = vsel %vm209, %v234, 0.0
        %v319 = vsel %vm209, %v237, 0.0
        %v320 = vsel %vm209, %v240, 0.0
        %v321 = vsel %vm209, %v243, 0.0
        %v322 = vsel %vm209, %v246, 0.0
        %v323 = vsel %vm209, %v249, 0.0
        %v324 = vsel %vm209, %v252, 0.0
        %v325 = vsel %vm209, %v255, 0.0
        %v326 = vsel %vm209, %v258, 0.0
        %328 = vset.pattern.permute.xlu0 0
        %329 = vperm.xlu0 %328, %v293
        %v330 = vpop.permute.xlu0 %329
        %332 = vset.pattern.permute.xlu0 0
        %333 = vperm.xlu0 %332, %v211
        %v334 = vpop.permute.xlu0 %333
        %337 = vset.pattern.permute.xlu0 0
        %338 = vperm.xlu0 %337, %v294
        %v339 = vpop.permute.xlu0 %338
        %341 = vset.pattern.permute.xlu0 0
        %342 = vperm.xlu0 %341, %v214
        %v343 = vpop.permute.xlu0 %342
        %346 = vset.pattern.permute.xlu0 0
        %347 = vperm.xlu0 %346, %v295
        %v348 = vpop.permute.xlu0 %347
        %350 = vset.pattern.permute.xlu0 0
        %351 = vperm.xlu0 %350, %v217
        %v352 = vpop.permute.xlu0 %351
        %355 = vset.pattern.permute.xlu0 0
        %356 = vperm.xlu0 %355, %v296
        %v357 = vpop.permute.xlu0 %356
        %359 = vset.pattern.permute.xlu0 0
        %360 = vperm.xlu0 %359, %v220
        %v361 = vpop.permute.xlu0 %360
        %364 = vset.pattern.permute.xlu0 0
        %365 = vperm.xlu0 %364, %v297
        %v366 = vpop.permute.xlu0 %365
        %368 = vset.pattern.permute.xlu0 0
        %369 = vperm.xlu0 %368, %v223
        %v370 = vpop.permute.xlu0 %369
        %373 = vset.pattern.permute.xlu0 0
        %374 = vperm.xlu0 %373, %v298
        %v375 = vpop.permute.xlu0 %374
        %377 = vset.pattern.permute.xlu0 0
        %378 = vperm.xlu0 %377, %v226
        %v379 = vpop.permute.xlu0 %378
        %382 = vset.pattern.permute.xlu0 0
        %383 = vperm.xlu0 %382, %v299
        %v384 = vpop.permute.xlu0 %383
        %386 = vset.pattern.permute.xlu0 0
        %387 = vperm.xlu0 %386, %v229
        %v388 = vpop.permute.xlu0 %387
        %391 = vset.pattern.permute.xlu0 0
        %392 = vperm.xlu0 %391, %v300
        %v393 = vpop.permute.xlu0 %392
        %395 = vset.pattern.permute.xlu0 0
        %396 = vperm.xlu0 %395, %v232
        %v397 = vpop.permute.xlu0 %396
        %400 = vset.pattern.permute.xlu0 0
        %401 = vperm.xlu0 %400, %v301
        %v402 = vpop.permute.xlu0 %401
        %404 = vset.pattern.permute.xlu0 0
        %405 = vperm.xlu0 %404, %v235
        %v406 = vpop.permute.xlu0 %405
        %409 = vset.pattern.permute.xlu0 0
        %410 = vperm.xlu0 %409, %v302
        %v411 = vpop.permute.xlu0 %410
        %413 = vset.pattern.permute.xlu0 0
        %414 = vperm.xlu0 %413, %v238
        %v415 = vpop.permute.xlu0 %414
        %418 = vset.pattern.permute.xlu0 0
        %419 = vperm.xlu0 %418, %v303
        %v420 = vpop.permute.xlu0 %419
        %422 = vset.pattern.permute.xlu0 0
        %423 = vperm.xlu0 %422, %v241
        %v424 = vpop.permute.xlu0 %423
        %427 = vset.pattern.permute.xlu0 0
        %428 = vperm.xlu0 %427, %v304
        %v429 = vpop.permute.xlu0 %428
        %431 = vset.pattern.permute.xlu0 0
        %432 = vperm.xlu0 %431, %v244
        %v433 = vpop.permute.xlu0 %432
        %436 = vset.pattern.permute.xlu0 0
        %437 = vperm.xlu0 %436, %v305
        %v438 = vpop.permute.xlu0 %437
        %440 = vset.pattern.permute.xlu0 0
        %441 = vperm.xlu0 %440, %v247
        %v442 = vpop.permute.xlu0 %441
        %445 = vset.pattern.permute.xlu0 0
        %446 = vperm.xlu0 %445, %v306
        %v447 = vpop.permute.xlu0 %446
        %449 = vset.pattern.permute.xlu0 0
        %450 = vperm.xlu0 %449, %v250
        %v451 = vpop.permute.xlu0 %450
        %454 = vset.pattern.permute.xlu0 0
        %455 = vperm.xlu0 %454, %v307
        %v456 = vpop.permute.xlu0 %455
        %458 = vset.pattern.permute.xlu0 0
        %459 = vperm.xlu0 %458, %v253
        %v460 = vpop.permute.xlu0 %459
        %463 = vset.pattern.permute.xlu0 0
        %464 = vperm.xlu0 %463, %v308
        %v465 = vpop.permute.xlu0 %464
        %467 = vset.pattern.permute.xlu0 0
        %468 = vperm.xlu0 %467, %v256
        %v469 = vpop.permute.xlu0 %468
        %v471 = vlaneseq
        %v472 = vshrl.u32 %v471, 7
        %v473 = vsub.s32 0, %v472
        %v474 = vrot.slane %v173, %v473
        %v475 = vmul.f32 %v330, %v474
        %v476 = vmul.f32 %v334, %v474
        %v477 = vmul.f32 %v339, %v474
        %v478 = vmul.f32 %v343, %v474
        %v479 = vmul.f32 %v348, %v474
        %v480 = vmul.f32 %v352, %v474
        %v481 = vmul.f32 %v357, %v474
        %v482 = vmul.f32 %v361, %v474
        %v483 = vmul.f32 %v366, %v474
        %v484 = vmul.f32 %v370, %v474
        %v485 = vmul.f32 %v375, %v474
        %v486 = vmul.f32 %v379, %v474
        %v487 = vmul.f32 %v384, %v474
        %v488 = vmul.f32 %v388, %v474
        %v489 = vmul.f32 %v393, %v474
        %v490 = vmul.f32 %v397, %v474
        %v491 = vmul.f32 %v402, %v474
        %v492 = vmul.f32 %v406, %v474
        %v493 = vmul.f32 %v411, %v474
        %v494 = vmul.f32 %v415, %v474
        %v495 = vmul.f32 %v420, %v474
        %v496 = vmul.f32 %v424, %v474
        %v497 = vmul.f32 %v429, %v474
        %v498 = vmul.f32 %v433, %v474
        %v499 = vmul.f32 %v438, %v474
        %v500 = vmul.f32 %v442, %v474
        %v501 = vmul.f32 %v447, %v474
        %v502 = vmul.f32 %v451, %v474
        %v503 = vmul.f32 %v456, %v474
        %v504 = vmul.f32 %v460, %v474
        %v505 = vmul.f32 %v465, %v474
        %v506 = vmul.f32 %v469, %v474
        %v507 = vadd.f32 %v475, 0.0
        %v508 = vadd.f32 %v476, 0.0
        %v509 = vadd.f32 %v477, 0.0
        %v510 = vadd.f32 %v478, 0.0
        %v511 = vadd.f32 %v479, 0.0
        %v512 = vadd.f32 %v480, 0.0
        %v513 = vadd.f32 %v481, 0.0
        %v514 = vadd.f32 %v482, 0.0
        %v515 = vadd.f32 %v483, 0.0
        %v516 = vadd.f32 %v484, 0.0
        %v517 = vadd.f32 %v485, 0.0
        %v518 = vadd.f32 %v486, 0.0
        %v519 = vadd.f32 %v487, 0.0
        %v520 = vadd.f32 %v488, 0.0
        %v521 = vadd.f32 %v489, 0.0
        %v522 = vadd.f32 %v490, 0.0
        %v523 = vadd.f32 %v491, 0.0
        %v524 = vadd.f32 %v492, 0.0
        %v525 = vadd.f32 %v493, 0.0
        %v526 = vadd.f32 %v494, 0.0
        %v527 = vadd.f32 %v495, 0.0
        %v528 = vadd.f32 %v496, 0.0
        %v529 = vadd.f32 %v497, 0.0
        %v530 = vadd.f32 %v498, 0.0
        %v531 = vadd.f32 %v499, 0.0
        %v532 = vadd.f32 %v500, 0.0
        %v533 = vadd.f32 %v501, 0.0
        %v534 = vadd.f32 %v502, 0.0
        %v535 = vadd.f32 %v503, 0.0
        %v536 = vadd.f32 %v504, 0.0
        %v537 = vadd.f32 %v505, 0.0
        %v538 = vadd.f32 %v506, 0.0
        %540 = vset.pattern.permute.xlu0 0
        %541 = vperm.xlu0 %540, %v310
        %v542 = vpop.permute.xlu0 %541
        %545 = vset.pattern.permute.xlu0 0
        %546 = vperm.xlu0 %545, %v311
        %v547 = vpop.permute.xlu0 %546
        %550 = vset.pattern.permute.xlu0 0
        %551 = vperm.xlu0 %550, %v312
        %v552 = vpop.permute.xlu0 %551
        %555 = vset.pattern.permute.xlu0 0
        %556 = vperm.xlu0 %555, %v313
        %v557 = vpop.permute.xlu0 %556
        %560 = vset.pattern.permute.xlu0 0
        %561 = vperm.xlu0 %560, %v314
        %v562 = vpop.permute.xlu0 %561
        %565 = vset.pattern.permute.xlu0 0
        %566 = vperm.xlu0 %565, %v315
        %v567 = vpop.permute.xlu0 %566
        %570 = vset.pattern.permute.xlu0 0
        %571 = vperm.xlu0 %570, %v316
        %v572 = vpop.permute.xlu0 %571
        %575 = vset.pattern.permute.xlu0 0
        %576 = vperm.xlu0 %575, %v317
        %v577 = vpop.permute.xlu0 %576
        %580 = vset.pattern.permute.xlu0 0
        %581 = vperm.xlu0 %580, %v318
        %v582 = vpop.permute.xlu0 %581
        %585 = vset.pattern.permute.xlu0 0
        %586 = vperm.xlu0 %585, %v319
        %v587 = vpop.permute.xlu0 %586
        %590 = vset.pattern.permute.xlu0 0
        %591 = vperm.xlu0 %590, %v320
        %v592 = vpop.permute.xlu0 %591
        %595 = vset.pattern.permute.xlu0 0
        %596 = vperm.xlu0 %595, %v321
        %v597 = vpop.permute.xlu0 %596
        %600 = vset.pattern.permute.xlu0 0
        %601 = vperm.xlu0 %600, %v322
        %v602 = vpop.permute.xlu0 %601
        %605 = vset.pattern.permute.xlu0 0
        %606 = vperm.xlu0 %605, %v323
        %v607 = vpop.permute.xlu0 %606
        %610 = vset.pattern.permute.xlu0 0
        %611 = vperm.xlu0 %610, %v324
        %v612 = vpop.permute.xlu0 %611
        %615 = vset.pattern.permute.xlu0 0
        %616 = vperm.xlu0 %615, %v325
        %v617 = vpop.permute.xlu0 %616
        %v619 = vlaneseq
        %v620 = vshrl.u32 %v619, 7
        %v621 = vsub.s32 1, %v620
        %v622 = vrot.slane %v173, %v621
        %v623 = vmul.f32 %v330, %v622
        %v624 = vmul.f32 %v334, %v622
        %v625 = vmul.f32 %v542, %v622
        %v626 = vmul.f32 %v339, %v622
        %v627 = vmul.f32 %v343, %v622
        %v628 = vmul.f32 %v547, %v622
        %v629 = vmul.f32 %v348, %v622
        %v630 = vmul.f32 %v352, %v622
        %v631 = vmul.f32 %v552, %v622
        %v632 = vmul.f32 %v357, %v622
        %v633 = vmul.f32 %v361, %v622
        %v634 = vmul.f32 %v557, %v622
        %v635 = vmul.f32 %v366, %v622
        %v636 = vmul.f32 %v370, %v622
        %v637 = vmul.f32 %v562, %v622
        %v638 = vmul.f32 %v375, %v622
        %v639 = vmul.f32 %v379, %v622
        %v640 = vmul.f32 %v567, %v622
        %v641 = vmul.f32 %v384, %v622
        %v642 = vmul.f32 %v388, %v622
        %v643 = vmul.f32 %v572, %v622
        %v644 = vmul.f32 %v393, %v622
        %v645 = vmul.f32 %v397, %v622
        %v646 = vmul.f32 %v577, %v622
        %v647 = vmul.f32 %v402, %v622
        %v648 = vmul.f32 %v406, %v622
        %v649 = vmul.f32 %v582, %v622
        %v650 = vmul.f32 %v411, %v622
        %v651 = vmul.f32 %v415, %v622
        %v652 = vmul.f32 %v587, %v622
        %v653 = vmul.f32 %v420, %v622
        %v654 = vmul.f32 %v424, %v622
        %v655 = vmul.f32 %v592, %v622
        %v656 = vmul.f32 %v429, %v622
        %v657 = vmul.f32 %v433, %v622
        %v658 = vmul.f32 %v597, %v622
        %v659 = vmul.f32 %v438, %v622
        %v660 = vmul.f32 %v442, %v622
        %v661 = vmul.f32 %v602, %v622
        %v662 = vmul.f32 %v447, %v622
        %v663 = vmul.f32 %v451, %v622
        %v664 = vmul.f32 %v607, %v622
        %v665 = vmul.f32 %v456, %v622
        %v666 = vmul.f32 %v460, %v622
        %v667 = vmul.f32 %v612, %v622
        %v668 = vmul.f32 %v465, %v622
        %v669 = vmul.f32 %v469, %v622
        %v670 = vmul.f32 %v617, %v622
        %vm719 = vcmask 1046528
        %v720 = vrot.slane %v623, 1
        %v721 = vrot.slane %v624, 1
        %v722 = vsel %vm719, %v720, %v721
        %v723 = vrot.slane %v625, 1
        %v724 = vsel %vm719, %v721, %v723
        %v725 = vrot.slane %v626, 1
        %v726 = vrot.slane %v627, 1
        %v727 = vsel %vm719, %v725, %v726
        %v728 = vrot.slane %v628, 1
        %v729 = vsel %vm719, %v726, %v728
        %v730 = vrot.slane %v629, 1
        %v731 = vrot.slane %v630, 1
        %v732 = vsel %vm719, %v730, %v731
        %v733 = vrot.slane %v631, 1
        %v734 = vsel %vm719, %v731, %v733
        %v735 = vrot.slane %v632, 1
        %v736 = vrot.slane %v633, 1
        %v737 = vsel %vm719, %v735, %v736
        %v738 = vrot.slane %v634, 1
        %v739 = vsel %vm719, %v736, %v738
        %v740 = vrot.slane %v635, 1
        %v741 = vrot.slane %v636, 1
        %v742 = vsel %vm719, %v740, %v741
        %v743 = vrot.slane %v637, 1
        %v744 = vsel %vm719, %v741, %v743
        %v745 = vrot.slane %v638, 1
        %v746 = vrot.slane %v639, 1
        %v747 = vsel %vm719, %v745, %v746
        %v748 = vrot.slane %v640, 1
        %v749 = vsel %vm719, %v746, %v748
        %v750 = vrot.slane %v641, 1
        %v751 = vrot.slane %v642, 1
        %v752 = vsel %vm719, %v750, %v751
        %v753 = vrot.slane %v643, 1
        %v754 = vsel %vm719, %v751, %v753
        %v755 = vrot.slane %v644, 1
        %v756 = vrot.slane %v645, 1
        %v757 = vsel %vm719, %v755, %v756
        %v758 = vrot.slane %v646, 1
        %v759 = vsel %vm719, %v756, %v758
        %v760 = vrot.slane %v647, 1
        %v761 = vrot.slane %v648, 1
        %v762 = vsel %vm719, %v760, %v761
        %v763 = vrot.slane %v649, 1
        %v764 = vsel %vm719, %v761, %v763
        %v765 = vrot.slane %v650, 1
        %v766 = vrot.slane %v651, 1
        %v767 = vsel %vm719, %v765, %v766
        %v768 = vrot.slane %v652, 1
        %v769 = vsel %vm719, %v766, %v768
        %v770 = vrot.slane %v653, 1
        %v771 = vrot.slane %v654, 1
        %v772 = vsel %vm719, %v770, %v771
        %v773 = vrot.slane %v655, 1
        %v774 = vsel %vm719, %v771, %v773
        %v775 = vrot.slane %v656, 1
        %v776 = vrot.slane %v657, 1
        %v777 = vsel %vm719, %v775, %v776
        %v778 = vrot.slane %v658, 1
        %v779 = vsel %vm719, %v776, %v778
        %v780 = vrot.slane %v659, 1
        %v781 = vrot.slane %v660, 1
        %v782 = vsel %vm719, %v780, %v781
        %v783 = vrot.slane %v661, 1
        %v784 = vsel %vm719, %v781, %v783
        %v785 = vrot.slane %v662, 1
        %v786 = vrot.slane %v663, 1
        %v787 = vsel %vm719, %v785, %v786
        %v788 = vrot.slane %v664, 1
        %v789 = vsel %vm719, %v786, %v788
        %v790 = vrot.slane %v665, 1
        %v791 = vrot.slane %v666, 1
        %v792 = vsel %vm719, %v790, %v791
        %v793 = vrot.slane %v667, 1
        %v794 = vsel %vm719, %v791, %v793
        %v795 = vrot.slane %v668, 1
        %v796 = vrot.slane %v669, 1
        %v797 = vsel %vm719, %v795, %v796
        %v798 = vrot.slane %v670, 1
        %v799 = vsel %vm719, %v796, %v798
        %v832 = vadd.f32 %v507, %v722
        %v833 = vadd.f32 %v508, %v724
        %v834 = vadd.f32 %v509, %v727
        %v835 = vadd.f32 %v510, %v729
        %v836 = vadd.f32 %v511, %v732
        %v837 = vadd.f32 %v512, %v734
        %v838 = vadd.f32 %v513, %v737
        %v839 = vadd.f32 %v514, %v739
        %v840 = vadd.f32 %v515, %v742
        %v841 = vadd.f32 %v516, %v744
        %v842 = vadd.f32 %v517, %v747
        %v843 = vadd.f32 %v518, %v749
        %v844 = vadd.f32 %v519, %v752
        %v845 = vadd.f32 %v520, %v754
        %v846 = vadd.f32 %v521, %v757
        %v847 = vadd.f32 %v522, %v759
        %v848 = vadd.f32 %v523, %v762
        %v849 = vadd.f32 %v524, %v764
        %v850 = vadd.f32 %v525, %v767
        %v851 = vadd.f32 %v526, %v769
        %v852 = vadd.f32 %v527, %v772
        %v853 = vadd.f32 %v528, %v774
        %v854 = vadd.f32 %v529, %v777
        %v855 = vadd.f32 %v530, %v779
        %v856 = vadd.f32 %v531, %v782
        %v857 = vadd.f32 %v532, %v784
        %v858 = vadd.f32 %v533, %v787
        %v859 = vadd.f32 %v534, %v789
        %v860 = vadd.f32 %v535, %v792
        %v861 = vadd.f32 %v536, %v794
        %v862 = vadd.f32 %v537, %v797
        %v863 = vadd.f32 %v538, %v799
        %v864 = vlaneseq
        %v865 = vshrl.u32 %v864, 7
        %v866 = vsub.s32 2, %v865
        %v867 = vrot.slane %v173, %v866
        %v868 = vmul.f32 %v330, %v867
        %v869 = vmul.f32 %v334, %v867
        %v870 = vmul.f32 %v542, %v867
        %v871 = vmul.f32 %v339, %v867
        %v872 = vmul.f32 %v343, %v867
        %v873 = vmul.f32 %v547, %v867
        %v874 = vmul.f32 %v348, %v867
        %v875 = vmul.f32 %v352, %v867
        %v876 = vmul.f32 %v552, %v867
        %v877 = vmul.f32 %v357, %v867
        %v878 = vmul.f32 %v361, %v867
        %v879 = vmul.f32 %v557, %v867
        %v880 = vmul.f32 %v366, %v867
        %v881 = vmul.f32 %v370, %v867
        %v882 = vmul.f32 %v562, %v867
        %v883 = vmul.f32 %v375, %v867
        %v884 = vmul.f32 %v379, %v867
        %v885 = vmul.f32 %v567, %v867
        %v886 = vmul.f32 %v384, %v867
        %v887 = vmul.f32 %v388, %v867
        %v888 = vmul.f32 %v572, %v867
        %v889 = vmul.f32 %v393, %v867
        %v890 = vmul.f32 %v397, %v867
        %v891 = vmul.f32 %v577, %v867
        %v892 = vmul.f32 %v402, %v867
        %v893 = vmul.f32 %v406, %v867
        %v894 = vmul.f32 %v582, %v867
        %v895 = vmul.f32 %v411, %v867
        %v896 = vmul.f32 %v415, %v867
        %v897 = vmul.f32 %v587, %v867
        %v898 = vmul.f32 %v420, %v867
        %v899 = vmul.f32 %v424, %v867
        %v900 = vmul.f32 %v592, %v867
        %v901 = vmul.f32 %v429, %v867
        %v902 = vmul.f32 %v433, %v867
        %v903 = vmul.f32 %v597, %v867
        %v904 = vmul.f32 %v438, %v867
        %v905 = vmul.f32 %v442, %v867
        %v906 = vmul.f32 %v602, %v867
        %v907 = vmul.f32 %v447, %v867
        %v908 = vmul.f32 %v451, %v867
        %v909 = vmul.f32 %v607, %v867
        %v910 = vmul.f32 %v456, %v867
        %v911 = vmul.f32 %v460, %v867
        %v912 = vmul.f32 %v612, %v867
        %v913 = vmul.f32 %v465, %v867
        %v914 = vmul.f32 %v469, %v867
        %v915 = vmul.f32 %v617, %v867
        %vm964 = vcmask 1045504
        %v965 = vrot.slane %v868, 2
        %v966 = vrot.slane %v869, 2
        %v967 = vsel %vm964, %v965, %v966
        %v968 = vrot.slane %v870, 2
        %v969 = vsel %vm964, %v966, %v968
        %v970 = vrot.slane %v871, 2
        %v971 = vrot.slane %v872, 2
        %v972 = vsel %vm964, %v970, %v971
        %v973 = vrot.slane %v873, 2
        %v974 = vsel %vm964, %v971, %v973
        %v975 = vrot.slane %v874, 2
        %v976 = vrot.slane %v875, 2
        %v977 = vsel %vm964, %v975, %v976
        %v978 = vrot.slane %v876, 2
        %v979 = vsel %vm964, %v976, %v978
        %v980 = vrot.slane %v877, 2
        %v981 = vrot.slane %v878, 2
        %v982 = vsel %vm964, %v980, %v981
        %v983 = vrot.slane %v879, 2
        %v984 = vsel %vm964, %v981, %v983
        %v985 = vrot.slane %v880, 2
        %v986 = vrot.slane %v881, 2
        %v987 = vsel %vm964, %v985, %v986
        %v988 = vrot.slane %v882, 2
        %v989 = vsel %vm964, %v986, %v988
        %v990 = vrot.slane %v883, 2
        %v991 = vrot.slane %v884, 2
        %v992 = vsel %vm964, %v990, %v991
        %v993 = vrot.slane %v885, 2
        %v994 = vsel %vm964, %v991, %v993
        %v995 = vrot.slane %v886, 2
        %v996 = vrot.slane %v887, 2
        %v997 = vsel %vm964, %v995, %v996
        %v998 = vrot.slane %v888, 2
        %v999 = vsel %vm964, %v996, %v998
        %v1000 = vrot.slane %v889, 2
        %v1001 = vrot.slane %v890, 2
        %v1002 = vsel %vm964, %v1000, %v1001
        %v1003 = vrot.slane %v891, 2
        %v1004 = vsel %vm964, %v1001, %v1003
        %v1005 = vrot.slane %v892, 2
        %v1006 = vrot.slane %v893, 2
        %v1007 = vsel %vm964, %v1005, %v1006
        %v1008 = vrot.slane %v894, 2
        %v1009 = vsel %vm964, %v1006, %v1008
        %v1010 = vrot.slane %v895, 2
        %v1011 = vrot.slane %v896, 2
        %v1012 = vsel %vm964, %v1010, %v1011
        %v1013 = vrot.slane %v897, 2
        %v1014 = vsel %vm964, %v1011, %v1013
        %v1015 = vrot.slane %v898, 2
        %v1016 = vrot.slane %v899, 2
        %v1017 = vsel %vm964, %v1015, %v1016
        %v1018 = vrot.slane %v900, 2
        %v1019 = vsel %vm964, %v1016, %v1018
        %v1020 = vrot.slane %v901, 2
        %v1021 = vrot.slane %v902, 2
        %v1022 = vsel %vm964, %v1020, %v1021
        %v1023 = vrot.slane %v903, 2
        %v1024 = vsel %vm964, %v1021, %v1023
        %v1025 = vrot.slane %v904, 2
        %v1026 = vrot.slane %v905, 2
        %v1027 = vsel %vm964, %v1025, %v1026
        %v1028 = vrot.slane %v906, 2
        %v1029 = vsel %vm964, %v1026, %v1028
        %v1030 = vrot.slane %v907, 2
        %v1031 = vrot.slane %v908, 2
        %v1032 = vsel %vm964, %v1030, %v1031
        %v1033 = vrot.slane %v909, 2
        %v1034 = vsel %vm964, %v1031, %v1033
        %v1035 = vrot.slane %v910, 2
        %v1036 = vrot.slane %v911, 2
        %v1037 = vsel %vm964, %v1035, %v1036
        %v1038 = vrot.slane %v912, 2
        %v1039 = vsel %vm964, %v1036, %v1038
        %v1040 = vrot.slane %v913, 2
        %v1041 = vrot.slane %v914, 2
        %v1042 = vsel %vm964, %v1040, %v1041
        %v1043 = vrot.slane %v915, 2
        %v1044 = vsel %vm964, %v1041, %v1043
        %v1077 = vadd.f32 %v832, %v967
        %v1078 = vadd.f32 %v833, %v969
        %v1079 = vadd.f32 %v834, %v972
        %v1080 = vadd.f32 %v835, %v974
        %v1081 = vadd.f32 %v836, %v977
        %v1082 = vadd.f32 %v837, %v979
        %v1083 = vadd.f32 %v838, %v982
        %v1084 = vadd.f32 %v839, %v984
        %v1085 = vadd.f32 %v840, %v987
        %v1086 = vadd.f32 %v841, %v989
        %v1087 = vadd.f32 %v842, %v992
        %v1088 = vadd.f32 %v843, %v994
        %v1089 = vadd.f32 %v844, %v997
        %v1090 = vadd.f32 %v845, %v999
        %v1091 = vadd.f32 %v846, %v1002
        %v1092 = vadd.f32 %v847, %v1004
        %v1093 = vadd.f32 %v848, %v1007
        %v1094 = vadd.f32 %v849, %v1009
        %v1095 = vadd.f32 %v850, %v1012
        %v1096 = vadd.f32 %v851, %v1014
        %v1097 = vadd.f32 %v852, %v1017
        %v1098 = vadd.f32 %v853, %v1019
        %v1099 = vadd.f32 %v854, %v1022
        %v1100 = vadd.f32 %v855, %v1024
        %v1101 = vadd.f32 %v856, %v1027
        %v1102 = vadd.f32 %v857, %v1029
        %v1103 = vadd.f32 %v858, %v1032
        %v1104 = vadd.f32 %v859, %v1034
        %v1105 = vadd.f32 %v860, %v1037
        %v1106 = vadd.f32 %v861, %v1039
        %v1107 = vadd.f32 %v862, %v1042
        %v1108 = vadd.f32 %v863, %v1044
        %1110 = vset.pattern.permute.xlu0 0
        %1111 = vperm.xlu0 %1110, %v309
        %v1112 = vpop.permute.xlu0 %1111
        %1114 = vset.pattern.permute.xlu0 0
        %1115 = vperm.xlu0 %1114, %v259
        %v1116 = vpop.permute.xlu0 %1115
        %v1118 = vlaneseq
        %v1119 = vshrl.u32 %v1118, 7
        %v1120 = vsub.s32 3, %v1119
        %v1121 = vrot.slane %v173, %v1120
        %v1122 = vmul.f32 %v339, %v1121
        %v1123 = vmul.f32 %v343, %v1121
        %v1124 = vmul.f32 %v348, %v1121
        %v1125 = vmul.f32 %v352, %v1121
        %v1126 = vmul.f32 %v357, %v1121
        %v1127 = vmul.f32 %v361, %v1121
        %v1128 = vmul.f32 %v366, %v1121
        %v1129 = vmul.f32 %v370, %v1121
        %v1130 = vmul.f32 %v375, %v1121
        %v1131 = vmul.f32 %v379, %v1121
        %v1132 = vmul.f32 %v384, %v1121
        %v1133 = vmul.f32 %v388, %v1121
        %v1134 = vmul.f32 %v393, %v1121
        %v1135 = vmul.f32 %v397, %v1121
        %v1136 = vmul.f32 %v402, %v1121
        %v1137 = vmul.f32 %v406, %v1121
        %v1138 = vmul.f32 %v411, %v1121
        %v1139 = vmul.f32 %v415, %v1121
        %v1140 = vmul.f32 %v420, %v1121
        %v1141 = vmul.f32 %v424, %v1121
        %v1142 = vmul.f32 %v429, %v1121
        %v1143 = vmul.f32 %v433, %v1121
        %v1144 = vmul.f32 %v438, %v1121
        %v1145 = vmul.f32 %v442, %v1121
        %v1146 = vmul.f32 %v447, %v1121
        %v1147 = vmul.f32 %v451, %v1121
        %v1148 = vmul.f32 %v456, %v1121
        %v1149 = vmul.f32 %v460, %v1121
        %v1150 = vmul.f32 %v465, %v1121
        %v1151 = vmul.f32 %v469, %v1121
        %v1152 = vmul.f32 %v1112, %v1121
        %v1153 = vmul.f32 %v1116, %v1121
        %v1154 = vadd.f32 %v1077, %v1122
        %v1155 = vadd.f32 %v1078, %v1123
        %v1156 = vadd.f32 %v1079, %v1124
        %v1157 = vadd.f32 %v1080, %v1125
        %v1158 = vadd.f32 %v1081, %v1126
        %v1159 = vadd.f32 %v1082, %v1127
        %v1160 = vadd.f32 %v1083, %v1128
        %v1161 = vadd.f32 %v1084, %v1129
        %v1162 = vadd.f32 %v1085, %v1130
        %v1163 = vadd.f32 %v1086, %v1131
        %v1164 = vadd.f32 %v1087, %v1132
        %v1165 = vadd.f32 %v1088, %v1133
        %v1166 = vadd.f32 %v1089, %v1134
        %v1167 = vadd.f32 %v1090, %v1135
        %v1168 = vadd.f32 %v1091, %v1136
        %v1169 = vadd.f32 %v1092, %v1137
        %v1170 = vadd.f32 %v1093, %v1138
        %v1171 = vadd.f32 %v1094, %v1139
        %v1172 = vadd.f32 %v1095, %v1140
        %v1173 = vadd.f32 %v1096, %v1141
        %v1174 = vadd.f32 %v1097, %v1142
        %v1175 = vadd.f32 %v1098, %v1143
        %v1176 = vadd.f32 %v1099, %v1144
        %v1177 = vadd.f32 %v1100, %v1145
        %v1178 = vadd.f32 %v1101, %v1146
        %v1179 = vadd.f32 %v1102, %v1147
        %v1180 = vadd.f32 %v1103, %v1148
        %v1181 = vadd.f32 %v1104, %v1149
        %v1182 = vadd.f32 %v1105, %v1150
        %v1183 = vadd.f32 %v1106, %v1151
        %v1184 = vadd.f32 %v1107, %v1152
        %v1185 = vadd.f32 %v1108, %v1153
        %1187 = vset.pattern.permute.xlu0 0
        %1188 = vperm.xlu0 %1187, %v326
        %v1189 = vpop.permute.xlu0 %1188
        %v1191 = vlaneseq
        %v1192 = vshrl.u32 %v1191, 7
        %v1193 = vsub.s32 4, %v1192
        %v1194 = vrot.slane %v173, %v1193
        %v1195 = vmul.f32 %v339, %v1194
        %v1196 = vmul.f32 %v343, %v1194
        %v1197 = vmul.f32 %v547, %v1194
        %v1198 = vmul.f32 %v348, %v1194
        %v1199 = vmul.f32 %v352, %v1194
        %v1200 = vmul.f32 %v552, %v1194
        %v1201 = vmul.f32 %v357, %v1194
        %v1202 = vmul.f32 %v361, %v1194
        %v1203 = vmul.f32 %v557, %v1194
        %v1204 = vmul.f32 %v366, %v1194
        %v1205 = vmul.f32 %v370, %v1194
        %v1206 = vmul.f32 %v562, %v1194
        %v1207 = vmul.f32 %v375, %v1194
        %v1208 = vmul.f32 %v379, %v1194
        %v1209 = vmul.f32 %v567, %v1194
        %v1210 = vmul.f32 %v384, %v1194
        %v1211 = vmul.f32 %v388, %v1194
        %v1212 = vmul.f32 %v572, %v1194
        %v1213 = vmul.f32 %v393, %v1194
        %v1214 = vmul.f32 %v397, %v1194
        %v1215 = vmul.f32 %v577, %v1194
        %v1216 = vmul.f32 %v402, %v1194
        %v1217 = vmul.f32 %v406, %v1194
        %v1218 = vmul.f32 %v582, %v1194
        %v1219 = vmul.f32 %v411, %v1194
        %v1220 = vmul.f32 %v415, %v1194
        %v1221 = vmul.f32 %v587, %v1194
        %v1222 = vmul.f32 %v420, %v1194
        %v1223 = vmul.f32 %v424, %v1194
        %v1224 = vmul.f32 %v592, %v1194
        %v1225 = vmul.f32 %v429, %v1194
        %v1226 = vmul.f32 %v433, %v1194
        %v1227 = vmul.f32 %v597, %v1194
        %v1228 = vmul.f32 %v438, %v1194
        %v1229 = vmul.f32 %v442, %v1194
        %v1230 = vmul.f32 %v602, %v1194
        %v1231 = vmul.f32 %v447, %v1194
        %v1232 = vmul.f32 %v451, %v1194
        %v1233 = vmul.f32 %v607, %v1194
        %v1234 = vmul.f32 %v456, %v1194
        %v1235 = vmul.f32 %v460, %v1194
        %v1236 = vmul.f32 %v612, %v1194
        %v1237 = vmul.f32 %v465, %v1194
        %v1238 = vmul.f32 %v469, %v1194
        %v1239 = vmul.f32 %v617, %v1194
        %v1240 = vmul.f32 %v1112, %v1194
        %v1241 = vmul.f32 %v1116, %v1194
        %v1242 = vmul.f32 %v1189, %v1194
        %v1291 = vrot.slane %v1195, 1
        %v1292 = vrot.slane %v1196, 1
        %v1293 = vsel %vm719, %v1291, %v1292
        %v1294 = vrot.slane %v1197, 1
        %v1295 = vsel %vm719, %v1292, %v1294
        %v1296 = vrot.slane %v1198, 1
        %v1297 = vrot.slane %v1199, 1
        %v1298 = vsel %vm719, %v1296, %v1297
        %v1299 = vrot.slane %v1200, 1
        %v1300 = vsel %vm719, %v1297, %v1299
        %v1301 = vrot.slane %v1201, 1
        %v1302 = vrot.slane %v1202, 1
        %v1303 = vsel %vm719, %v1301, %v1302
        %v1304 = vrot.slane %v1203, 1
        %v1305 = vsel %vm719, %v1302, %v1304
        %v1306 = vrot.slane %v1204, 1
        %v1307 = vrot.slane %v1205, 1
        %v1308 = vsel %vm719, %v1306, %v1307
        %v1309 = vrot.slane %v1206, 1
        %v1310 = vsel %vm719, %v1307, %v1309
        %v1311 = vrot.slane %v1207, 1
        %v1312 = vrot.slane %v1208, 1
        %v1313 = vsel %vm719, %v1311, %v1312
        %v1314 = vrot.slane %v1209, 1
        %v1315 = vsel %vm719, %v1312, %v1314
        %v1316 = vrot.slane %v1210, 1
        %v1317 = vrot.slane %v1211, 1
        %v1318 = vsel %vm719, %v1316, %v1317
        %v1319 = vrot.slane %v1212, 1
        %v1320 = vsel %vm719, %v1317, %v1319
        %v1321 = vrot.slane %v1213, 1
        %v1322 = vrot.slane %v1214, 1
        %v1323 = vsel %vm719, %v1321, %v1322
        %v1324 = vrot.slane %v1215, 1
        %v1325 = vsel %vm719, %v1322, %v1324
        %v1326 = vrot.slane %v1216, 1
        %v1327 = vrot.slane %v1217, 1
        %v1328 = vsel %vm719, %v1326, %v1327
        %v1329 = vrot.slane %v1218, 1
        %v1330 = vsel %vm719, %v1327, %v1329
        %v1331 = vrot.slane %v1219, 1
        %v1332 = vrot.slane %v1220, 1
        %v1333 = vsel %vm719, %v1331, %v1332
        %v1334 = vrot.slane %v1221, 1
        %v1335 = vsel %vm719, %v1332, %v1334
        %v1336 = vrot.slane %v1222, 1
        %v1337 = vrot.slane %v1223, 1
        %v1338 = vsel %vm719, %v1336, %v1337
        %v1339 = vrot.slane %v1224, 1
        %v1340 = vsel %vm719, %v1337, %v1339
        %v1341 = vrot.slane %v1225, 1
        %v1342 = vrot.slane %v1226, 1
        %v1343 = vsel %vm719, %v1341, %v1342
        %v1344 = vrot.slane %v1227, 1
        %v1345 = vsel %vm719, %v1342, %v1344
        %v1346 = vrot.slane %v1228, 1
        %v1347 = vrot.slane %v1229, 1
        %v1348 = vsel %vm719, %v1346, %v1347
        %v1349 = vrot.slane %v1230, 1
        %v1350 = vsel %vm719, %v1347, %v1349
        %v1351 = vrot.slane %v1231, 1
        %v1352 = vrot.slane %v1232, 1
        %v1353 = vsel %vm719, %v1351, %v1352
        %v1354 = vrot.slane %v1233, 1
        %v1355 = vsel %vm719, %v1352, %v1354
        %v1356 = vrot.slane %v1234, 1
        %v1357 = vrot.slane %v1235, 1
        %v1358 = vsel %vm719, %v1356, %v1357
        %v1359 = vrot.slane %v1236, 1
        %v1360 = vsel %vm719, %v1357, %v1359
        %v1361 = vrot.slane %v1237, 1
        %v1362 = vrot.slane %v1238, 1
        %v1363 = vsel %vm719, %v1361, %v1362
        %v1364 = vrot.slane %v1239, 1
        %v1365 = vsel %vm719, %v1362, %v1364
        %v1366 = vrot.slane %v1240, 1
        %v1367 = vrot.slane %v1241, 1
        %v1368 = vsel %vm719, %v1366, %v1367
        %v1369 = vrot.slane %v1242, 1
        %v1370 = vsel %vm719, %v1367, %v1369
        %v1403 = vadd.f32 %v1154, %v1293
        %v1404 = vadd.f32 %v1155, %v1295
        %v1405 = vadd.f32 %v1156, %v1298
        %v1406 = vadd.f32 %v1157, %v1300
        %v1407 = vadd.f32 %v1158, %v1303
        %v1408 = vadd.f32 %v1159, %v1305
        %v1409 = vadd.f32 %v1160, %v1308
        %v1410 = vadd.f32 %v1161, %v1310
        %v1411 = vadd.f32 %v1162, %v1313
        %v1412 = vadd.f32 %v1163, %v1315
        %v1413 = vadd.f32 %v1164, %v1318
        %v1414 = vadd.f32 %v1165, %v1320
        %v1415 = vadd.f32 %v1166, %v1323
        %v1416 = vadd.f32 %v1167, %v1325
        %v1417 = vadd.f32 %v1168, %v1328
        %v1418 = vadd.f32 %v1169, %v1330
        %v1419 = vadd.f32 %v1170, %v1333
        %v1420 = vadd.f32 %v1171, %v1335
        %v1421 = vadd.f32 %v1172, %v1338
        %v1422 = vadd.f32 %v1173, %v1340
        %v1423 = vadd.f32 %v1174, %v1343
        %v1424 = vadd.f32 %v1175, %v1345
        %v1425 = vadd.f32 %v1176, %v1348
        %v1426 = vadd.f32 %v1177, %v1350
        %v1427 = vadd.f32 %v1178, %v1353
        %v1428 = vadd.f32 %v1179, %v1355
        %v1429 = vadd.f32 %v1180, %v1358
        %v1430 = vadd.f32 %v1181, %v1360
        %v1431 = vadd.f32 %v1182, %v1363
        %v1432 = vadd.f32 %v1183, %v1365
        %v1433 = vadd.f32 %v1184, %v1368
        %v1434 = vadd.f32 %v1185, %v1370
        %v1435 = vlaneseq
        %v1436 = vshrl.u32 %v1435, 7
        %v1437 = vsub.s32 5, %v1436
        %v1438 = vrot.slane %v173, %v1437
        %v1439 = vmul.f32 %v339, %v1438
        %v1440 = vmul.f32 %v343, %v1438
        %v1441 = vmul.f32 %v547, %v1438
        %v1442 = vmul.f32 %v348, %v1438
        %v1443 = vmul.f32 %v352, %v1438
        %v1444 = vmul.f32 %v552, %v1438
        %v1445 = vmul.f32 %v357, %v1438
        %v1446 = vmul.f32 %v361, %v1438
        %v1447 = vmul.f32 %v557, %v1438
        %v1448 = vmul.f32 %v366, %v1438
        %v1449 = vmul.f32 %v370, %v1438
        %v1450 = vmul.f32 %v562, %v1438
        %v1451 = vmul.f32 %v375, %v1438
        %v1452 = vmul.f32 %v379, %v1438
        %v1453 = vmul.f32 %v567, %v1438
        %v1454 = vmul.f32 %v384, %v1438
        %v1455 = vmul.f32 %v388, %v1438
        %v1456 = vmul.f32 %v572, %v1438
        %v1457 = vmul.f32 %v393, %v1438
        %v1458 = vmul.f32 %v397, %v1438
        %v1459 = vmul.f32 %v577, %v1438
        %v1460 = vmul.f32 %v402, %v1438
        %v1461 = vmul.f32 %v406, %v1438
        %v1462 = vmul.f32 %v582, %v1438
        %v1463 = vmul.f32 %v411, %v1438
        %v1464 = vmul.f32 %v415, %v1438
        %v1465 = vmul.f32 %v587, %v1438
        %v1466 = vmul.f32 %v420, %v1438
        %v1467 = vmul.f32 %v424, %v1438
        %v1468 = vmul.f32 %v592, %v1438
        %v1469 = vmul.f32 %v429, %v1438
        %v1470 = vmul.f32 %v433, %v1438
        %v1471 = vmul.f32 %v597, %v1438
        %v1472 = vmul.f32 %v438, %v1438
        %v1473 = vmul.f32 %v442, %v1438
        %v1474 = vmul.f32 %v602, %v1438
        %v1475 = vmul.f32 %v447, %v1438
        %v1476 = vmul.f32 %v451, %v1438
        %v1477 = vmul.f32 %v607, %v1438
        %v1478 = vmul.f32 %v456, %v1438
        %v1479 = vmul.f32 %v460, %v1438
        %v1480 = vmul.f32 %v612, %v1438
        %v1481 = vmul.f32 %v465, %v1438
        %v1482 = vmul.f32 %v469, %v1438
        %v1483 = vmul.f32 %v617, %v1438
        %v1484 = vmul.f32 %v1112, %v1438
        %v1485 = vmul.f32 %v1116, %v1438
        %v1486 = vmul.f32 %v1189, %v1438
        %v1535 = vrot.slane %v1439, 2
        %v1536 = vrot.slane %v1440, 2
        %v1537 = vsel %vm964, %v1535, %v1536
        %v1538 = vrot.slane %v1441, 2
        %v1539 = vsel %vm964, %v1536, %v1538
        %v1540 = vrot.slane %v1442, 2
        %v1541 = vrot.slane %v1443, 2
        %v1542 = vsel %vm964, %v1540, %v1541
        %v1543 = vrot.slane %v1444, 2
        %v1544 = vsel %vm964, %v1541, %v1543
        %v1545 = vrot.slane %v1445, 2
        %v1546 = vrot.slane %v1446, 2
        %v1547 = vsel %vm964, %v1545, %v1546
        %v1548 = vrot.slane %v1447, 2
        %v1549 = vsel %vm964, %v1546, %v1548
        %v1550 = vrot.slane %v1448, 2
        %v1551 = vrot.slane %v1449, 2
        %v1552 = vsel %vm964, %v1550, %v1551
        %v1553 = vrot.slane %v1450, 2
        %v1554 = vsel %vm964, %v1551, %v1553
        %v1555 = vrot.slane %v1451, 2
        %v1556 = vrot.slane %v1452, 2
        %v1557 = vsel %vm964, %v1555, %v1556
        %v1558 = vrot.slane %v1453, 2
        %v1559 = vsel %vm964, %v1556, %v1558
        %v1560 = vrot.slane %v1454, 2
        %v1561 = vrot.slane %v1455, 2
        %v1562 = vsel %vm964, %v1560, %v1561
        %v1563 = vrot.slane %v1456, 2
        %v1564 = vsel %vm964, %v1561, %v1563
        %v1565 = vrot.slane %v1457, 2
        %v1566 = vrot.slane %v1458, 2
        %v1567 = vsel %vm964, %v1565, %v1566
        %v1568 = vrot.slane %v1459, 2
        %v1569 = vsel %vm964, %v1566, %v1568
        %v1570 = vrot.slane %v1460, 2
        %v1571 = vrot.slane %v1461, 2
        %v1572 = vsel %vm964, %v1570, %v1571
        %v1573 = vrot.slane %v1462, 2
        %v1574 = vsel %vm964, %v1571, %v1573
        %v1575 = vrot.slane %v1463, 2
        %v1576 = vrot.slane %v1464, 2
        %v1577 = vsel %vm964, %v1575, %v1576
        %v1578 = vrot.slane %v1465, 2
        %v1579 = vsel %vm964, %v1576, %v1578
        %v1580 = vrot.slane %v1466, 2
        %v1581 = vrot.slane %v1467, 2
        %v1582 = vsel %vm964, %v1580, %v1581
        %v1583 = vrot.slane %v1468, 2
        %v1584 = vsel %vm964, %v1581, %v1583
        %v1585 = vrot.slane %v1469, 2
        %v1586 = vrot.slane %v1470, 2
        %v1587 = vsel %vm964, %v1585, %v1586
        %v1588 = vrot.slane %v1471, 2
        %v1589 = vsel %vm964, %v1586, %v1588
        %v1590 = vrot.slane %v1472, 2
        %v1591 = vrot.slane %v1473, 2
        %v1592 = vsel %vm964, %v1590, %v1591
        %v1593 = vrot.slane %v1474, 2
        %v1594 = vsel %vm964, %v1591, %v1593
        %v1595 = vrot.slane %v1475, 2
        %v1596 = vrot.slane %v1476, 2
        %v1597 = vsel %vm964, %v1595, %v1596
        %v1598 = vrot.slane %v1477, 2
        %v1599 = vsel %vm964, %v1596, %v1598
        %v1600 = vrot.slane %v1478, 2
        %v1601 = vrot.slane %v1479, 2
        %v1602 = vsel %vm964, %v1600, %v1601
        %v1603 = vrot.slane %v1480, 2
        %v1604 = vsel %vm964, %v1601, %v1603
        %v1605 = vrot.slane %v1481, 2
        %v1606 = vrot.slane %v1482, 2
        %v1607 = vsel %vm964, %v1605, %v1606
        %v1608 = vrot.slane %v1483, 2
        %v1609 = vsel %vm964, %v1606, %v1608
        %v1610 = vrot.slane %v1484, 2
        %v1611 = vrot.slane %v1485, 2
        %v1612 = vsel %vm964, %v1610, %v1611
        %v1613 = vrot.slane %v1486, 2
        %v1614 = vsel %vm964, %v1611, %v1613
        %v1647 = vadd.f32 %v1403, %v1537
        %v1648 = vadd.f32 %v1404, %v1539
        %v1649 = vadd.f32 %v1405, %v1542
        %v1650 = vadd.f32 %v1406, %v1544
        %v1651 = vadd.f32 %v1407, %v1547
        %v1652 = vadd.f32 %v1408, %v1549
        %v1653 = vadd.f32 %v1409, %v1552
        %v1654 = vadd.f32 %v1410, %v1554
        %v1655 = vadd.f32 %v1411, %v1557
        %v1656 = vadd.f32 %v1412, %v1559
        %v1657 = vadd.f32 %v1413, %v1562
        %v1658 = vadd.f32 %v1414, %v1564
        %v1659 = vadd.f32 %v1415, %v1567
        %v1660 = vadd.f32 %v1416, %v1569
        %v1661 = vadd.f32 %v1417, %v1572
        %v1662 = vadd.f32 %v1418, %v1574
        %v1663 = vadd.f32 %v1419, %v1577
        %v1664 = vadd.f32 %v1420, %v1579
        %v1665 = vadd.f32 %v1421, %v1582
        %v1666 = vadd.f32 %v1422, %v1584
        %v1667 = vadd.f32 %v1423, %v1587
        %v1668 = vadd.f32 %v1424, %v1589
        %v1669 = vadd.f32 %v1425, %v1592
        %v1670 = vadd.f32 %v1426, %v1594
        %v1671 = vadd.f32 %v1427, %v1597
        %v1672 = vadd.f32 %v1428, %v1599
        %v1673 = vadd.f32 %v1429, %v1602
        %v1674 = vadd.f32 %v1430, %v1604
        %v1675 = vadd.f32 %v1431, %v1607
        %v1676 = vadd.f32 %v1432, %v1609
        %v1677 = vadd.f32 %v1433, %v1612
        %v1678 = vadd.f32 %v1434, %v1614
        %v1679 = vlaneseq
        %v1680 = vshrl.u32 %v1679, 7
        %v1681 = vsub.s32 6, %v1680
        %v1682 = vrot.slane %v173, %v1681
        %v1683 = vmul.f32 %v348, %v1682
        %v1684 = vmul.f32 %v352, %v1682
        %v1685 = vmul.f32 %v357, %v1682
        %v1686 = vmul.f32 %v361, %v1682
        %v1687 = vmul.f32 %v366, %v1682
        %v1688 = vmul.f32 %v370, %v1682
        %v1689 = vmul.f32 %v375, %v1682
        %v1690 = vmul.f32 %v379, %v1682
        %v1691 = vmul.f32 %v384, %v1682
        %v1692 = vmul.f32 %v388, %v1682
        %v1693 = vmul.f32 %v393, %v1682
        %v1694 = vmul.f32 %v397, %v1682
        %v1695 = vmul.f32 %v402, %v1682
        %v1696 = vmul.f32 %v406, %v1682
        %v1697 = vmul.f32 %v411, %v1682
        %v1698 = vmul.f32 %v415, %v1682
        %v1699 = vmul.f32 %v420, %v1682
        %v1700 = vmul.f32 %v424, %v1682
        %v1701 = vmul.f32 %v429, %v1682
        %v1702 = vmul.f32 %v433, %v1682
        %v1703 = vmul.f32 %v438, %v1682
        %v1704 = vmul.f32 %v442, %v1682
        %v1705 = vmul.f32 %v447, %v1682
        %v1706 = vmul.f32 %v451, %v1682
        %v1707 = vmul.f32 %v456, %v1682
        %v1708 = vmul.f32 %v460, %v1682
        %v1709 = vmul.f32 %v465, %v1682
        %v1710 = vmul.f32 %v469, %v1682
        %v1711 = vmul.f32 %v1112, %v1682
        %v1712 = vmul.f32 %v1116, %v1682
        %v1713 = vmul.f32 %v330, %v1682
        %v1714 = vmul.f32 %v334, %v1682
        %v1715 = vadd.f32 %v1647, %v1683
        %v1716 = vadd.f32 %v1648, %v1684
        %v1717 = vadd.f32 %v1649, %v1685
        %v1718 = vadd.f32 %v1650, %v1686
        %v1719 = vadd.f32 %v1651, %v1687
        %v1720 = vadd.f32 %v1652, %v1688
        %v1721 = vadd.f32 %v1653, %v1689
        %v1722 = vadd.f32 %v1654, %v1690
        %v1723 = vadd.f32 %v1655, %v1691
        %v1724 = vadd.f32 %v1656, %v1692
        %v1725 = vadd.f32 %v1657, %v1693
        %v1726 = vadd.f32 %v1658, %v1694
        %v1727 = vadd.f32 %v1659, %v1695
        %v1728 = vadd.f32 %v1660, %v1696
        %v1729 = vadd.f32 %v1661, %v1697
        %v1730 = vadd.f32 %v1662, %v1698
        %v1731 = vadd.f32 %v1663, %v1699
        %v1732 = vadd.f32 %v1664, %v1700
        %v1733 = vadd.f32 %v1665, %v1701
        %v1734 = vadd.f32 %v1666, %v1702
        %v1735 = vadd.f32 %v1667, %v1703
        %v1736 = vadd.f32 %v1668, %v1704
        %v1737 = vadd.f32 %v1669, %v1705
        %v1738 = vadd.f32 %v1670, %v1706
        %v1739 = vadd.f32 %v1671, %v1707
        %v1740 = vadd.f32 %v1672, %v1708
        %v1741 = vadd.f32 %v1673, %v1709
        %v1742 = vadd.f32 %v1674, %v1710
        %v1743 = vadd.f32 %v1675, %v1711
        %v1744 = vadd.f32 %v1676, %v1712
        %v1745 = vadd.f32 %v1677, %v1713
        %v1746 = vadd.f32 %v1678, %v1714
        %v1747 = vlaneseq
        %v1748 = vshrl.u32 %v1747, 7
        %v1749 = vsub.s32 7, %v1748
        %v1750 = vrot.slane %v173, %v1749
        %v1751 = vmul.f32 %v348, %v1750
        %v1752 = vmul.f32 %v352, %v1750
        %v1753 = vmul.f32 %v552, %v1750
        %v1754 = vmul.f32 %v357, %v1750
        %v1755 = vmul.f32 %v361, %v1750
        %v1756 = vmul.f32 %v557, %v1750
        %v1757 = vmul.f32 %v366, %v1750
        %v1758 = vmul.f32 %v370, %v1750
        %v1759 = vmul.f32 %v562, %v1750
        %v1760 = vmul.f32 %v375, %v1750
        %v1761 = vmul.f32 %v379, %v1750
        %v1762 = vmul.f32 %v567, %v1750
        %v1763 = vmul.f32 %v384, %v1750
        %v1764 = vmul.f32 %v388, %v1750
        %v1765 = vmul.f32 %v572, %v1750
        %v1766 = vmul.f32 %v393, %v1750
        %v1767 = vmul.f32 %v397, %v1750
        %v1768 = vmul.f32 %v577, %v1750
        %v1769 = vmul.f32 %v402, %v1750
        %v1770 = vmul.f32 %v406, %v1750
        %v1771 = vmul.f32 %v582, %v1750
        %v1772 = vmul.f32 %v411, %v1750
        %v1773 = vmul.f32 %v415, %v1750
        %v1774 = vmul.f32 %v587, %v1750
        %v1775 = vmul.f32 %v420, %v1750
        %v1776 = vmul.f32 %v424, %v1750
        %v1777 = vmul.f32 %v592, %v1750
        %v1778 = vmul.f32 %v429, %v1750
        %v1779 = vmul.f32 %v433, %v1750
        %v1780 = vmul.f32 %v597, %v1750
        %v1781 = vmul.f32 %v438, %v1750
        %v1782 = vmul.f32 %v442, %v1750
        %v1783 = vmul.f32 %v602, %v1750
        %v1784 = vmul.f32 %v447, %v1750
        %v1785 = vmul.f32 %v451, %v1750
        %v1786 = vmul.f32 %v607, %v1750
        %v1787 = vmul.f32 %v456, %v1750
        %v1788 = vmul.f32 %v460, %v1750
        %v1789 = vmul.f32 %v612, %v1750
        %v1790 = vmul.f32 %v465, %v1750
        %v1791 = vmul.f32 %v469, %v1750
        %v1792 = vmul.f32 %v617, %v1750
        %v1793 = vmul.f32 %v1112, %v1750
        %v1794 = vmul.f32 %v1116, %v1750
        %v1795 = vmul.f32 %v1189, %v1750
        %v1796 = vmul.f32 %v330, %v1750
        %v1797 = vmul.f32 %v334, %v1750
        %v1798 = vmul.f32 %v542, %v1750
        %v1847 = vrot.slane %v1751, 1
        %v1848 = vrot.slane %v1752, 1
        %v1849 = vsel %vm719, %v1847, %v1848
        %v1850 = vrot.slane %v1753, 1
        %v1851 = vsel %vm719, %v1848, %v1850
        %v1852 = vrot.slane %v1754, 1
        %v1853 = vrot.slane %v1755, 1
        %v1854 = vsel %vm719, %v1852, %v1853
        %v1855 = vrot.slane %v1756, 1
        %v1856 = vsel %vm719, %v1853, %v1855
        %v1857 = vrot.slane %v1757, 1
        %v1858 = vrot.slane %v1758, 1
        %v1859 = vsel %vm719, %v1857, %v1858
        %v1860 = vrot.slane %v1759, 1
        %v1861 = vsel %vm719, %v1858, %v1860
        %v1862 = vrot.slane %v1760, 1
        %v1863 = vrot.slane %v1761, 1
        %v1864 = vsel %vm719, %v1862, %v1863
        %v1865 = vrot.slane %v1762, 1
        %v1866 = vsel %vm719, %v1863, %v1865
        %v1867 = vrot.slane %v1763, 1
        %v1868 = vrot.slane %v1764, 1
        %v1869 = vsel %vm719, %v1867, %v1868
        %v1870 = vrot.slane %v1765, 1
        %v1871 = vsel %vm719, %v1868, %v1870
        %v1872 = vrot.slane %v1766, 1
        %v1873 = vrot.slane %v1767, 1
        %v1874 = vsel %vm719, %v1872, %v1873
        %v1875 = vrot.slane %v1768, 1
        %v1876 = vsel %vm719, %v1873, %v1875
        %v1877 = vrot.slane %v1769, 1
        %v1878 = vrot.slane %v1770, 1
        %v1879 = vsel %vm719, %v1877, %v1878
        %v1880 = vrot.slane %v1771, 1
        %v1881 = vsel %vm719, %v1878, %v1880
        %v1882 = vrot.slane %v1772, 1
        %v1883 = vrot.slane %v1773, 1
        %v1884 = vsel %vm719, %v1882, %v1883
        %v1885 = vrot.slane %v1774, 1
        %v1886 = vsel %vm719, %v1883, %v1885
        %v1887 = vrot.slane %v1775, 1
        %v1888 = vrot.slane %v1776, 1
        %v1889 = vsel %vm719, %v1887, %v1888
        %v1890 = vrot.slane %v1777, 1
        %v1891 = vsel %vm719, %v1888, %v1890
        %v1892 = vrot.slane %v1778, 1
        %v1893 = vrot.slane %v1779, 1
        %v1894 = vsel %vm719, %v1892, %v1893
        %v1895 = vrot.slane %v1780, 1
        %v1896 = vsel %vm719, %v1893, %v1895
        %v1897 = vrot.slane %v1781, 1
        %v1898 = vrot.slane %v1782, 1
        %v1899 = vsel %vm719, %v1897, %v1898
        %v1900 = vrot.slane %v1783, 1
        %v1901 = vsel %vm719, %v1898, %v1900
        %v1902 = vrot.slane %v1784, 1
        %v1903 = vrot.slane %v1785, 1
        %v1904 = vsel %vm719, %v1902, %v1903
        %v1905 = vrot.slane %v1786, 1
        %v1906 = vsel %vm719, %v1903, %v1905
        %v1907 = vrot.slane %v1787, 1
        %v1908 = vrot.slane %v1788, 1
        %v1909 = vsel %vm719, %v1907, %v1908
        %v1910 = vrot.slane %v1789, 1
        %v1911 = vsel %vm719, %v1908, %v1910
        %v1912 = vrot.slane %v1790, 1
        %v1913 = vrot.slane %v1791, 1
        %v1914 = vsel %vm719, %v1912, %v1913
        %v1915 = vrot.slane %v1792, 1
        %v1916 = vsel %vm719, %v1913, %v1915
        %v1917 = vrot.slane %v1793, 1
        %v1918 = vrot.slane %v1794, 1
        %v1919 = vsel %vm719, %v1917, %v1918
        %v1920 = vrot.slane %v1795, 1
        %v1921 = vsel %vm719, %v1918, %v1920
        %v1922 = vrot.slane %v1796, 1
        %v1923 = vrot.slane %v1797, 1
        %v1924 = vsel %vm719, %v1922, %v1923
        %v1925 = vrot.slane %v1798, 1
        %v1926 = vsel %vm719, %v1923, %v1925
        %v1959 = vadd.f32 %v1715, %v1849
        %v1960 = vadd.f32 %v1716, %v1851
        %v1961 = vadd.f32 %v1717, %v1854
        %v1962 = vadd.f32 %v1718, %v1856
        %v1963 = vadd.f32 %v1719, %v1859
        %v1964 = vadd.f32 %v1720, %v1861
        %v1965 = vadd.f32 %v1721, %v1864
        %v1966 = vadd.f32 %v1722, %v1866
        %v1967 = vadd.f32 %v1723, %v1869
        %v1968 = vadd.f32 %v1724, %v1871
        %v1969 = vadd.f32 %v1725, %v1874
        %v1970 = vadd.f32 %v1726, %v1876
        %v1971 = vadd.f32 %v1727, %v1879
        %v1972 = vadd.f32 %v1728, %v1881
        %v1973 = vadd.f32 %v1729, %v1884
        %v1974 = vadd.f32 %v1730, %v1886
        %v1975 = vadd.f32 %v1731, %v1889
        %v1976 = vadd.f32 %v1732, %v1891
        %v1977 = vadd.f32 %v1733, %v1894
        %v1978 = vadd.f32 %v1734, %v1896
        %v1979 = vadd.f32 %v1735, %v1899
        %v1980 = vadd.f32 %v1736, %v1901
        %v1981 = vadd.f32 %v1737, %v1904
        %v1982 = vadd.f32 %v1738, %v1906
        %v1983 = vadd.f32 %v1739, %v1909
        %v1984 = vadd.f32 %v1740, %v1911
        %v1985 = vadd.f32 %v1741, %v1914
        %v1986 = vadd.f32 %v1742, %v1916
        %v1987 = vadd.f32 %v1743, %v1919
        %v1988 = vadd.f32 %v1744, %v1921
        %v1989 = vadd.f32 %v1745, %v1924
        %v1990 = vadd.f32 %v1746, %v1926
        %v1991 = vlaneseq
        %v1992 = vshrl.u32 %v1991, 7
        %v1993 = vsub.s32 0, %v1992
        %v1994 = vrot.slane %v174, %v1993
        %v1995 = vmul.f32 %v348, %v1994
        %v1996 = vmul.f32 %v352, %v1994
        %v1997 = vmul.f32 %v552, %v1994
        %v1998 = vmul.f32 %v357, %v1994
        %v1999 = vmul.f32 %v361, %v1994
        %v2000 = vmul.f32 %v557, %v1994
        %v2001 = vmul.f32 %v366, %v1994
        %v2002 = vmul.f32 %v370, %v1994
        %v2003 = vmul.f32 %v562, %v1994
        %v2004 = vmul.f32 %v375, %v1994
        %v2005 = vmul.f32 %v379, %v1994
        %v2006 = vmul.f32 %v567, %v1994
        %v2007 = vmul.f32 %v384, %v1994
        %v2008 = vmul.f32 %v388, %v1994
        %v2009 = vmul.f32 %v572, %v1994
        %v2010 = vmul.f32 %v393, %v1994
        %v2011 = vmul.f32 %v397, %v1994
        %v2012 = vmul.f32 %v577, %v1994
        %v2013 = vmul.f32 %v402, %v1994
        %v2014 = vmul.f32 %v406, %v1994
        %v2015 = vmul.f32 %v582, %v1994
        %v2016 = vmul.f32 %v411, %v1994
        %v2017 = vmul.f32 %v415, %v1994
        %v2018 = vmul.f32 %v587, %v1994
        %v2019 = vmul.f32 %v420, %v1994
        %v2020 = vmul.f32 %v424, %v1994
        %v2021 = vmul.f32 %v592, %v1994
        %v2022 = vmul.f32 %v429, %v1994
        %v2023 = vmul.f32 %v433, %v1994
        %v2024 = vmul.f32 %v597, %v1994
        %v2025 = vmul.f32 %v438, %v1994
        %v2026 = vmul.f32 %v442, %v1994
        %v2027 = vmul.f32 %v602, %v1994
        %v2028 = vmul.f32 %v447, %v1994
        %v2029 = vmul.f32 %v451, %v1994
        %v2030 = vmul.f32 %v607, %v1994
        %v2031 = vmul.f32 %v456, %v1994
        %v2032 = vmul.f32 %v460, %v1994
        %v2033 = vmul.f32 %v612, %v1994
        %v2034 = vmul.f32 %v465, %v1994
        %v2035 = vmul.f32 %v469, %v1994
        %v2036 = vmul.f32 %v617, %v1994
        %v2037 = vmul.f32 %v1112, %v1994
        %v2038 = vmul.f32 %v1116, %v1994
        %v2039 = vmul.f32 %v1189, %v1994
        %v2040 = vmul.f32 %v330, %v1994
        %v2041 = vmul.f32 %v334, %v1994
        %v2042 = vmul.f32 %v542, %v1994
        %v2091 = vrot.slane %v1995, 2
        %v2092 = vrot.slane %v1996, 2
        %v2093 = vsel %vm964, %v2091, %v2092
        %v2094 = vrot.slane %v1997, 2
        %v2095 = vsel %vm964, %v2092, %v2094
        %v2096 = vrot.slane %v1998, 2
        %v2097 = vrot.slane %v1999, 2
        %v2098 = vsel %vm964, %v2096, %v2097
        %v2099 = vrot.slane %v2000, 2
        %v2100 = vsel %vm964, %v2097, %v2099
        %v2101 = vrot.slane %v2001, 2
        %v2102 = vrot.slane %v2002, 2
        %v2103 = vsel %vm964, %v2101, %v2102
        %v2104 = vrot.slane %v2003, 2
        %v2105 = vsel %vm964, %v2102, %v2104
        %v2106 = vrot.slane %v2004, 2
        %v2107 = vrot.slane %v2005, 2
        %v2108 = vsel %vm964, %v2106, %v2107
        %v2109 = vrot.slane %v2006, 2
        %v2110 = vsel %vm964, %v2107, %v2109
        %v2111 = vrot.slane %v2007, 2
        %v2112 = vrot.slane %v2008, 2
        %v2113 = vsel %vm964, %v2111, %v2112
        %v2114 = vrot.slane %v2009, 2
        %v2115 = vsel %vm964, %v2112, %v2114
        %v2116 = vrot.slane %v2010, 2
        %v2117 = vrot.slane %v2011, 2
        %v2118 = vsel %vm964, %v2116, %v2117
        %v2119 = vrot.slane %v2012, 2
        %v2120 = vsel %vm964, %v2117, %v2119
        %v2121 = vrot.slane %v2013, 2
        %v2122 = vrot.slane %v2014, 2
        %v2123 = vsel %vm964, %v2121, %v2122
        %v2124 = vrot.slane %v2015, 2
        %v2125 = vsel %vm964, %v2122, %v2124
        %v2126 = vrot.slane %v2016, 2
        %v2127 = vrot.slane %v2017, 2
        %v2128 = vsel %vm964, %v2126, %v2127
        %v2129 = vrot.slane %v2018, 2
        %v2130 = vsel %vm964, %v2127, %v2129
        %v2131 = vrot.slane %v2019, 2
        %v2132 = vrot.slane %v2020, 2
        %v2133 = vsel %vm964, %v2131, %v2132
        %v2134 = vrot.slane %v2021, 2
        %v2135 = vsel %vm964, %v2132, %v2134
        %v2136 = vrot.slane %v2022, 2
        %v2137 = vrot.slane %v2023, 2
        %v2138 = vsel %vm964, %v2136, %v2137
        %v2139 = vrot.slane %v2024, 2
        %v2140 = vsel %vm964, %v2137, %v2139
        %v2141 = vrot.slane %v2025, 2
        %v2142 = vrot.slane %v2026, 2
        %v2143 = vsel %vm964, %v2141, %v2142
        %v2144 = vrot.slane %v2027, 2
        %v2145 = vsel %vm964, %v2142, %v2144
        %v2146 = vrot.slane %v2028, 2
        %v2147 = vrot.slane %v2029, 2
        %v2148 = vsel %vm964, %v2146, %v2147
        %v2149 = vrot.slane %v2030, 2
        %v2150 = vsel %vm964, %v2147, %v2149
        %v2151 = vrot.slane %v2031, 2
        %v2152 = vrot.slane %v2032, 2
        %v2153 = vsel %vm964, %v2151, %v2152
        %v2154 = vrot.slane %v2033, 2
        %v2155 = vsel %vm964, %v2152, %v2154
        %v2156 = vrot.slane %v2034, 2
        %v2157 = vrot.slane %v2035, 2
        %v2158 = vsel %vm964, %v2156, %v2157
        %v2159 = vrot.slane %v2036, 2
        %v2160 = vsel %vm964, %v2157, %v2159
        %v2161 = vrot.slane %v2037, 2
        %v2162 = vrot.slane %v2038, 2
        %v2163 = vsel %vm964, %v2161, %v2162
        %v2164 = vrot.slane %v2039, 2
        %v2165 = vsel %vm964, %v2162, %v2164
        %v2166 = vrot.slane %v2040, 2
        %v2167 = vrot.slane %v2041, 2
        %v2168 = vsel %vm964, %v2166, %v2167
        %v2169 = vrot.slane %v2042, 2
        %v2170 = vsel %vm964, %v2167, %v2169
        %v2203 = vadd.f32 %v1959, %v2093
        %v2204 = vadd.f32 %v1960, %v2095
        %v2205 = vadd.f32 %v1961, %v2098
        %v2206 = vadd.f32 %v1962, %v2100
        %v2207 = vadd.f32 %v1963, %v2103
        %v2208 = vadd.f32 %v1964, %v2105
        %v2209 = vadd.f32 %v1965, %v2108
        %v2210 = vadd.f32 %v1966, %v2110
        %v2211 = vadd.f32 %v1967, %v2113
        %v2212 = vadd.f32 %v1968, %v2115
        %v2213 = vadd.f32 %v1969, %v2118
        %v2214 = vadd.f32 %v1970, %v2120
        %v2215 = vadd.f32 %v1971, %v2123
        %v2216 = vadd.f32 %v1972, %v2125
        %v2217 = vadd.f32 %v1973, %v2128
        %v2218 = vadd.f32 %v1974, %v2130
        %v2219 = vadd.f32 %v1975, %v2133
        %v2220 = vadd.f32 %v1976, %v2135
        %v2221 = vadd.f32 %v1977, %v2138
        %v2222 = vadd.f32 %v1978, %v2140
        %v2223 = vadd.f32 %v1979, %v2143
        %v2224 = vadd.f32 %v1980, %v2145
        %v2225 = vadd.f32 %v1981, %v2148
        %v2226 = vadd.f32 %v1982, %v2150
        %v2227 = vadd.f32 %v1983, %v2153
        %v2228 = vadd.f32 %v1984, %v2155
        %v2229 = vadd.f32 %v1985, %v2158
        %v2230 = vadd.f32 %v1986, %v2160
        %v2231 = vadd.f32 %v1987, %v2163
        %v2232 = vadd.f32 %v1988, %v2165
        %v2233 = vadd.f32 %v1989, %v2168
        %v2234 = vadd.f32 %v1990, %v2170
        %v2235 = vlaneseq
        %v2236 = vshrl.u32 %v2235, 7
        %v2237 = vsub.s32 0, %v2236
        %v2238 = vrot.slane %v175, %v2237
        %v2239 = vadd.f32 %v2203, %v2238
        %v2240 = vadd.f32 %v2204, %v2238
        %v2241 = vadd.f32 %v2205, %v2238
        %v2242 = vadd.f32 %v2206, %v2238
        %v2243 = vadd.f32 %v2207, %v2238
        %v2244 = vadd.f32 %v2208, %v2238
        %v2245 = vadd.f32 %v2209, %v2238
        %v2246 = vadd.f32 %v2210, %v2238
        %v2247 = vadd.f32 %v2211, %v2238
        %v2248 = vadd.f32 %v2212, %v2238
        %v2249 = vadd.f32 %v2213, %v2238
        %v2250 = vadd.f32 %v2214, %v2238
        %v2251 = vadd.f32 %v2215, %v2238
        %v2252 = vadd.f32 %v2216, %v2238
        %v2253 = vadd.f32 %v2217, %v2238
        %v2254 = vadd.f32 %v2218, %v2238
        %v2255 = vadd.f32 %v2219, %v2238
        %v2256 = vadd.f32 %v2220, %v2238
        %v2257 = vadd.f32 %v2221, %v2238
        %v2258 = vadd.f32 %v2222, %v2238
        %v2259 = vadd.f32 %v2223, %v2238
        %v2260 = vadd.f32 %v2224, %v2238
        %v2261 = vadd.f32 %v2225, %v2238
        %v2262 = vadd.f32 %v2226, %v2238
        %v2263 = vadd.f32 %v2227, %v2238
        %v2264 = vadd.f32 %v2228, %v2238
        %v2265 = vadd.f32 %v2229, %v2238
        %v2266 = vadd.f32 %v2230, %v2238
        %v2267 = vadd.f32 %v2231, %v2238
        %v2268 = vadd.f32 %v2232, %v2238
        %v2269 = vadd.f32 %v2233, %v2238
        %v2270 = vadd.f32 %v2234, %v2238
        %v2271 = vmax.f32 %v2239, 0.0
        %v2272 = vmax.f32 %v2240, 0.0
        %v2273 = vmax.f32 %v2241, 0.0
        %v2274 = vmax.f32 %v2242, 0.0
        %v2275 = vmax.f32 %v2243, 0.0
        %v2276 = vmax.f32 %v2244, 0.0
        %v2277 = vmax.f32 %v2245, 0.0
        %v2278 = vmax.f32 %v2246, 0.0
        %v2279 = vmax.f32 %v2247, 0.0
        %v2280 = vmax.f32 %v2248, 0.0
        %v2281 = vmax.f32 %v2249, 0.0
        %v2282 = vmax.f32 %v2250, 0.0
        %v2283 = vmax.f32 %v2251, 0.0
        %v2284 = vmax.f32 %v2252, 0.0
        %v2285 = vmax.f32 %v2253, 0.0
        %v2286 = vmax.f32 %v2254, 0.0
        %v2287 = vmax.f32 %v2255, 0.0
        %v2288 = vmax.f32 %v2256, 0.0
        %v2289 = vmax.f32 %v2257, 0.0
        %v2290 = vmax.f32 %v2258, 0.0
        %v2291 = vmax.f32 %v2259, 0.0
        %v2292 = vmax.f32 %v2260, 0.0
        %v2293 = vmax.f32 %v2261, 0.0
        %v2294 = vmax.f32 %v2262, 0.0
        %v2295 = vmax.f32 %v2263, 0.0
        %v2296 = vmax.f32 %v2264, 0.0
        %v2297 = vmax.f32 %v2265, 0.0
        %v2298 = vmax.f32 %v2266, 0.0
        %v2299 = vmax.f32 %v2267, 0.0
        %v2300 = vmax.f32 %v2268, 0.0
        %v2301 = vmax.f32 %v2269, 0.0
        %v2302 = vmax.f32 %v2270, 0.0
        %v2303 = vld [vmem:[%s1 + $0x18] sm:$0xff]
        %v2304 = vld [vmem:[%s1 + $0x20] sm:$0xff]
        %v2305 = vld [vmem:[%s1 + $0x28] sm:$0xff]
        %v2306 = vld [vmem:[%s1 + $0x30] sm:$0xff]
        %v2307 = vld [vmem:[%s1 + $0x38] sm:$0xf]
        %v2308 = vld [vmem:[%s1 + $0x40] sm:$0x1]
        %v2341 = vrot.slane %v2271, 7
        %v2342 = vrot.slane %v2272, 7
        %v2343 = vsel %vm209, %v2341, %v2342
        %v2344 = vrot.slane %v2273, 7
        %v2345 = vrot.slane %v2274, 7
        %v2346 = vsel %vm209, %v2344, %v2345
        %v2347 = vrot.slane %v2275, 7
        %v2348 = vrot.slane %v2276, 7
        %v2349 = vsel %vm209, %v2347, %v2348
        %v2350 = vrot.slane %v2277, 7
        %v2351 = vrot.slane %v2278, 7
        %v2352 = vsel %vm209, %v2350, %v2351
        %v2353 = vrot.slane %v2279, 7
        %v2354 = vrot.slane %v2280, 7
        %v2355 = vsel %vm209, %v2353, %v2354
        %v2356 = vrot.slane %v2281, 7
        %v2357 = vrot.slane %v2282, 7
        %v2358 = vsel %vm209, %v2356, %v2357
        %v2359 = vrot.slane %v2283, 7
        %v2360 = vrot.slane %v2284, 7
        %v2361 = vsel %vm209, %v2359, %v2360
        %v2362 = vrot.slane %v2285, 7
        %v2363 = vrot.slane %v2286, 7
        %v2364 = vsel %vm209, %v2362, %v2363
        %v2365 = vrot.slane %v2287, 7
        %v2366 = vrot.slane %v2288, 7
        %v2367 = vsel %vm209, %v2365, %v2366
        %v2368 = vrot.slane %v2289, 7
        %v2369 = vrot.slane %v2290, 7
        %v2370 = vsel %vm209, %v2368, %v2369
        %v2371 = vrot.slane %v2291, 7
        %v2372 = vrot.slane %v2292, 7
        %v2373 = vsel %vm209, %v2371, %v2372
        %v2374 = vrot.slane %v2293, 7
        %v2375 = vrot.slane %v2294, 7
        %v2376 = vsel %vm209, %v2374, %v2375
        %v2377 = vrot.slane %v2295, 7
        %v2378 = vrot.slane %v2296, 7
        %v2379 = vsel %vm209, %v2377, %v2378
        %v2380 = vrot.slane %v2297, 7
        %v2381 = vrot.slane %v2298, 7
        %v2382 = vsel %vm209, %v2380, %v2381
        %v2383 = vrot.slane %v2299, 7
        %v2384 = vrot.slane %v2300, 7
        %v2385 = vsel %vm209, %v2383, %v2384
        %v2386 = vrot.slane %v2301, 7
        %v2387 = vrot.slane %v2302, 7
        %v2388 = vsel %vm209, %v2386, %v2387
        %v2437 = vsel %vm209, 0.0, %v2341
        %v2438 = vsel %vm209, 0.0, %v2344
        %v2439 = vsel %vm209, 0.0, %v2347
        %v2440 = vsel %vm209, 0.0, %v2350
        %v2441 = vsel %vm209, 0.0, %v2353
        %v2442 = vsel %vm209, 0.0, %v2356
        %v2443 = vsel %vm209, 0.0, %v2359
        %v2444 = vsel %vm209, 0.0, %v2362
        %v2445 = vsel %vm209, 0.0, %v2365
        %v2446 = vsel %vm209, 0.0, %v2368
        %v2447 = vsel %vm209, 0.0, %v2371
        %v2448 = vsel %vm209, 0.0, %v2374
        %v2449 = vsel %vm209, 0.0, %v2377
        %v2450 = vsel %vm209, 0.0, %v2380
        %v2451 = vsel %vm209, 0.0, %v2383
        %v2452 = vsel %vm209, 0.0, %v2386
        %v2453 = vsel %vm209, %v2342, 0.0
        %v2454 = vsel %vm209, %v2345, 0.0
        %v2455 = vsel %vm209, %v2348, 0.0
        %v2456 = vsel %vm209, %v2351, 0.0
        %v2457 = vsel %vm209, %v2354, 0.0
        %v2458 = vsel %vm209, %v2357, 0.0
        %v2459 = vsel %vm209, %v2360, 0.0
        %v2460 = vsel %vm209, %v2363, 0.0
        %v2461 = vsel %vm209, %v2366, 0.0
        %v2462 = vsel %vm209, %v2369, 0.0
        %v2463 = vsel %vm209, %v2372, 0.0
        %v2464 = vsel %vm209, %v2375, 0.0
        %v2465 = vsel %vm209, %v2378, 0.0
        %v2466 = vsel %vm209, %v2381, 0.0
        %v2467 = vsel %vm209, %v2384, 0.0
        %v2468 = vsel %vm209, %v2387, 0.0
        %v2499 = vrot.slane %v293, 1
        %v2500 = vrot.slane %v211, 1
        %v2501 = vsel %vm719, %v2499, %v2500
        %v2502 = vrot.slane %v310, 1
        %v2503 = vsel %vm719, %v2500, %v2502
        %v2504 = vrot.slane %v2437, 1
        %v2505 = vrot.slane %v2343, 1
        %v2506 = vsel %vm719, %v2504, %v2505
        %v2507 = vrot.slane %v2453, 1
        %v2508 = vsel %vm719, %v2505, %v2507
        %v2509 = vrot.slane %v2438, 1
        %v2510 = vrot.slane %v2346, 1
        %v2511 = vsel %vm719, %v2509, %v2510
        %v2512 = vrot.slane %v2454, 1
        %v2513 = vsel %vm719, %v2510, %v2512
        %v2514 = vrot.slane %v2439, 1
        %v2515 = vrot.slane %v2349, 1
        %v2516 = vsel %vm719, %v2514, %v2515
        %v2517 = vrot.slane %v2455, 1
        %v2518 = vsel %vm719, %v2515, %v2517
        %v2519 = vrot.slane %v2440, 1
        %v2520 = vrot.slane %v2352, 1
        %v2521 = vsel %vm719, %v2519, %v2520
        %v2522 = vrot.slane %v2456, 1
        %v2523 = vsel %vm719, %v2520, %v2522
        %v2524 = vrot.slane %v2441, 1
        %v2525 = vrot.slane %v2355, 1
        %v2526 = vsel %vm719, %v2524, %v2525
        %v2527 = vrot.slane %v2457, 1
        %v2528 = vsel %vm719, %v2525, %v2527
        %v2529 = vrot.slane %v2442, 1
        %v2530 = vrot.slane %v2358, 1
        %v2531 = vsel %vm719, %v2529, %v2530
        %v2532 = vrot.slane %v2458, 1
        %v2533 = vsel %vm719, %v2530, %v2532
        %v2534 = vrot.slane %v2443, 1
        %v2535 = vrot.slane %v2361, 1
        %v2536 = vsel %vm719, %v2534, %v2535
        %v2537 = vrot.slane %v2459, 1
        %v2538 = vsel %vm719, %v2535, %v2537
        %v2539 = vrot.slane %v2444, 1
        %v2540 = vrot.slane %v2364, 1
        %v2541 = vsel %vm719, %v2539, %v2540
        %v2542 = vrot.slane %v2460, 1
        %v2543 = vsel %vm719, %v2540, %v2542
        %v2544 = vrot.slane %v2445, 1
        %v2545 = vrot.slane %v2367, 1
        %v2546 = vsel %vm719, %v2544, %v2545
        %v2547 = vrot.slane %v2461, 1
        %v2548 = vsel %vm719, %v2545, %v2547
        %v2549 = vrot.slane %v2446, 1
        %v2550 = vrot.slane %v2370, 1
        %v2551 = vsel %vm719, %v2549, %v2550
        %v2552 = vrot.slane %v2462, 1
        %v2553 = vsel %vm719, %v2550, %v2552
        %v2554 = vrot.slane %v2447, 1
        %v2555 = vrot.slane %v2373, 1
        %v2556 = vsel %vm719, %v2554, %v2555
        %v2557 = vrot.slane %v2463, 1
        %v2558 = vsel %vm719, %v2555, %v2557
        %v2559 = vrot.slane %v2448, 1
        %v2560 = vrot.slane %v2376, 1
        %v2561 = vsel %vm719, %v2559, %v2560
        %v2562 = vrot.slane %v2464, 1
        %v2563 = vsel %vm719, %v2560, %v2562
        %v2564 = vrot.slane %v2449, 1
        %v2565 = vrot.slane %v2379, 1
        %v2566 = vsel %vm719, %v2564, %v2565
        %v2567 = vrot.slane %v2465, 1
        %v2568 = vsel %vm719, %v2565, %v2567
        %v2569 = vrot.slane %v2450, 1
        %v2570 = vrot.slane %v2382, 1
        %v2571 = vsel %vm719, %v2569, %v2570
        %v2572 = vrot.slane %v2466, 1
        %v2573 = vsel %vm719, %v2570, %v2572
        %v2574 = vrot.slane %v2451, 1
        %v2575 = vrot.slane %v2385, 1
        %v2576 = vsel %vm719, %v2574, %v2575
        %v2577 = vrot.slane %v2467, 1
        %v2578 = vsel %vm719, %v2575, %v2577
        %2579 = vrot.lane.b32.xlu0 %v2501, 4
        %v2580 = vpop.permute.xlu0 %2579
        %2581 = vrot.lane.b32.xlu0 %v2503, 4
        %v2582 = vpop.permute.xlu0 %2581
        %2583 = vrot.lane.b32.xlu0 %v2506, 4
        %v2584 = vpop.permute.xlu0 %2583
        %2585 = vrot.lane.b32.xlu0 %v2508, 4
        %v2586 = vpop.permute.xlu0 %2585
        %2587 = vrot.lane.b32.xlu0 %v2511, 4
        %v2588 = vpop.permute.xlu0 %2587
        %2589 = vrot.lane.b32.xlu0 %v2513, 4
        %v2590 = vpop.permute.xlu0 %2589
        %2591 = vrot.lane.b32.xlu0 %v2516, 4
        %v2592 = vpop.permute.xlu0 %2591
        %2593 = vrot.lane.b32.xlu0 %v2518, 4
        %v2594 = vpop.permute.xlu0 %2593
        %2595 = vrot.lane.b32.xlu0 %v2521, 4
        %v2596 = vpop.permute.xlu0 %2595
        %2597 = vrot.lane.b32.xlu0 %v2523, 4
        %v2598 = vpop.permute.xlu0 %2597
        %2599 = vrot.lane.b32.xlu0 %v2526, 4
        %v2600 = vpop.permute.xlu0 %2599
        %2601 = vrot.lane.b32.xlu0 %v2528, 4
        %v2602 = vpop.permute.xlu0 %2601
        %2603 = vrot.lane.b32.xlu0 %v2531, 4
        %v2604 = vpop.permute.xlu0 %2603
        %2605 = vrot.lane.b32.xlu0 %v2533, 4
        %v2606 = vpop.permute.xlu0 %2605
        %2607 = vrot.lane.b32.xlu0 %v2536, 4
        %v2608 = vpop.permute.xlu0 %2607
        %2609 = vrot.lane.b32.xlu0 %v2538, 4
        %v2610 = vpop.permute.xlu0 %2609
        %2611 = vrot.lane.b32.xlu0 %v2541, 4
        %v2612 = vpop.permute.xlu0 %2611
        %2613 = vrot.lane.b32.xlu0 %v2543, 4
        %v2614 = vpop.permute.xlu0 %2613
        %2615 = vrot.lane.b32.xlu0 %v2546, 4
        %v2616 = vpop.permute.xlu0 %2615
        %2617 = vrot.lane.b32.xlu0 %v2548, 4
        %v2618 = vpop.permute.xlu0 %2617
        %2619 = vrot.lane.b32.xlu0 %v2551, 4
        %v2620 = vpop.permute.xlu0 %2619
        %2621 = vrot.lane.b32.xlu0 %v2553, 4
        %v2622 = vpop.permute.xlu0 %2621
        %2623 = vrot.lane.b32.xlu0 %v2556, 4
        %v2624 = vpop.permute.xlu0 %2623
        %2625 = vrot.lane.b32.xlu0 %v2558, 4
        %v2626 = vpop.permute.xlu0 %2625
        %2627 = vrot.lane.b32.xlu0 %v2561, 4
        %v2628 = vpop.permute.xlu0 %2627
        %2629 = vrot.lane.b32.xlu0 %v2563, 4
        %v2630 = vpop.permute.xlu0 %2629
        %2631 = vrot.lane.b32.xlu0 %v2566, 4
        %v2632 = vpop.permute.xlu0 %2631
        %2633 = vrot.lane.b32.xlu0 %v2568, 4
        %v2634 = vpop.permute.xlu0 %2633
        %2635 = vrot.lane.b32.xlu0 %v2571, 4
        %v2636 = vpop.permute.xlu0 %2635
        %2637 = vrot.lane.b32.xlu0 %v2573, 4
        %v2638 = vpop.permute.xlu0 %2637
        %2639 = vrot.lane.b32.xlu0 %v2576, 4
        %v2640 = vpop.permute.xlu0 %2639
        %2641 = vrot.lane.b32.xlu0 %v2578, 4
        %v2642 = vpop.permute.xlu0 %2641
        %v2675 = vrot.slane %v293, 2
        %v2676 = vrot.slane %v211, 2
        %v2677 = vsel %vm964, %v2675, %v2676
        %v2678 = vrot.slane %v310, 2
        %v2679 = vsel %vm964, %v2676, %v2678
        %v2680 = vrot.slane %v2437, 2
        %v2681 = vrot.slane %v2343, 2
        %v2682 = vsel %vm964, %v2680, %v2681
        %v2683 = vrot.slane %v2453, 2
        %v2684 = vsel %vm964, %v2681, %v2683
        %v2685 = vrot.slane %v2438, 2
        %v2686 = vrot.slane %v2346, 2
        %v2687 = vsel %vm964, %v2685, %v2686
        %v2688 = vrot.slane %v2454, 2
        %v2689 = vsel %vm964, %v2686, %v2688
        %v2690 = vrot.slane %v2439, 2
        %v2691 = vrot.slane %v2349, 2
        %v2692 = vsel %vm964, %v2690, %v2691
        %v2693 = vrot.slane %v2455, 2
        %v2694 = vsel %vm964, %v2691, %v2693
        %v2695 = vrot.slane %v2440, 2
        %v2696 = vrot.slane %v2352, 2
        %v2697 = vsel %vm964, %v2695, %v2696
        %v2698 = vrot.slane %v2456, 2
        %v2699 = vsel %vm964, %v2696, %v2698
        %v2700 = vrot.slane %v2441, 2
        %v2701 = vrot.slane %v2355, 2
        %v2702 = vsel %vm964, %v2700, %v2701
        %v2703 = vrot.slane %v2457, 2
        %v2704 = vsel %vm964, %v2701, %v2703
        %v2705 = vrot.slane %v2442, 2
        %v2706 = vrot.slane %v2358, 2
        %v2707 = vsel %vm964, %v2705, %v2706
        %v2708 = vrot.slane %v2458, 2
        %v2709 = vsel %vm964, %v2706, %v2708
        %v2710 = vrot.slane %v2443, 2
        %v2711 = vrot.slane %v2361, 2
        %v2712 = vsel %vm964, %v2710, %v2711
        %v2713 = vrot.slane %v2459, 2
        %v2714 = vsel %vm964, %v2711, %v2713
        %v2715 = vrot.slane %v2444, 2
        %v2716 = vrot.slane %v2364, 2
        %v2717 = vsel %vm964, %v2715, %v2716
        %v2718 = vrot.slane %v2460, 2
        %v2719 = vsel %vm964, %v2716, %v2718
        %v2720 = vrot.slane %v2445, 2
        %v2721 = vrot.slane %v2367, 2
        %v2722 = vsel %vm964, %v2720, %v2721
        %v2723 = vrot.slane %v2461, 2
        %v2724 = vsel %vm964, %v2721, %v2723
        %v2725 = vrot.slane %v2446, 2
        %v2726 = vrot.slane %v2370, 2
        %v2727 = vsel %vm964, %v2725, %v2726
        %v2728 = vrot.slane %v2462, 2
        %v2729 = vsel %vm964, %v2726, %v2728
        %v2730 = vrot.slane %v2447, 2
        %v2731 = vrot.slane %v2373, 2
        %v2732 = vsel %vm964, %v2730, %v2731
        %v2733 = vrot.slane %v2463, 2
        %v2734 = vsel %vm964, %v2731, %v2733
        %v2735 = vrot.slane %v2448, 2
        %v2736 = vrot.slane %v2376, 2
        %v2737 = vsel %vm964, %v2735, %v2736
        %v2738 = vrot.slane %v2464, 2
        %v2739 = vsel %vm964, %v2736, %v2738
        %v2740 = vrot.slane %v2449, 2
        %v2741 = vrot.slane %v2379, 2
        %v2742 = vsel %vm964, %v2740, %v2741
        %v2743 = vrot.slane %v2465, 2
        %v2744 = vsel %vm964, %v2741, %v2743
        %v2745 = vrot.slane %v2450, 2
        %v2746 = vrot.slane %v2382, 2
        %v2747 = vsel %vm964, %v2745, %v2746
        %v2748 = vrot.slane %v2466, 2
        %v2749 = vsel %vm964, %v2746, %v2748
        %v2750 = vrot.slane %v2451, 2
        %v2751 = vrot.slane %v2385, 2
        %v2752 = vsel %vm964, %v2750, %v2751
        %v2753 = vrot.slane %v2467, 2
        %v2754 = vsel %vm964, %v2751, %v2753
        %2755 = vrot.lane.b32.xlu0 %v2677, 8
        %v2756 = vpop.permute.xlu0 %2755
        %2757 = vrot.lane.b32.xlu0 %v2679, 8
        %v2758 = vpop.permute.xlu0 %2757
        %2759 = vrot.lane.b32.xlu0 %v2682, 8
        %v2760 = vpop.permute.xlu0 %2759
        %2761 = vrot.lane.b32.xlu0 %v2684, 8
        %v2762 = vpop.permute.xlu0 %2761
        %2763 = vrot.lane.b32.xlu0 %v2687, 8
        %v2764 = vpop.permute.xlu0 %2763
        %2765 = vrot.lane.b32.xlu0 %v2689, 8
        %v2766 = vpop.permute.xlu0 %2765
        %2767 = vrot.lane.b32.xlu0 %v2692, 8
        %v2768 = vpop.permute.xlu0 %2767
        %2769 = vrot.lane.b32.xlu0 %v2694, 8
        %v2770 = vpop.permute.xlu0 %2769
        %2771 = vrot.lane.b32.xlu0 %v2697, 8
        %v2772 = vpop.permute.xlu0 %2771
        %2773 = vrot.lane.b32.xlu0 %v2699, 8
        %v2774 = vpop.permute.xlu0 %2773
        %2775 = vrot.lane.b32.xlu0 %v2702, 8
        %v2776 = vpop.permute.xlu0 %2775
        %2777 = vrot.lane.b32.xlu0 %v2704, 8
        %v2778 = vpop.permute.xlu0 %2777
        %2779 = vrot.lane.b32.xlu0 %v2707, 8
        %v2780 = vpop.permute.xlu0 %2779
        %2781 = vrot.lane.b32.xlu0 %v2709, 8
        %v2782 = vpop.permute.xlu0 %2781
        %2783 = vrot.lane.b32.xlu0 %v2712, 8
        %v2784 = vpop.permute.xlu0 %2783
        %2785 = vrot.lane.b32.xlu0 %v2714, 8
        %v2786 = vpop.permute.xlu0 %2785
        %2787 = vrot.lane.b32.xlu0 %v2717, 8
        %v2788 = vpop.permute.xlu0 %2787
        %2789 = vrot.lane.b32.xlu0 %v2719, 8
        %v2790 = vpop.permute.xlu0 %2789
        %2791 = vrot.lane.b32.xlu0 %v2722, 8
        %v2792 = vpop.permute.xlu0 %2791
        %2793 = vrot.lane.b32.xlu0 %v2724, 8
        %v2794 = vpop.permute.xlu0 %2793
        %2795 = vrot.lane.b32.xlu0 %v2727, 8
        %v2796 = vpop.permute.xlu0 %2795
        %2797 = vrot.lane.b32.xlu0 %v2729, 8
        %v2798 = vpop.permute.xlu0 %2797
        %2799 = vrot.lane.b32.xlu0 %v2732, 8
        %v2800 = vpop.permute.xlu0 %2799
        %2801 = vrot.lane.b32.xlu0 %v2734, 8
        %v2802 = vpop.permute.xlu0 %2801
        %2803 = vrot.lane.b32.xlu0 %v2737, 8
        %v2804 = vpop.permute.xlu0 %2803
        %2805 = vrot.lane.b32.xlu0 %v2739, 8
        %v2806 = vpop.permute.xlu0 %2805
        %2807 = vrot.lane.b32.xlu0 %v2742, 8
        %v2808 = vpop.permute.xlu0 %2807
        %2809 = vrot.lane.b32.xlu0 %v2744, 8
        %v2810 = vpop.permute.xlu0 %2809
        %2811 = vrot.lane.b32.xlu0 %v2747, 8
        %v2812 = vpop.permute.xlu0 %2811
        %2813 = vrot.lane.b32.xlu0 %v2749, 8
        %v2814 = vpop.permute.xlu0 %2813
        %2815 = vrot.lane.b32.xlu0 %v2752, 8
        %v2816 = vpop.permute.xlu0 %2815
        %2817 = vrot.lane.b32.xlu0 %v2754, 8
        %v2818 = vpop.permute.xlu0 %2817
        %2852 = vrot.lane.b32.xlu0 %v2437, 12
        %v2853 = vpop.permute.xlu0 %2852
        %2854 = vrot.lane.b32.xlu0 %v2343, 12
        %v2855 = vpop.permute.xlu0 %2854
        %2856 = vrot.lane.b32.xlu0 %v2438, 12
        %v2857 = vpop.permute.xlu0 %2856
        %2858 = vrot.lane.b32.xlu0 %v2346, 12
        %v2859 = vpop.permute.xlu0 %2858
        %2860 = vrot.lane.b32.xlu0 %v2439, 12
        %v2861 = vpop.permute.xlu0 %2860
        %2862 = vrot.lane.b32.xlu0 %v2349, 12
        %v2863 = vpop.permute.xlu0 %2862
        %2864 = vrot.lane.b32.xlu0 %v2440, 12
        %v2865 = vpop.permute.xlu0 %2864
        %2866 = vrot.lane.b32.xlu0 %v2352, 12
        %v2867 = vpop.permute.xlu0 %2866
        %2868 = vrot.lane.b32.xlu0 %v2441, 12
        %v2869 = vpop.permute.xlu0 %2868
        %2870 = vrot.lane.b32.xlu0 %v2355, 12
        %v2871 = vpop.permute.xlu0 %2870
        %2872 = vrot.lane.b32.xlu0 %v2442, 12
        %v2873 = vpop.permute.xlu0 %2872
        %2874 = vrot.lane.b32.xlu0 %v2358, 12
        %v2875 = vpop.permute.xlu0 %2874
        %2876 = vrot.lane.b32.xlu0 %v2443, 12
        %v2877 = vpop.permute.xlu0 %2876
        %2878 = vrot.lane.b32.xlu0 %v2361, 12
        %v2879 = vpop.permute.xlu0 %2878
        %2880 = vrot.lane.b32.xlu0 %v2444, 12
        %v2881 = vpop.permute.xlu0 %2880
        %2882 = vrot.lane.b32.xlu0 %v2364, 12
        %v2883 = vpop.permute.xlu0 %2882
        %2884 = vrot.lane.b32.xlu0 %v2445, 12
        %v2885 = vpop.permute.xlu0 %2884
        %2886 = vrot.lane.b32.xlu0 %v2367, 12
        %v2887 = vpop.permute.xlu0 %2886
        %2888 = vrot.lane.b32.xlu0 %v2446, 12
        %v2889 = vpop.permute.xlu0 %2888
        %2890 = vrot.lane.b32.xlu0 %v2370, 12
        %v2891 = vpop.permute.xlu0 %2890
        %2892 = vrot.lane.b32.xlu0 %v2447, 12
        %v2893 = vpop.permute.xlu0 %2892
        %2894 = vrot.lane.b32.xlu0 %v2373, 12
        %v2895 = vpop.permute.xlu0 %2894
        %2896 = vrot.lane.b32.xlu0 %v2448, 12
        %v2897 = vpop.permute.xlu0 %2896
        %2898 = vrot.lane.b32.xlu0 %v2376, 12
        %v2899 = vpop.permute.xlu0 %2898
        %2900 = vrot.lane.b32.xlu0 %v2449, 12
        %v2901 = vpop.permute.xlu0 %2900
        %2902 = vrot.lane.b32.xlu0 %v2379, 12
        %v2903 = vpop.permute.xlu0 %2902
        %2904 = vrot.lane.b32.xlu0 %v2450, 12
        %v2905 = vpop.permute.xlu0 %2904
        %2906 = vrot.lane.b32.xlu0 %v2382, 12
        %v2907 = vpop.permute.xlu0 %2906
        %2908 = vrot.lane.b32.xlu0 %v2451, 12
        %v2909 = vpop.permute.xlu0 %2908
        %2910 = vrot.lane.b32.xlu0 %v2385, 12
        %v2911 = vpop.permute.xlu0 %2910
        %2912 = vrot.lane.b32.xlu0 %v2452, 12
        %v2913 = vpop.permute.xlu0 %2912
        %2914 = vrot.lane.b32.xlu0 %v2388, 12
        %v2915 = vpop.permute.xlu0 %2914
        %v2949 = vrot.slane %v2452, 1
        %v2950 = vrot.slane %v2388, 1
        %v2951 = vsel %vm719, %v2949, %v2950
        %v2952 = vrot.slane %v2468, 1
        %v2953 = vsel %vm719, %v2950, %v2952
        %2954 = vrot.lane.b32.xlu0 %v2506, 16
        %v2955 = vpop.permute.xlu0 %2954
        %2956 = vrot.lane.b32.xlu0 %v2508, 16
        %v2957 = vpop.permute.xlu0 %2956
        %2958 = vrot.lane.b32.xlu0 %v2511, 16
        %v2959 = vpop.permute.xlu0 %2958
        %2960 = vrot.lane.b32.xlu0 %v2513, 16
        %v2961 = vpop.permute.xlu0 %2960
        %2962 = vrot.lane.b32.xlu0 %v2516, 16
        %v2963 = vpop.permute.xlu0 %2962
        %2964 = vrot.lane.b32.xlu0 %v2518, 16
        %v2965 = vpop.permute.xlu0 %2964
        %2966 = vrot.lane.b32.xlu0 %v2521, 16
        %v2967 = vpop.permute.xlu0 %2966
        %2968 = vrot.lane.b32.xlu0 %v2523, 16
        %v2969 = vpop.permute.xlu0 %2968
        %2970 = vrot.lane.b32.xlu0 %v2526, 16
        %v2971 = vpop.permute.xlu0 %2970
        %2972 = vrot.lane.b32.xlu0 %v2528, 16
        %v2973 = vpop.permute.xlu0 %2972
        %2974 = vrot.lane.b32.xlu0 %v2531, 16
        %v2975 = vpop.permute.xlu0 %2974
        %2976 = vrot.lane.b32.xlu0 %v2533, 16
        %v2977 = vpop.permute.xlu0 %2976
        %2978 = vrot.lane.b32.xlu0 %v2536, 16
        %v2979 = vpop.permute.xlu0 %2978
        %2980 = vrot.lane.b32.xlu0 %v2538, 16
        %v2981 = vpop.permute.xlu0 %2980
        %2982 = vrot.lane.b32.xlu0 %v2541, 16
        %v2983 = vpop.permute.xlu0 %2982
        %2984 = vrot.lane.b32.xlu0 %v2543, 16
        %v2985 = vpop.permute.xlu0 %2984
        %2986 = vrot.lane.b32.xlu0 %v2546, 16
        %v2987 = vpop.permute.xlu0 %2986
        %2988 = vrot.lane.b32.xlu0 %v2548, 16
        %v2989 = vpop.permute.xlu0 %2988
        %2990 = vrot.lane.b32.xlu0 %v2551, 16
        %v2991 = vpop.permute.xlu0 %2990
        %2992 = vrot.lane.b32.xlu0 %v2553, 16
        %v2993 = vpop.permute.xlu0 %2992
        %2994 = vrot.lane.b32.xlu0 %v2556, 16
        %v2995 = vpop.permute.xlu0 %2994
        %2996 = vrot.lane.b32.xlu0 %v2558, 16
        %v2997 = vpop.permute.xlu0 %2996
        %2998 = vrot.lane.b32.xlu0 %v2561, 16
        %v2999 = vpop.permute.xlu0 %2998
        %3000 = vrot.lane.b32.xlu0 %v2563, 16
        %v3001 = vpop.permute.xlu0 %3000
        %3002 = vrot.lane.b32.xlu0 %v2566, 16
        %v3003 = vpop.permute.xlu0 %3002
        %3004 = vrot.lane.b32.xlu0 %v2568, 16
        %v3005 = vpop.permute.xlu0 %3004
        %3006 = vrot.lane.b32.xlu0 %v2571, 16
        %v3007 = vpop.permute.xlu0 %3006
        %3008 = vrot.lane.b32.xlu0 %v2573, 16
        %v3009 = vpop.permute.xlu0 %3008
        %3010 = vrot.lane.b32.xlu0 %v2576, 16
        %v3011 = vpop.permute.xlu0 %3010
        %3012 = vrot.lane.b32.xlu0 %v2578, 16
        %v3013 = vpop.permute.xlu0 %3012
        %3014 = vrot.lane.b32.xlu0 %v2951, 16
        %v3015 = vpop.permute.xlu0 %3014
        %3016 = vrot.lane.b32.xlu0 %v2953, 16
        %v3017 = vpop.permute.xlu0 %3016
        %v3050 = vrot.slane %v2452, 2
        %v3051 = vrot.slane %v2388, 2
        %v3052 = vsel %vm964, %v3050, %v3051
        %v3053 = vrot.slane %v2468, 2
        %v3054 = vsel %vm964, %v3051, %v3053
        %3055 = vrot.lane.b32.xlu0 %v2682, 20
        %v3056 = vpop.permute.xlu0 %3055
        %3057 = vrot.lane.b32.xlu0 %v2684, 20
        %v3058 = vpop.permute.xlu0 %3057
        %3059 = vrot.lane.b32.xlu0 %v2687, 20
        %v3060 = vpop.permute.xlu0 %3059
        %3061 = vrot.lane.b32.xlu0 %v2689, 20
        %v3062 = vpop.permute.xlu0 %3061
        %3063 = vrot.lane.b32.xlu0 %v2692, 20
        %v3064 = vpop.permute.xlu0 %3063
        %3065 = vrot.lane.b32.xlu0 %v2694, 20
        %v3066 = vpop.permute.xlu0 %3065
        %3067 = vrot.lane.b32.xlu0 %v2697, 20
        %v3068 = vpop.permute.xlu0 %3067
        %3069 = vrot.lane.b32.xlu0 %v2699, 20
        %v3070 = vpop.permute.xlu0 %3069
        %3071 = vrot.lane.b32.xlu0 %v2702, 20
        %v3072 = vpop.permute.xlu0 %3071
        %3073 = vrot.lane.b32.xlu0 %v2704, 20
        %v3074 = vpop.permute.xlu0 %3073
        %3075 = vrot.lane.b32.xlu0 %v2707, 20
        %v3076 = vpop.permute.xlu0 %3075
        %3077 = vrot.lane.b32.xlu0 %v2709, 20
        %v3078 = vpop.permute.xlu0 %3077
        %3079 = vrot.lane.b32.xlu0 %v2712, 20
        %v3080 = vpop.permute.xlu0 %3079
        %3081 = vrot.lane.b32.xlu0 %v2714, 20
        %v3082 = vpop.permute.xlu0 %3081
        %3083 = vrot.lane.b32.xlu0 %v2717, 20
        %v3084 = vpop.permute.xlu0 %3083
        %3085 = vrot.lane.b32.xlu0 %v2719, 20
        %v3086 = vpop.permute.xlu0 %3085
        %3087 = vrot.lane.b32.xlu0 %v2722, 20
        %v3088 = vpop.permute.xlu0 %3087
        %3089 = vrot.lane.b32.xlu0 %v2724, 20
        %v3090 = vpop.permute.xlu0 %3089
        %3091 = vrot.lane.b32.xlu0 %v2727, 20
        %v3092 = vpop.permute.xlu0 %3091
        %3093 = vrot.lane.b32.xlu0 %v2729, 20
        %v3094 = vpop.permute.xlu0 %3093
        %3095 = vrot.lane.b32.xlu0 %v2732, 20
        %v3096 = vpop.permute.xlu0 %3095
        %3097 = vrot.lane.b32.xlu0 %v2734, 20
        %v3098 = vpop.permute.xlu0 %3097
        %3099 = vrot.lane.b32.xlu0 %v2737, 20
        %v3100 = vpop.permute.xlu0 %3099
        %3101 = vrot.lane.b32.xlu0 %v2739, 20
        %v3102 = vpop.permute.xlu0 %3101
        %3103 = vrot.lane.b32.xlu0 %v2742, 20
        %v3104 = vpop.permute.xlu0 %3103
        %3105 = vrot.lane.b32.xlu0 %v2744, 20
        %v3106 = vpop.permute.xlu0 %3105
        %3107 = vrot.lane.b32.xlu0 %v2747, 20
        %v3108 = vpop.permute.xlu0 %3107
        %3109 = vrot.lane.b32.xlu0 %v2749, 20
        %v3110 = vpop.permute.xlu0 %3109
        %3111 = vrot.lane.b32.xlu0 %v2752, 20
        %v3112 = vpop.permute.xlu0 %3111
        %3113 = vrot.lane.b32.xlu0 %v2754, 20
        %v3114 = vpop.permute.xlu0 %3113
        %3115 = vrot.lane.b32.xlu0 %v3052, 20
        %v3116 = vpop.permute.xlu0 %3115
        %3117 = vrot.lane.b32.xlu0 %v3054, 20
        %v3118 = vpop.permute.xlu0 %3117
        %3151 = vrot.lane.b32.xlu0 %v2438, 24
        %v3152 = vpop.permute.xlu0 %3151
        %3153 = vrot.lane.b32.xlu0 %v2346, 24
        %v3154 = vpop.permute.xlu0 %3153
        %3155 = vrot.lane.b32.xlu0 %v2439, 24
        %v3156 = vpop.permute.xlu0 %3155
        %3157 = vrot.lane.b32.xlu0 %v2349, 24
        %v3158 = vpop.permute.xlu0 %3157
        %3159 = vrot.lane.b32.xlu0 %v2440, 24
        %v3160 = vpop.permute.xlu0 %3159
        %3161 = vrot.lane.b32.xlu0 %v2352, 24
        %v3162 = vpop.permute.xlu0 %3161
        %3163 = vrot.lane.b32.xlu0 %v2441, 24
        %v3164 = vpop.permute.xlu0 %3163
        %3165 = vrot.lane.b32.xlu0 %v2355, 24
        %v3166 = vpop.permute.xlu0 %3165
        %3167 = vrot.lane.b32.xlu0 %v2442, 24
        %v3168 = vpop.permute.xlu0 %3167
        %3169 = vrot.lane.b32.xlu0 %v2358, 24
        %v3170 = vpop.permute.xlu0 %3169
        %3171 = vrot.lane.b32.xlu0 %v2443, 24
        %v3172 = vpop.permute.xlu0 %3171
        %3173 = vrot.lane.b32.xlu0 %v2361, 24
        %v3174 = vpop.permute.xlu0 %3173
        %3175 = vrot.lane.b32.xlu0 %v2444, 24
        %v3176 = vpop.permute.xlu0 %3175
        %3177 = vrot.lane.b32.xlu0 %v2364, 24
        %v3178 = vpop.permute.xlu0 %3177
        %3179 = vrot.lane.b32.xlu0 %v2445, 24
        %v3180 = vpop.permute.xlu0 %3179
        %3181 = vrot.lane.b32.xlu0 %v2367, 24
        %v3182 = vpop.permute.xlu0 %3181
        %3183 = vrot.lane.b32.xlu0 %v2446, 24
        %v3184 = vpop.permute.xlu0 %3183
        %3185 = vrot.lane.b32.xlu0 %v2370, 24
        %v3186 = vpop.permute.xlu0 %3185
        %3187 = vrot.lane.b32.xlu0 %v2447, 24
        %v3188 = vpop.permute.xlu0 %3187
        %3189 = vrot.lane.b32.xlu0 %v2373, 24
        %v3190 = vpop.permute.xlu0 %3189
        %3191 = vrot.lane.b32.xlu0 %v2448, 24
        %v3192 = vpop.permute.xlu0 %3191
        %3193 = vrot.lane.b32.xlu0 %v2376, 24
        %v3194 = vpop.permute.xlu0 %3193
        %3195 = vrot.lane.b32.xlu0 %v2449, 24
        %v3196 = vpop.permute.xlu0 %3195
        %3197 = vrot.lane.b32.xlu0 %v2379, 24
        %v3198 = vpop.permute.xlu0 %3197
        %3199 = vrot.lane.b32.xlu0 %v2450, 24
        %v3200 = vpop.permute.xlu0 %3199
        %3201 = vrot.lane.b32.xlu0 %v2382, 24
        %v3202 = vpop.permute.xlu0 %3201
        %3203 = vrot.lane.b32.xlu0 %v2451, 24
        %v3204 = vpop.permute.xlu0 %3203
        %3205 = vrot.lane.b32.xlu0 %v2385, 24
        %v3206 = vpop.permute.xlu0 %3205
        %3207 = vrot.lane.b32.xlu0 %v2452, 24
        %v3208 = vpop.permute.xlu0 %3207
        %3209 = vrot.lane.b32.xlu0 %v2388, 24
        %v3210 = vpop.permute.xlu0 %3209
        %3211 = vrot.lane.b32.xlu0 %v293, 24
        %v3212 = vpop.permute.xlu0 %3211
        %3213 = vrot.lane.b32.xlu0 %v211, 24
        %v3214 = vpop.permute.xlu0 %3213
        %3247 = vrot.lane.b32.xlu0 %v2511, 28
        %v3248 = vpop.permute.xlu0 %3247
        %3249 = vrot.lane.b32.xlu0 %v2513, 28
        %v3250 = vpop.permute.xlu0 %3249
        %3251 = vrot.lane.b32.xlu0 %v2516, 28
        %v3252 = vpop.permute.xlu0 %3251
        %3253 = vrot.lane.b32.xlu0 %v2518, 28
        %v3254 = vpop.permute.xlu0 %3253
        %3255 = vrot.lane.b32.xlu0 %v2521, 28
        %v3256 = vpop.permute.xlu0 %3255
        %3257 = vrot.lane.b32.xlu0 %v2523, 28
        %v3258 = vpop.permute.xlu0 %3257
        %3259 = vrot.lane.b32.xlu0 %v2526, 28
        %v3260 = vpop.permute.xlu0 %3259
        %3261 = vrot.lane.b32.xlu0 %v2528, 28
        %v3262 = vpop.permute.xlu0 %3261
        %3263 = vrot.lane.b32.xlu0 %v2531, 28
        %v3264 = vpop.permute.xlu0 %3263
        %3265 = vrot.lane.b32.xlu0 %v2533, 28
        %v3266 = vpop.permute.xlu0 %3265
        %3267 = vrot.lane.b32.xlu0 %v2536, 28
        %v3268 = vpop.permute.xlu0 %3267
        %3269 = vrot.lane.b32.xlu0 %v2538, 28
        %v3270 = vpop.permute.xlu0 %3269
        %3271 = vrot.lane.b32.xlu0 %v2541, 28
        %v3272 = vpop.permute.xlu0 %3271
        %3273 = vrot.lane.b32.xlu0 %v2543, 28
        %v3274 = vpop.permute.xlu0 %3273
        %3275 = vrot.lane.b32.xlu0 %v2546, 28
        %v3276 = vpop.permute.xlu0 %3275
        %3277 = vrot.lane.b32.xlu0 %v2548, 28
        %v3278 = vpop.permute.xlu0 %3277
        %3279 = vrot.lane.b32.xlu0 %v2551, 28
        %v3280 = vpop.permute.xlu0 %3279
        %3281 = vrot.lane.b32.xlu0 %v2553, 28
        %v3282 = vpop.permute.xlu0 %3281
        %3283 = vrot.lane.b32.xlu0 %v2556, 28
        %v3284 = vpop.permute.xlu0 %3283
        %3285 = vrot.lane.b32.xlu0 %v2558, 28
        %v3286 = vpop.permute.xlu0 %3285
        %3287 = vrot.lane.b32.xlu0 %v2561, 28
        %v3288 = vpop.permute.xlu0 %3287
        %3289 = vrot.lane.b32.xlu0 %v2563, 28
        %v3290 = vpop.permute.xlu0 %3289
        %3291 = vrot.lane.b32.xlu0 %v2566, 28
        %v3292 = vpop.permute.xlu0 %3291
        %3293 = vrot.lane.b32.xlu0 %v2568, 28
        %v3294 = vpop.permute.xlu0 %3293
        %3295 = vrot.lane.b32.xlu0 %v2571, 28
        %v3296 = vpop.permute.xlu0 %3295
        %3297 = vrot.lane.b32.xlu0 %v2573, 28
        %v3298 = vpop.permute.xlu0 %3297
        %3299 = vrot.lane.b32.xlu0 %v2576, 28
        %v3300 = vpop.permute.xlu0 %3299
        %3301 = vrot.lane.b32.xlu0 %v2578, 28
        %v3302 = vpop.permute.xlu0 %3301
        %3303 = vrot.lane.b32.xlu0 %v2951, 28
        %v3304 = vpop.permute.xlu0 %3303
        %3305 = vrot.lane.b32.xlu0 %v2953, 28
        %v3306 = vpop.permute.xlu0 %3305
        %3307 = vrot.lane.b32.xlu0 %v2501, 28
        %v3308 = vpop.permute.xlu0 %3307
        %3309 = vrot.lane.b32.xlu0 %v2503, 28
        %v3310 = vpop.permute.xlu0 %3309
        %3343 = vrot.lane.b32.xlu0 %v2687, 32
        %v3344 = vpop.permute.xlu0 %3343
        %3345 = vrot.lane.b32.xlu0 %v2689, 32
        %v3346 = vpop.permute.xlu0 %3345
        %3347 = vrot.lane.b32.xlu0 %v2692, 32
        %v3348 = vpop.permute.xlu0 %3347
        %3349 = vrot.lane.b32.xlu0 %v2694, 32
        %v3350 = vpop.permute.xlu0 %3349
        %3351 = vrot.lane.b32.xlu0 %v2697, 32
        %v3352 = vpop.permute.xlu0 %3351
        %3353 = vrot.lane.b32.xlu0 %v2699, 32
        %v3354 = vpop.permute.xlu0 %3353
        %3355 = vrot.lane.b32.xlu0 %v2702, 32
        %v3356 = vpop.permute.xlu0 %3355
        %3357 = vrot.lane.b32.xlu0 %v2704, 32
        %v3358 = vpop.permute.xlu0 %3357
        %3359 = vrot.lane.b32.xlu0 %v2707, 32
        %v3360 = vpop.permute.xlu0 %3359
        %3361 = vrot.lane.b32.xlu0 %v2709, 32
        %v3362 = vpop.permute.xlu0 %3361
        %3363 = vrot.lane.b32.xlu0 %v2712, 32
        %v3364 = vpop.permute.xlu0 %3363
        %3365 = vrot.lane.b32.xlu0 %v2714, 32
        %v3366 = vpop.permute.xlu0 %3365
        %3367 = vrot.lane.b32.xlu0 %v2717, 32
        %v3368 = vpop.permute.xlu0 %3367
        %3369 = vrot.lane.b32.xlu0 %v2719, 32
        %v3370 = vpop.permute.xlu0 %3369
        %3371 = vrot.lane.b32.xlu0 %v2722, 32
        %v3372 = vpop.permute.xlu0 %3371
        %3373 = vrot.lane.b32.xlu0 %v2724, 32
        %v3374 = vpop.permute.xlu0 %3373
        %3375 = vrot.lane.b32.xlu0 %v2727, 32
        %v3376 = vpop.permute.xlu0 %3375
        %3377 = vrot.lane.b32.xlu0 %v2729, 32
        %v3378 = vpop.permute.xlu0 %3377
        %3379 = vrot.lane.b32.xlu0 %v2732, 32
        %v3380 = vpop.permute.xlu0 %3379
        %3381 = vrot.lane.b32.xlu0 %v2734, 32
        %v3382 = vpop.permute.xlu0 %3381
        %3383 = vrot.lane.b32.xlu0 %v2737, 32
        %v3384 = vpop.permute.xlu0 %3383
        %3385 = vrot.lane.b32.xlu0 %v2739, 32
        %v3386 = vpop.permute.xlu0 %3385
        %3387 = vrot.lane.b32.xlu0 %v2742, 32
        %v3388 = vpop.permute.xlu0 %3387
        %3389 = vrot.lane.b32.xlu0 %v2744, 32
        %v3390 = vpop.permute.xlu0 %3389
        %3391 = vrot.lane.b32.xlu0 %v2747, 32
        %v3392 = vpop.permute.xlu0 %3391
        %3393 = vrot.lane.b32.xlu0 %v2749, 32
        %v3394 = vpop.permute.xlu0 %3393
        %3395 = vrot.lane.b32.xlu0 %v2752, 32
        %v3396 = vpop.permute.xlu0 %3395
        %3397 = vrot.lane.b32.xlu0 %v2754, 32
        %v3398 = vpop.permute.xlu0 %3397
        %3399 = vrot.lane.b32.xlu0 %v3052, 32
        %v3400 = vpop.permute.xlu0 %3399
        %3401 = vrot.lane.b32.xlu0 %v3054, 32
        %v3402 = vpop.permute.xlu0 %3401
        %3403 = vrot.lane.b32.xlu0 %v2677, 32
        %v3404 = vpop.permute.xlu0 %3403
        %3405 = vrot.lane.b32.xlu0 %v2679, 32
        %v3406 = vpop.permute.xlu0 %3405
        %vm3439 = vcmask 31744
        %v3440 = vsel %vm3439, %v293, %v2580
        %v3441 = vsel %vm3439, %v211, %v2582
        %v3442 = vsel %vm3439, %v2437, %v2584
        %v3443 = vsel %vm3439, %v2343, %v2586
        %v3444 = vsel %vm3439, %v2438, %v2588
        %v3445 = vsel %vm3439, %v2346, %v2590
        %v3446 = vsel %vm3439, %v2439, %v2592
        %v3447 = vsel %vm3439, %v2349, %v2594
        %v3448 = vsel %vm3439, %v2440, %v2596
        %v3449 = vsel %vm3439, %v2352, %v2598
        %v3450 = vsel %vm3439, %v2441, %v2600
        %v3451 = vsel %vm3439, %v2355, %v2602
        %v3452 = vsel %vm3439, %v2442, %v2604
        %v3453 = vsel %vm3439, %v2358, %v2606
        %v3454 = vsel %vm3439, %v2443, %v2608
        %v3455 = vsel %vm3439, %v2361, %v2610
        %v3456 = vsel %vm3439, %v2444, %v2612
        %v3457 = vsel %vm3439, %v2364, %v2614
        %v3458 = vsel %vm3439, %v2445, %v2616
        %v3459 = vsel %vm3439, %v2367, %v2618
        %v3460 = vsel %vm3439, %v2446, %v2620
        %v3461 = vsel %vm3439, %v2370, %v2622
        %v3462 = vsel %vm3439, %v2447, %v2624
        %v3463 = vsel %vm3439, %v2373, %v2626
        %v3464 = vsel %vm3439, %v2448, %v2628
        %v3465 = vsel %vm3439, %v2376, %v2630
        %v3466 = vsel %vm3439, %v2449, %v2632
        %v3467 = vsel %vm3439, %v2379, %v2634
        %v3468 = vsel %vm3439, %v2450, %v2636
        %v3469 = vsel %vm3439, %v2382, %v2638
        %v3470 = vsel %vm3439, %v2451, %v2640
        %v3471 = vsel %vm3439, %v2385, %v2642
        %vm3472 = vcmask 64512
        %v3473 = vsel %vm3472, %v3440, %v2756
        %v3474 = vsel %vm3472, %v3441, %v2758
        %v3475 = vsel %vm3472, %v3442, %v2760
        %v3476 = vsel %vm3472, %v3443, %v2762
        %v3477 = vsel %vm3472, %v3444, %v2764
        %v3478 = vsel %vm3472, %v3445, %v2766
        %v3479 = vsel %vm3472, %v3446, %v2768
        %v3480 = vsel %vm3472, %v3447, %v2770
        %v3481 = vsel %vm3472, %v3448, %v2772
        %v3482 = vsel %vm3472, %v3449, %v2774
        %v3483 = vsel %vm3472, %v3450, %v2776
        %v3484 = vsel %vm3472, %v3451, %v2778
        %v3485 = vsel %vm3472, %v3452, %v2780
        %v3486 = vsel %vm3472, %v3453, %v2782
        %v3487 = vsel %vm3472, %v3454, %v2784
        %v3488 = vsel %vm3472, %v3455, %v2786
        %v3489 = vsel %vm3472, %v3456, %v2788
        %v3490 = vsel %vm3472, %v3457, %v2790
        %v3491 = vsel %vm3472, %v3458, %v2792
        %v3492 = vsel %vm3472, %v3459, %v2794
        %v3493 = vsel %vm3472, %v3460, %v2796
        %v3494 = vsel %vm3472, %v3461, %v2798
        %v3495 = vsel %vm3472, %v3462, %v2800
        %v3496 = vsel %vm3472, %v3463, %v2802
        %v3497 = vsel %vm3472, %v3464, %v2804
        %v3498 = vsel %vm3472, %v3465, %v2806
        %v3499 = vsel %vm3472, %v3466, %v2808
        %v3500 = vsel %vm3472, %v3467, %v2810
        %v3501 = vsel %vm3472, %v3468, %v2812
        %v3502 = vsel %vm3472, %v3469, %v2814
        %v3503 = vsel %vm3472, %v3470, %v2816
        %v3504 = vsel %vm3472, %v3471, %v2818
        %vm3505 = vcmask 97280
        %v3506 = vsel %vm3505, %v3473, %v2853
        %v3507 = vsel %vm3505, %v3474, %v2855
        %v3508 = vsel %vm3505, %v3475, %v2857
        %v3509 = vsel %vm3505, %v3476, %v2859
        %v3510 = vsel %vm3505, %v3477, %v2861
        %v3511 = vsel %vm3505, %v3478, %v2863
        %v3512 = vsel %vm3505, %v3479, %v2865
        %v3513 = vsel %vm3505, %v3480, %v2867
        %v3514 = vsel %vm3505, %v3481, %v2869
        %v3515 = vsel %vm3505, %v3482, %v2871
        %v3516 = vsel %vm3505, %v3483, %v2873
        %v3517 = vsel %vm3505, %v3484, %v2875
        %v3518 = vsel %vm3505, %v3485, %v2877
        %v3519 = vsel %vm3505, %v3486, %v2879
        %v3520 = vsel %vm3505, %v3487, %v2881
        %v3521 = vsel %vm3505, %v3488, %v2883
        %v3522 = vsel %vm3505, %v3489, %v2885
        %v3523 = vsel %vm3505, %v3490, %v2887
        %v3524 = vsel %vm3505, %v3491, %v2889
        %v3525 = vsel %vm3505, %v3492, %v2891
        %v3526 = vsel %vm3505, %v3493, %v2893
        %v3527 = vsel %vm3505, %v3494, %v2895
        %v3528 = vsel %vm3505, %v3495, %v2897
        %v3529 = vsel %vm3505, %v3496, %v2899
        %v3530 = vsel %vm3505, %v3497, %v2901
        %v3531 = vsel %vm3505, %v3498, %v2903
        %v3532 = vsel %vm3505, %v3499, %v2905
        %v3533 = vsel %vm3505, %v3500, %v2907
        %v3534 = vsel %vm3505, %v3501, %v2909
        %v3535 = vsel %vm3505, %v3502, %v2911
        %v3536 = vsel %vm3505, %v3503, %v2913
        %v3537 = vsel %vm3505, %v3504, %v2915
        %vm3538 = vcmask 130048
        %v3539 = vsel %vm3538, %v3506, %v2955
        %v3540 = vsel %vm3538, %v3507, %v2957
        %v3541 = vsel %vm3538, %v3508, %v2959
        %v3542 = vsel %vm3538, %v3509, %v2961
        %v3543 = vsel %vm3538, %v3510, %v2963
        %v3544 = vsel %vm3538, %v3511, %v2965
        %v3545 = vsel %vm3538, %v3512, %v2967
        %v3546 = vsel %vm3538, %v3513, %v2969
        %v3547 = vsel %vm3538, %v3514, %v2971
        %v3548 = vsel %vm3538, %v3515, %v2973
        %v3549 = vsel %vm3538, %v3516, %v2975
        %v3550 = vsel %vm3538, %v3517, %v2977
        %v3551 = vsel %vm3538, %v3518, %v2979
        %v3552 = vsel %vm3538, %v3519, %v2981
        %v3553 = vsel %vm3538, %v3520, %v2983
        %v3554 = vsel %vm3538, %v3521, %v2985
        %v3555 = vsel %vm3538, %v3522, %v2987
        %v3556 = vsel %vm3538, %v3523, %v2989
        %v3557 = vsel %vm3538, %v3524, %v2991
        %v3558 = vsel %vm3538, %v3525, %v2993
        %v3559 = vsel %vm3538, %v3526, %v2995
        %v3560 = vsel %vm3538, %v3527, %v2997
        %v3561 = vsel %vm3538, %v3528, %v2999
        %v3562 = vsel %vm3538, %v3529, %v3001
        %v3563 = vsel %vm3538, %v3530, %v3003
        %v3564 = vsel %vm3538, %v3531, %v3005
        %v3565 = vsel %vm3538, %v3532, %v3007
        %v3566 = vsel %vm3538, %v3533, %v3009
        %v3567 = vsel %vm3538, %v3534, %v3011
        %v3568 = vsel %vm3538, %v3535, %v3013
        %v3569 = vsel %vm3538, %v3536, %v3015
        %v3570 = vsel %vm3538, %v3537, %v3017
        %vm3571 = vcmask 162816
        %v3572 = vsel %vm3571, %v3539, %v3056
        %v3573 = vsel %vm3571, %v3540, %v3058
        %v3574 = vsel %vm3571, %v3541, %v3060
        %v3575 = vsel %vm3571, %v3542, %v3062
        %v3576 = vsel %vm3571, %v3543, %v3064
        %v3577 = vsel %vm3571, %v3544, %v3066
        %v3578 = vsel %vm3571, %v3545, %v3068
        %v3579 = vsel %vm3571, %v3546, %v3070
        %v3580 = vsel %vm3571, %v3547, %v3072
        %v3581 = vsel %vm3571, %v3548, %v3074
        %v3582 = vsel %vm3571, %v3549, %v3076
        %v3583 = vsel %vm3571, %v3550, %v3078
        %v3584 = vsel %vm3571, %v3551, %v3080
        %v3585 = vsel %vm3571, %v3552, %v3082
        %v3586 = vsel %vm3571, %v3553, %v3084
        %v3587 = vsel %vm3571, %v3554, %v3086
        %v3588 = vsel %vm3571, %v3555, %v3088
        %v3589 = vsel %vm3571, %v3556, %v3090
        %v3590 = vsel %vm3571, %v3557, %v3092
        %v3591 = vsel %vm3571, %v3558, %v3094
        %v3592 = vsel %vm3571, %v3559, %v3096
        %v3593 = vsel %vm3571, %v3560, %v3098
        %v3594 = vsel %vm3571, %v3561, %v3100
        %v3595 = vsel %vm3571, %v3562, %v3102
        %v3596 = vsel %vm3571, %v3563, %v3104
        %v3597 = vsel %vm3571, %v3564, %v3106
        %v3598 = vsel %vm3571, %v3565, %v3108
        %v3599 = vsel %vm3571, %v3566, %v3110
        %v3600 = vsel %vm3571, %v3567, %v3112
        %v3601 = vsel %vm3571, %v3568, %v3114
        %v3602 = vsel %vm3571, %v3569, %v3116
        %v3603 = vsel %vm3571, %v3570, %v3118
        %vm3604 = vcmask 195584
        %v3605 = vsel %vm3604, %v3572, %v3152
        %v3606 = vsel %vm3604, %v3573, %v3154
        %v3607 = vsel %vm3604, %v3574, %v3156
        %v3608 = vsel %vm3604, %v3575, %v3158
        %v3609 = vsel %vm3604, %v3576, %v3160
        %v3610 = vsel %vm3604, %v3577, %v3162
        %v3611 = vsel %vm3604, %v3578, %v3164
        %v3612 = vsel %vm3604, %v3579, %v3166
        %v3613 = vsel %vm3604, %v3580, %v3168
        %v3614 = vsel %vm3604, %v3581, %v3170
        %v3615 = vsel %vm3604, %v3582, %v3172
        %v3616 = vsel %vm3604, %v3583, %v3174
        %v3617 = vsel %vm3604, %v3584, %v3176
        %v3618 = vsel %vm3604, %v3585, %v3178
        %v3619 = vsel %vm3604, %v3586, %v3180
        %v3620 = vsel %vm3604, %v3587, %v3182
        %v3621 = vsel %vm3604, %v3588, %v3184
        %v3622 = vsel %vm3604, %v3589, %v3186
        %v3623 = vsel %vm3604, %v3590, %v3188
        %v3624 = vsel %vm3604, %v3591, %v3190
        %v3625 = vsel %vm3604, %v3592, %v3192
        %v3626 = vsel %vm3604, %v3593, %v3194
        %v3627 = vsel %vm3604, %v3594, %v3196
        %v3628 = vsel %vm3604, %v3595, %v3198
        %v3629 = vsel %vm3604, %v3596, %v3200
        %v3630 = vsel %vm3604, %v3597, %v3202
        %v3631 = vsel %vm3604, %v3598, %v3204
        %v3632 = vsel %vm3604, %v3599, %v3206
        %v3633 = vsel %vm3604, %v3600, %v3208
        %v3634 = vsel %vm3604, %v3601, %v3210
        %v3635 = vsel %vm3604, %v3602, %v3212
        %v3636 = vsel %vm3604, %v3603, %v3214
        %vm3637 = vcmask 228352
        %v3638 = vsel %vm3637, %v3605, %v3248
        %v3639 = vsel %vm3637, %v3606, %v3250
        %v3640 = vsel %vm3637, %v3607, %v3252
        %v3641 = vsel %vm3637, %v3608, %v3254
        %v3642 = vsel %vm3637, %v3609, %v3256
        %v3643 = vsel %vm3637, %v3610, %v3258
        %v3644 = vsel %vm3637, %v3611, %v3260
        %v3645 = vsel %vm3637, %v3612, %v3262
        %v3646 = vsel %vm3637, %v3613, %v3264
        %v3647 = vsel %vm3637, %v3614, %v3266
        %v3648 = vsel %vm3637, %v3615, %v3268
        %v3649 = vsel %vm3637, %v3616, %v3270
        %v3650 = vsel %vm3637, %v3617, %v3272
        %v3651 = vsel %vm3637, %v3618, %v3274
        %v3652 = vsel %vm3637, %v3619, %v3276
        %v3653 = vsel %vm3637, %v3620, %v3278
        %v3654 = vsel %vm3637, %v3621, %v3280
        %v3655 = vsel %vm3637, %v3622, %v3282
        %v3656 = vsel %vm3637, %v3623, %v3284
        %v3657 = vsel %vm3637, %v3624, %v3286
        %v3658 = vsel %vm3637, %v3625, %v3288
        %v3659 = vsel %vm3637, %v3626, %v3290
        %v3660 = vsel %vm3637, %v3627, %v3292
        %v3661 = vsel %vm3637, %v3628, %v3294
        %v3662 = vsel %vm3637, %v3629, %v3296
        %v3663 = vsel %vm3637, %v3630, %v3298
        %v3664 = vsel %vm3637, %v3631, %v3300
        %v3665 = vsel %vm3637, %v3632, %v3302
        %v3666 = vsel %vm3637, %v3633, %v3304
        %v3667 = vsel %vm3637, %v3634, %v3306
        %v3668 = vsel %vm3637, %v3635, %v3308
        %v3669 = vsel %vm3637, %v3636, %v3310
        %vm3670 = vcmask 261120
        %v3671 = vsel %vm3670, %v3638, %v3344
        %v3672 = vsel %vm3670, %v3639, %v3346
        %v3673 = vsel %vm3670, %v3640, %v3348
        %v3674 = vsel %vm3670, %v3641, %v3350
        %v3675 = vsel %vm3670, %v3642, %v3352
        %v3676 = vsel %vm3670, %v3643, %v3354
        %v3677 = vsel %vm3670, %v3644, %v3356
        %v3678 = vsel %vm3670, %v3645, %v3358
        %v3679 = vsel %vm3670, %v3646, %v3360
        %v3680 = vsel %vm3670, %v3647, %v3362
        %v3681 = vsel %vm3670, %v3648, %v3364
        %v3682 = vsel %vm3670, %v3649, %v3366
        %v3683 = vsel %vm3670, %v3650, %v3368
        %v3684 = vsel %vm3670, %v3651, %v3370
        %v3685 = vsel %vm3670, %v3652, %v3372
        %v3686 = vsel %vm3670, %v3653, %v3374
        %v3687 = vsel %vm3670, %v3654, %v3376
        %v3688 = vsel %vm3670, %v3655, %v3378
        %v3689 = vsel %vm3670, %v3656, %v3380
        %v3690 = vsel %vm3670, %v3657, %v3382
        %v3691 = vsel %vm3670, %v3658, %v3384
        %v3692 = vsel %vm3670, %v3659, %v3386
        %v3693 = vsel %vm3670, %v3660, %v3388
        %v3694 = vsel %vm3670, %v3661, %v3390
        %v3695 = vsel %vm3670, %v3662, %v3392
        %v3696 = vsel %vm3670, %v3663, %v3394
        %v3697 = vsel %vm3670, %v3664, %v3396
        %v3698 = vsel %vm3670, %v3665, %v3398
        %v3699 = vsel %vm3670, %v3666, %v3400
        %v3700 = vsel %vm3670, %v3667, %v3402
        %v3701 = vsel %vm3670, %v3668, %v3404
        %v3702 = vsel %vm3670, %v3669, %v3406
        %v3703 = vlaneseq
        %v3704 = vshrl.u32 %v3703, 7
        %v3705 = vsub.s32 0, %v3704
        %v3706 = vrot.slane %v2308, %v3705
        %vm3707 = vcmask 293888
        %v3709 = vsel %vm3707, %v3671, 0
        %v3712 = vsel %vm3707, %v3672, 0
        %v3715 = vsel %vm3707, %v3673, 0
        %v3718 = vsel %vm3707, %v3674, 0
        %v3721 = vsel %vm3707, %v3675, 0
        %v3724 = vsel %vm3707, %v3676, 0
        %v3727 = vsel %vm3707, %v3677, 0
        %v3730 = vsel %vm3707, %v3678, 0
        %v3733 = vsel %vm3707, %v3679, 0
        %v3736 = vsel %vm3707, %v3680, 0
        %v3739 = vsel %vm3707, %v3681, 0
        %v3742 = vsel %vm3707, %v3682, 0
        %v3745 = vsel %vm3707, %v3683, 0
        %v3748 = vsel %vm3707, %v3684, 0
        %v3751 = vsel %vm3707, %v3685, 0
        %v3754 = vsel %vm3707, %v3686, 0
        %v3757 = vsel %vm3707, %v3687, 0
        %v3760 = vsel %vm3707, %v3688, 0
        %v3763 = vsel %vm3707, %v3689, 0
        %v3766 = vsel %vm3707, %v3690, 0
        %v3769 = vsel %vm3707, %v3691, 0
        %v3772 = vsel %vm3707, %v3692, 0
        %v3775 = vsel %vm3707, %v3693, 0
        %v3778 = vsel %vm3707, %v3694, 0
        %v3781 = vsel %vm3707, %v3695, 0
        %v3784 = vsel %vm3707, %v3696, 0
        %v3787 = vsel %vm3707, %v3697, 0
        %v3790 = vsel %vm3707, %v3698, 0
        %v3793 = vsel %vm3707, %v3699, 0
        %v3796 = vsel %vm3707, %v3700, 0
        %v3799 = vsel %vm3707, %v3701, 0
        %v3802 = vsel %vm3707, %v3702, 0
        %vm3804 = vcmask 1043456
        %v3806 = vsel %vm3804, %v2307, 0
        %3808 = vmatprep.subr.mxu0 0.0
        %3809 = vmatpush1.msra.mxu0 %v2303
        %3810 = vmatprep.subr.mxu0 0.0
        %3811 = vmatpush1.msra.mxu0 %v2304
        %3812 = vmatprep.subr.mxu0 0.0
        %3813 = vmatpush1.msra.mxu0 %v2305
        %3814 = vmatprep.subr.mxu0 0.0
        %3815 = vmatpush1.msra.mxu0 %v2306
        %3816 = vmatprep.subr.mxu0 0.0
        %3817 = vmatpush1.msra.mxu0 %v3806
        %3818 = vmatprep.subr.mxu0 0.0
        %3819 = vmatpush1.msra.mxu0 0.0
        %3820 = vmatprep.subr.mxu0 0.0
        %3821 = vmatpush1.msra.mxu0 0.0
        %3822 = vmatprep.subr.mxu0 0.0
        %3823 = vmatpush1.msra.mxu0 0.0
        %3824 = vmatprep.subr.mxu0 0.0
        %3825 = vmatpush1.msra.mxu0 0.0
        %3826 = vmatprep.subr.mxu0 0.0
        %3827 = vmatpush1.msra.mxu0 0.0
        %3828 = vmatprep.subr.mxu0 0.0
        %3829 = vmatpush1.msra.mxu0 0.0
        %3830 = vmatprep.subr.mxu0 0.0
        %3831 = vmatpush1.msra.mxu0 0.0
        %3832 = vmatprep.subr.mxu0 0.0
        %3833 = vmatpush1.msra.mxu0 0.0
        %3834 = vmatprep.subr.mxu0 0.0
        %3835 = vmatpush1.msra.mxu0 0.0
        %3836 = vmatprep.subr.mxu0 0.0
        %3837 = vmatpush1.msra.mxu0 0.0
        %3838 = vmatprep.subr.mxu0 0.0
        %3839 = vmatpush1.msra.mxu0 0.0
        %3840 = vmatprep.subr.mxu0 0.0
        %3841 = vmatpush1.msra.mxu0 0.0
        %3842 = vmatprep.subr.mxu0 0.0
        %3843 = vmatpush1.msra.mxu0 0.0
        %3844 = vmatprep.subr.mxu0 0.0
        %3845 = vmatpush1.msra.mxu0 0.0
        %3846 = vmatprep.subr.mxu0 0.0
        %3847 = vmatpush1.msra.mxu0 0.0
        %3848 = vmatprep.subr.mxu0 0.0
        %3849 = vmatpush1.msra.mxu0 0.0
        %3850 = vmatprep.subr.mxu0 0.0
        %3851 = vmatpush1.msra.mxu0 0.0
        %3852 = vmatprep.subr.mxu0 0.0
        %3853 = vmatpush1.msra.mxu0 0.0
        %3854 = vmatprep.subr.mxu0 0.0
        %3855 = vmatpush1.msra.mxu0 0.0
        %3856 = vmatprep.subr.mxu0 0.0
        %3857 = vmatpush1.msra.mxu0 0.0
        %3858 = vmatprep.subr.mxu0 0.0
        %3859 = vmatpush1.msra.mxu0 0.0
        %3860 = vmatprep.subr.mxu0 0.0
        %3861 = vmatpush1.msra.mxu0 0.0
        %3862 = vmatprep.subr.mxu0 0.0
        %3863 = vmatpush1.msra.mxu0 0.0
        %3864 = vmatprep.subr.mxu0 0.0
        %3865 = vmatpush1.msra.mxu0 0.0
        %3866 = vmatprep.subr.mxu0 0.0
        %3867 = vmatpush1.msra.mxu0 0.0
        %3868 = vmatprep.subr.mxu0 0.0
        %3869 = vmatpush1.msra.mxu0 0.0
        %3870 = vmatprep.subr.mxu0 0.0
        %3871 = vmatpush1.msra.mxu0 0.0
        %3872 = vmatprep.mubr.f32.mxu0 0.0
        %3873 = vmatmul.mubr.f32.gmra.mrb[0].mxu0 %v3709
        %v3874 = vpop.f32.mrb[0].mxu0
        %v3875 = vadd.f32 %v3706, %v3874
        %v3876 = vpop.f32.mrb[0].mxu0
        %3877 = vmatprep.mubr.f32.mxu0 0.0
        %3878 = vmatmul.mubr.f32.gmra.mrb[0].mxu0 %v3712
        %v3879 = vpop.f32.mrb[0].mxu0
        %v3880 = vadd.f32 %v3706, %v3879
        %v3881 = vpop.f32.mrb[0].mxu0
        %3882 = vmatprep.mubr.f32.mxu0 0.0
        %3883 = vmatmul.mubr.f32.gmra.mrb[0].mxu0 %v3715
        %v3884 = vpop.f32.mrb[0].mxu0
        %v3885 = vadd.f32 %v3706, %v3884
        %v3886 = vpop.f32.mrb[0].mxu0
        %3887 = vmatprep.mubr.f32.mxu0 0.0
        %3888 = vmatmul.mubr.f32.gmra.mrb[0].mxu0 %v3718
        %v3889 = vpop.f32.mrb[0].mxu0
        %v3890 = vadd.f32 %v3706, %v3889
        %v3891 = vpop.f32.mrb[0].mxu0
        %3892 = vmatprep.mubr.f32.mxu0 0.0
        %3893 = vmatmul.mubr.f32.gmra.mrb[0].mxu0 %v3721
        %v3894 = vpop.f32.mrb[0].mxu0
        %v3895 = vadd.f32 %v3706, %v3894
        %v3896 = vpop.f32.mrb[0].mxu0
        %3897 = vmatprep.mubr.f32.mxu0 0.0
        %3898 = vmatmul.mubr.f32.gmra.mrb[0].mxu0 %v3724
        %v3899 = vpop.f32.mrb[0].mxu0
        %v3900 = vadd.f32 %v3706, %v3899
        %v3901 = vpop.f32.mrb[0].mxu0
        %3902 = vmatprep.mubr.f32.mxu0 0.0
        %3903 = vmatmul.mubr.f32.gmra.mrb[0].mxu0 %v3727
        %v3904 = vpop.f32.mrb[0].mxu0
        %v3905 = vadd.f32 %v3706, %v3904
        %v3906 = vpop.f32.mrb[0].mxu0
        %3907 = vmatprep.mubr.f32.mxu0 0.0
        %3908 = vmatmul.mubr.f32.gmra.mrb[0].mxu0 %v3730
        %v3909 = vpop.f32.mrb[0].mxu0
        %v3910 = vadd.f32 %v3706, %v3909
        %v3911 = vpop.f32.mrb[0].mxu0
        %3912 = vmatprep.mubr.f32.mxu0 0.0
        %3913 = vmatmul.mubr.f32.gmra.mrb[0].mxu0 %v3733
        %v3914 = vpop.f32.mrb[0].mxu0
        %v3915 = vadd.f32 %v3706, %v3914
        %v3916 = vpop.f32.mrb[0].mxu0
        %3917 = vmatprep.mubr.f32.mxu0 0.0
        %3918 = vmatmul.mubr.f32.gmra.mrb[0].mxu0 %v3736
        %v3919 = vpop.f32.mrb[0].mxu0
        %v3920 = vadd.f32 %v3706, %v3919
        %v3921 = vpop.f32.mrb[0].mxu0
        %3922 = vmatprep.mubr.f32.mxu0 0.0
        %3923 = vmatmul.mubr.f32.gmra.mrb[0].mxu0 %v3739
        %v3924 = vpop.f32.mrb[0].mxu0
        %v3925 = vadd.f32 %v3706, %v3924
        %v3926 = vpop.f32.mrb[0].mxu0
        %3927 = vmatprep.mubr.f32.mxu0 0.0
        %3928 = vmatmul.mubr.f32.gmra.mrb[0].mxu0 %v3742
        %v3929 = vpop.f32.mrb[0].mxu0
        %v3930 = vadd.f32 %v3706, %v3929
        %v3931 = vpop.f32.mrb[0].mxu0
        %3932 = vmatprep.mubr.f32.mxu0 0.0
        %3933 = vmatmul.mubr.f32.gmra.mrb[0].mxu0 %v3745
        %v3934 = vpop.f32.mrb[0].mxu0
        %v3935 = vadd.f32 %v3706, %v3934
        %v3936 = vpop.f32.mrb[0].mxu0
        %3937 = vmatprep.mubr.f32.mxu0 0.0
        %3938 = vmatmul.mubr.f32.gmra.mrb[0].mxu0 %v3748
        %v3939 = vpop.f32.mrb[0].mxu0
        %v3940 = vadd.f32 %v3706, %v3939
        %v3941 = vpop.f32.mrb[0].mxu0
        %3942 = vmatprep.mubr.f32.mxu0 0.0
        %3943 = vmatmul.mubr.f32.gmra.mrb[0].mxu0 %v3751
        %v3944 = vpop.f32.mrb[0].mxu0
        %v3945 = vadd.f32 %v3706, %v3944
        %v3946 = vpop.f32.mrb[0].mxu0
        %3947 = vmatprep.mubr.f32.mxu0 0.0
        %3948 = vmatmul.mubr.f32.gmra.mrb[0].mxu0 %v3754
        %v3949 = vpop.f32.mrb[0].mxu0
        %v3950 = vadd.f32 %v3706, %v3949
        %v3951 = vpop.f32.mrb[0].mxu0
        %3952 = vmatprep.mubr.f32.mxu0 0.0
        %3953 = vmatmul.mubr.f32.gmra.mrb[0].mxu0 %v3757
        %v3954 = vpop.f32.mrb[0].mxu0
        %v3955 = vadd.f32 %v3706, %v3954
        %v3956 = vpop.f32.mrb[0].mxu0
        %3957 = vmatprep.mubr.f32.mxu0 0.0
        %3958 = vmatmul.mubr.f32.gmra.mrb[0].mxu0 %v3760
        %v3959 = vpop.f32.mrb[0].mxu0
        %v3960 = vadd.f32 %v3706, %v3959
        %v3961 = vpop.f32.mrb[0].mxu0
        %3962 = vmatprep.mubr.f32.mxu0 0.0
        %3963 = vmatmul.mubr.f32.gmra.mrb[0].mxu0 %v3763
        %v3964 = vpop.f32.mrb[0].mxu0
        %v3965 = vadd.f32 %v3706, %v3964
        %v3966 = vpop.f32.mrb[0].mxu0
        %3967 = vmatprep.mubr.f32.mxu0 0.0
        %3968 = vmatmul.mubr.f32.gmra.mrb[0].mxu0 %v3766
        %v3969 = vpop.f32.mrb[0].mxu0
        %v3970 = vadd.f32 %v3706, %v3969
        %v3971 = vpop.f32.mrb[0].mxu0
        %3972 = vmatprep.mubr.f32.mxu0 0.0
        %3973 = vmatmul.mubr.f32.gmra.mrb[0].mxu0 %v3769
        %v3974 = vpop.f32.mrb[0].mxu0
        %v3975 = vadd.f32 %v3706, %v3974
        %v3976 = vpop.f32.mrb[0].mxu0
        %3977 = vmatprep.mubr.f32.mxu0 0.0
        %3978 = vmatmul.mubr.f32.gmra.mrb[0].mxu0 %v3772
        %v3979 = vpop.f32.mrb[0].mxu0
        %v3980 = vadd.f32 %v3706, %v3979
        %v3981 = vpop.f32.mrb[0].mxu0
        %3982 = vmatprep.mubr.f32.mxu0 0.0
        %3983 = vmatmul.mubr.f32.gmra.mrb[0].mxu0 %v3775
        %v3984 = vpop.f32.mrb[0].mxu0
        %v3985 = vadd.f32 %v3706, %v3984
        %v3986 = vpop.f32.mrb[0].mxu0
        %3987 = vmatprep.mubr.f32.mxu0 0.0
        %3988 = vmatmul.mubr.f32.gmra.mrb[0].mxu0 %v3778
        %v3989 = vpop.f32.mrb[0].mxu0
        %v3990 = vadd.f32 %v3706, %v3989
        %v3991 = vpop.f32.mrb[0].mxu0
        %3992 = vmatprep.mubr.f32.mxu0 0.0
        %3993 = vmatmul.mubr.f32.gmra.mrb[0].mxu0 %v3781
        %v3994 = vpop.f32.mrb[0].mxu0
        %v3995 = vadd.f32 %v3706, %v3994
        %v3996 = vpop.f32.mrb[0].mxu0
        %3997 = vmatprep.mubr.f32.mxu0 0.0
        %3998 = vmatmul.mubr.f32.gmra.mrb[0].mxu0 %v3784
        %v3999 = vpop.f32.mrb[0].mxu0
        %v4000 = vadd.f32 %v3706, %v3999
        %v4001 = vpop.f32.mrb[0].mxu0
        %4002 = vmatprep.mubr.f32.mxu0 0.0
        %4003 = vmatmul.mubr.f32.gmra.mrb[0].mxu0 %v3787
        %v4004 = vpop.f32.mrb[0].mxu0
        %v4005 = vadd.f32 %v3706, %v4004
        %v4006 = vpop.f32.mrb[0].mxu0
        %4007 = vmatprep.mubr.f32.mxu0 0.0
        %4008 = vmatmul.mubr.f32.gmra.mrb[0].mxu0 %v3790
        %v4009 = vpop.f32.mrb[0].mxu0
        %v4010 = vadd.f32 %v3706, %v4009
        %v4011 = vpop.f32.mrb[0].mxu0
        %4012 = vmatprep.mubr.f32.mxu0 0.0
        %4013 = vmatmul.mubr.f32.gmra.mrb[0].mxu0 %v3793
        %v4014 = vpop.f32.mrb[0].mxu0
        %v4015 = vadd.f32 %v3706, %v4014
        %v4016 = vpop.f32.mrb[0].mxu0
        %4017 = vmatprep.mubr.f32.mxu0 0.0
        %4018 = vmatmul.mubr.f32.gmra.mrb[0].mxu0 %v3796
        %v4019 = vpop.f32.mrb[0].mxu0
        %v4020 = vadd.f32 %v3706, %v4019
        %v4021 = vpop.f32.mrb[0].mxu0
        %4022 = vmatprep.mubr.f32.mxu0 0.0
        %4023 = vmatmul.mubr.f32.gmra.mrb[0].mxu0 %v3799
        %v4024 = vpop.f32.mrb[0].mxu0
        %v4025 = vadd.f32 %v3706, %v4024
        %v4026 = vpop.f32.mrb[0].mxu0
        %4027 = vmatprep.mubr.f32.mxu0 0.0
        %4028 = vmatmul.mubr.f32.gmra.mrb[0].mxu0 %v3802
        %v4029 = vpop.f32.mrb[0].mxu0
        %v4030 = vadd.f32 %v3706, %v4029
        %v4031 = vpop.f32.mrb[0].mxu0
        %4032 = vdwg.mxu0
        %v4033 = vmax.f32 %v3875, 0.0
        %v4034 = vmax.f32 %v3880, 0.0
        %v4035 = vmax.f32 %v3885, 0.0
        %v4036 = vmax.f32 %v3890, 0.0
        %v4037 = vmax.f32 %v3895, 0.0
        %v4038 = vmax.f32 %v3900, 0.0
        %v4039 = vmax.f32 %v3905, 0.0
        %v4040 = vmax.f32 %v3910, 0.0
        %v4041 = vmax.f32 %v3915, 0.0
        %v4042 = vmax.f32 %v3920, 0.0
        %v4043 = vmax.f32 %v3925, 0.0
        %v4044 = vmax.f32 %v3930, 0.0
        %v4045 = vmax.f32 %v3935, 0.0
        %v4046 = vmax.f32 %v3940, 0.0
        %v4047 = vmax.f32 %v3945, 0.0
        %v4048 = vmax.f32 %v3950, 0.0
        %v4049 = vmax.f32 %v3955, 0.0
        %v4050 = vmax.f32 %v3960, 0.0
        %v4051 = vmax.f32 %v3965, 0.0
        %v4052 = vmax.f32 %v3970, 0.0
        %v4053 = vmax.f32 %v3975, 0.0
        %v4054 = vmax.f32 %v3980, 0.0
        %v4055 = vmax.f32 %v3985, 0.0
        %v4056 = vmax.f32 %v3990, 0.0
        %v4057 = vmax.f32 %v3995, 0.0
        %v4058 = vmax.f32 %v4000, 0.0
        %v4059 = vmax.f32 %v4005, 0.0
        %v4060 = vmax.f32 %v4010, 0.0
        %v4061 = vmax.f32 %v4015, 0.0
        %v4062 = vmax.f32 %v4020, 0.0
        %v4063 = vmax.f32 %v4025, 0.0
        %v4064 = vmax.f32 %v4030, 0.0
        %v4081 = vrot.slane %v4033, 1
        %v4082 = vrot.slane %v4035, 1
        %v4083 = vrot.slane %v4037, 1
        %v4084 = vrot.slane %v4039, 1
        %v4085 = vrot.slane %v4041, 1
        %v4086 = vrot.slane %v4043, 1
        %v4087 = vrot.slane %v4045, 1
        %v4088 = vrot.slane %v4047, 1
        %v4089 = vrot.slane %v4049, 1
        %v4090 = vrot.slane %v4051, 1
        %v4091 = vrot.slane %v4053, 1
        %v4092 = vrot.slane %v4055, 1
        %v4093 = vrot.slane %v4057, 1
        %v4094 = vrot.slane %v4059, 1
        %v4095 = vrot.slane %v4061, 1
        %v4096 = vrot.slane %v4063, 1
        %v4113 = vmax.f32 %v4033, %v4081
        %v4114 = vmax.f32 %v4035, %v4082
        %v4115 = vmax.f32 %v4037, %v4083
        %v4116 = vmax.f32 %v4039, %v4084
        %v4117 = vmax.f32 %v4041, %v4085
        %v4118 = vmax.f32 %v4043, %v4086
        %v4119 = vmax.f32 %v4045, %v4087
        %v4120 = vmax.f32 %v4047, %v4088
        %v4121 = vmax.f32 %v4049, %v4089
        %v4122 = vmax.f32 %v4051, %v4090
        %v4123 = vmax.f32 %v4053, %v4091
        %v4124 = vmax.f32 %v4055, %v4092
        %v4125 = vmax.f32 %v4057, %v4093
        %v4126 = vmax.f32 %v4059, %v4094
        %v4127 = vmax.f32 %v4061, %v4095
        %v4128 = vmax.f32 %v4063, %v4096
        %v4145 = vrot.slane %v4034, 1
        %v4146 = vrot.slane %v4036, 1
        %v4147 = vrot.slane %v4038, 1
        %v4148 = vrot.slane %v4040, 1
        %v4149 = vrot.slane %v4042, 1
        %v4150 = vrot.slane %v4044, 1
        %v4151 = vrot.slane %v4046, 1
        %v4152 = vrot.slane %v4048, 1
        %v4153 = vrot.slane %v4050, 1
        %v4154 = vrot.slane %v4052, 1
        %v4155 = vrot.slane %v4054, 1
        %v4156 = vrot.slane %v4056, 1
        %v4157 = vrot.slane %v4058, 1
        %v4158 = vrot.slane %v4060, 1
        %v4159 = vrot.slane %v4062, 1
        %v4160 = vrot.slane %v4064, 1
        %v4177 = vmax.f32 %v4034, %v4145
        %v4178 = vmax.f32 %v4036, %v4146
        %v4179 = vmax.f32 %v4038, %v4147
        %v4180 = vmax.f32 %v4040, %v4148
        %v4181 = vmax.f32 %v4042, %v4149
        %v4182 = vmax.f32 %v4044, %v4150
        %v4183 = vmax.f32 %v4046, %v4151
        %v4184 = vmax.f32 %v4048, %v4152
        %v4185 = vmax.f32 %v4050, %v4153
        %v4186 = vmax.f32 %v4052, %v4154
        %v4187 = vmax.f32 %v4054, %v4155
        %v4188 = vmax.f32 %v4056, %v4156
        %v4189 = vmax.f32 %v4058, %v4157
        %v4190 = vmax.f32 %v4060, %v4158
        %v4191 = vmax.f32 %v4062, %v4159
        %v4192 = vmax.f32 %v4064, %v4160
        %v4209 = vrot.slane %v4113, 1
        %v4210 = vrot.slane %v4114, 1
        %v4211 = vrot.slane %v4115, 1
        %v4212 = vrot.slane %v4116, 1
        %v4213 = vrot.slane %v4117, 1
        %v4214 = vrot.slane %v4118, 1
        %v4215 = vrot.slane %v4119, 1
        %v4216 = vrot.slane %v4120, 1
        %v4217 = vrot.slane %v4121, 1
        %v4218 = vrot.slane %v4122, 1
        %v4219 = vrot.slane %v4123, 1
        %v4220 = vrot.slane %v4124, 1
        %v4221 = vrot.slane %v4125, 1
        %v4222 = vrot.slane %v4126, 1
        %v4223 = vrot.slane %v4127, 1
        %v4224 = vrot.slane %v4128, 1
        %v4241 = vrot.slane %v4113, 2
        %v4242 = vrot.slane %v4114, 2
        %v4243 = vrot.slane %v4115, 2
        %v4244 = vrot.slane %v4116, 2
        %v4245 = vrot.slane %v4117, 2
        %v4246 = vrot.slane %v4118, 2
        %v4247 = vrot.slane %v4119, 2
        %v4248 = vrot.slane %v4120, 2
        %v4249 = vrot.slane %v4121, 2
        %v4250 = vrot.slane %v4122, 2
        %v4251 = vrot.slane %v4123, 2
        %v4252 = vrot.slane %v4124, 2
        %v4253 = vrot.slane %v4125, 2
        %v4254 = vrot.slane %v4126, 2
        %v4255 = vrot.slane %v4127, 2
        %v4256 = vrot.slane %v4128, 2
        %v4273 = vrot.slane %v4113, 3
        %v4274 = vrot.slane %v4114, 3
        %v4275 = vrot.slane %v4115, 3
        %v4276 = vrot.slane %v4116, 3
        %v4277 = vrot.slane %v4117, 3
        %v4278 = vrot.slane %v4118, 3
        %v4279 = vrot.slane %v4119, 3
        %v4280 = vrot.slane %v4120, 3
        %v4281 = vrot.slane %v4121, 3
        %v4282 = vrot.slane %v4122, 3
        %v4283 = vrot.slane %v4123, 3
        %v4284 = vrot.slane %v4124, 3
        %v4285 = vrot.slane %v4125, 3
        %v4286 = vrot.slane %v4126, 3
        %v4287 = vrot.slane %v4127, 3
        %v4288 = vrot.slane %v4128, 3
        %v4321 = vrot.slane %v4177, 4
        %v4322 = vrot.slane %v4178, 4
        %v4323 = vrot.slane %v4179, 4
        %v4324 = vrot.slane %v4180, 4
        %v4325 = vrot.slane %v4181, 4
        %v4326 = vrot.slane %v4182, 4
        %v4327 = vrot.slane %v4183, 4
        %v4328 = vrot.slane %v4184, 4
        %v4329 = vrot.slane %v4185, 4
        %v4330 = vrot.slane %v4186, 4
        %v4331 = vrot.slane %v4187, 4
        %v4332 = vrot.slane %v4188, 4
        %v4333 = vrot.slane %v4189, 4
        %v4334 = vrot.slane %v4190, 4
        %v4335 = vrot.slane %v4191, 4
        %v4336 = vrot.slane %v4192, 4
        %v4353 = vrot.slane %v4177, 5
        %v4354 = vrot.slane %v4178, 5
        %v4355 = vrot.slane %v4179, 5
        %v4356 = vrot.slane %v4180, 5
        %v4357 = vrot.slane %v4181, 5
        %v4358 = vrot.slane %v4182, 5
        %v4359 = vrot.slane %v4183, 5
        %v4360 = vrot.slane %v4184, 5
        %v4361 = vrot.slane %v4185, 5
        %v4362 = vrot.slane %v4186, 5
        %v4363 = vrot.slane %v4187, 5
        %v4364 = vrot.slane %v4188, 5
        %v4365 = vrot.slane %v4189, 5
        %v4366 = vrot.slane %v4190, 5
        %v4367 = vrot.slane %v4191, 5
        %v4368 = vrot.slane %v4192, 5
        %v4385 = vrot.slane %v4177, 6
        %v4386 = vrot.slane %v4178, 6
        %v4387 = vrot.slane %v4179, 6
        %v4388 = vrot.slane %v4180, 6
        %v4389 = vrot.slane %v4181, 6
        %v4390 = vrot.slane %v4182, 6
        %v4391 = vrot.slane %v4183, 6
        %v4392 = vrot.slane %v4184, 6
        %v4393 = vrot.slane %v4185, 6
        %v4394 = vrot.slane %v4186, 6
        %v4395 = vrot.slane %v4187, 6
        %v4396 = vrot.slane %v4188, 6
        %v4397 = vrot.slane %v4189, 6
        %v4398 = vrot.slane %v4190, 6
        %v4399 = vrot.slane %v4191, 6
        %v4400 = vrot.slane %v4192, 6
        %v4417 = vrot.slane %v4177, 7
        %v4418 = vrot.slane %v4178, 7
        %v4419 = vrot.slane %v4179, 7
        %v4420 = vrot.slane %v4180, 7
        %v4421 = vrot.slane %v4181, 7
        %v4422 = vrot.slane %v4182, 7
        %v4423 = vrot.slane %v4183, 7
        %v4424 = vrot.slane %v4184, 7
        %v4425 = vrot.slane %v4185, 7
        %v4426 = vrot.slane %v4186, 7
        %v4427 = vrot.slane %v4187, 7
        %v4428 = vrot.slane %v4188, 7
        %v4429 = vrot.slane %v4189, 7
        %v4430 = vrot.slane %v4190, 7
        %v4431 = vrot.slane %v4191, 7
        %v4432 = vrot.slane %v4192, 7
        %v4449 = vsel %vm209, %v4113, %v4209
        %v4450 = vsel %vm209, %v4114, %v4210
        %v4451 = vsel %vm209, %v4115, %v4211
        %v4452 = vsel %vm209, %v4116, %v4212
        %v4453 = vsel %vm209, %v4117, %v4213
        %v4454 = vsel %vm209, %v4118, %v4214
        %v4455 = vsel %vm209, %v4119, %v4215
        %v4456 = vsel %vm209, %v4120, %v4216
        %v4457 = vsel %vm209, %v4121, %v4217
        %v4458 = vsel %vm209, %v4122, %v4218
        %v4459 = vsel %vm209, %v4123, %v4219
        %v4460 = vsel %vm209, %v4124, %v4220
        %v4461 = vsel %vm209, %v4125, %v4221
        %v4462 = vsel %vm209, %v4126, %v4222
        %v4463 = vsel %vm209, %v4127, %v4223
        %v4464 = vsel %vm209, %v4128, %v4224
        %vm4465 = vcmask 1041408
        %v4466 = vsel %vm4465, %v4449, %v4241
        %v4467 = vsel %vm4465, %v4450, %v4242
        %v4468 = vsel %vm4465, %v4451, %v4243
        %v4469 = vsel %vm4465, %v4452, %v4244
        %v4470 = vsel %vm4465, %v4453, %v4245
        %v4471 = vsel %vm4465, %v4454, %v4246
        %v4472 = vsel %vm4465, %v4455, %v4247
        %v4473 = vsel %vm4465, %v4456, %v4248
        %v4474 = vsel %vm4465, %v4457, %v4249
        %v4475 = vsel %vm4465, %v4458, %v4250
        %v4476 = vsel %vm4465, %v4459, %v4251
        %v4477 = vsel %vm4465, %v4460, %v4252
        %v4478 = vsel %vm4465, %v4461, %v4253
        %v4479 = vsel %vm4465, %v4462, %v4254
        %v4480 = vsel %vm4465, %v4463, %v4255
        %v4481 = vsel %vm4465, %v4464, %v4256
        %vm4482 = vcmask 1042432
        %v4483 = vsel %vm4482, %v4466, %v4273
        %v4484 = vsel %vm4482, %v4467, %v4274
        %v4485 = vsel %vm4482, %v4468, %v4275
        %v4486 = vsel %vm4482, %v4469, %v4276
        %v4487 = vsel %vm4482, %v4470, %v4277
        %v4488 = vsel %vm4482, %v4471, %v4278
        %v4489 = vsel %vm4482, %v4472, %v4279
        %v4490 = vsel %vm4482, %v4473, %v4280
        %v4491 = vsel %vm4482, %v4474, %v4281
        %v4492 = vsel %vm4482, %v4475, %v4282
        %v4493 = vsel %vm4482, %v4476, %v4283
        %v4494 = vsel %vm4482, %v4477, %v4284
        %v4495 = vsel %vm4482, %v4478, %v4285
        %v4496 = vsel %vm4482, %v4479, %v4286
        %v4497 = vsel %vm4482, %v4480, %v4287
        %v4498 = vsel %vm4482, %v4481, %v4288
        %v4499 = vsel %vm3804, %v4483, %v4321
        %v4500 = vsel %vm3804, %v4484, %v4322
        %v4501 = vsel %vm3804, %v4485, %v4323
        %v4502 = vsel %vm3804, %v4486, %v4324
        %v4503 = vsel %vm3804, %v4487, %v4325
        %v4504 = vsel %vm3804, %v4488, %v4326
        %v4505 = vsel %vm3804, %v4489, %v4327
        %v4506 = vsel %vm3804, %v4490, %v4328
        %v4507 = vsel %vm3804, %v4491, %v4329
        %v4508 = vsel %vm3804, %v4492, %v4330
        %v4509 = vsel %vm3804, %v4493, %v4331
        %v4510 = vsel %vm3804, %v4494, %v4332
        %v4511 = vsel %vm3804, %v4495, %v4333
        %v4512 = vsel %vm3804, %v4496, %v4334
        %v4513 = vsel %vm3804, %v4497, %v4335
        %v4514 = vsel %vm3804, %v4498, %v4336
        %vm4515 = vcmask 1044480
        %v4516 = vsel %vm4515, %v4499, %v4353
        %v4517 = vsel %vm4515, %v4500, %v4354
        %v4518 = vsel %vm4515, %v4501, %v4355
        %v4519 = vsel %vm4515, %v4502, %v4356
        %v4520 = vsel %vm4515, %v4503, %v4357
        %v4521 = vsel %vm4515, %v4504, %v4358
        %v4522 = vsel %vm4515, %v4505, %v4359
        %v4523 = vsel %vm4515, %v4506, %v4360
        %v4524 = vsel %vm4515, %v4507, %v4361
        %v4525 = vsel %vm4515, %v4508, %v4362
        %v4526 = vsel %vm4515, %v4509, %v4363
        %v4527 = vsel %vm4515, %v4510, %v4364
        %v4528 = vsel %vm4515, %v4511, %v4365
        %v4529 = vsel %vm4515, %v4512, %v4366
        %v4530 = vsel %vm4515, %v4513, %v4367
        %v4531 = vsel %vm4515, %v4514, %v4368
        %v4532 = vsel %vm964, %v4516, %v4385
        %v4533 = vsel %vm964, %v4517, %v4386
        %v4534 = vsel %vm964, %v4518, %v4387
        %v4535 = vsel %vm964, %v4519, %v4388
        %v4536 = vsel %vm964, %v4520, %v4389
        %v4537 = vsel %vm964, %v4521, %v4390
        %v4538 = vsel %vm964, %v4522, %v4391
        %v4539 = vsel %vm964, %v4523, %v4392
        %v4540 = vsel %vm964, %v4524, %v4393
        %v4541 = vsel %vm964, %v4525, %v4394
        %v4542 = vsel %vm964, %v4526, %v4395
        %v4543 = vsel %vm964, %v4527, %v4396
        %v4544 = vsel %vm964, %v4528, %v4397
        %v4545 = vsel %vm964, %v4529, %v4398
        %v4546 = vsel %vm964, %v4530, %v4399
        %v4547 = vsel %vm964, %v4531, %v4400
        %v4548 = vsel %vm719, %v4532, %v4417
        %v4549 = vsel %vm719, %v4533, %v4418
        %v4550 = vsel %vm719, %v4534, %v4419
        %v4551 = vsel %vm719, %v4535, %v4420
        %v4552 = vsel %vm719, %v4536, %v4421
        %v4553 = vsel %vm719, %v4537, %v4422
        %v4554 = vsel %vm719, %v4538, %v4423
        %v4555 = vsel %vm719, %v4539, %v4424
        %v4556 = vsel %vm719, %v4540, %v4425
        %v4557 = vsel %vm719, %v4541, %v4426
        %v4558 = vsel %vm719, %v4542, %v4427
        %v4559 = vsel %vm719, %v4543, %v4428
        %v4560 = vsel %vm719, %v4544, %v4429
        %v4561 = vsel %vm719, %v4545, %v4430
        %v4562 = vsel %vm719, %v4546, %v4431
        %v4563 = vsel %vm719, %v4547, %v4432
        %v4564 = vmax.f32 %v4548, %v4549
        %v4565 = vmax.f32 %v4550, %v4551
        %v4566 = vmax.f32 %v4552, %v4553
        %v4567 = vmax.f32 %v4554, %v4555
        %v4568 = vmax.f32 %v4556, %v4557
        %v4569 = vmax.f32 %v4558, %v4559
        %v4570 = vmax.f32 %v4560, %v4561
        %v4571 = vmax.f32 %v4562, %v4563
        %v4580 = vrot.slane %v4564, 1
        %v4581 = vrot.slane %v4565, 1
        %v4582 = vrot.slane %v4566, 1
        %v4583 = vrot.slane %v4567, 1
        %v4584 = vrot.slane %v4568, 1
        %v4585 = vrot.slane %v4569, 1
        %v4586 = vrot.slane %v4570, 1
        %v4587 = vrot.slane %v4571, 1
        %v4596 = vmax.f32 %v4564, %v4580
        %v4597 = vmax.f32 %v4565, %v4581
        %v4598 = vmax.f32 %v4566, %v4582
        %v4599 = vmax.f32 %v4567, %v4583
        %v4600 = vmax.f32 %v4568, %v4584
        %v4601 = vmax.f32 %v4569, %v4585
        %v4602 = vmax.f32 %v4570, %v4586
        %v4603 = vmax.f32 %v4571, %v4587
        %v4612 = vrot.slane %v4596, 1
        %v4613 = vrot.slane %v4597, 1
        %v4614 = vrot.slane %v4598, 1
        %v4615 = vrot.slane %v4599, 1
        %v4616 = vrot.slane %v4600, 1
        %v4617 = vrot.slane %v4601, 1
        %v4618 = vrot.slane %v4602, 1
        %v4619 = vrot.slane %v4603, 1
        %v4628 = vrot.slane %v4596, 2
        %v4629 = vrot.slane %v4597, 2
        %v4630 = vrot.slane %v4598, 2
        %v4631 = vrot.slane %v4599, 2
        %v4632 = vrot.slane %v4600, 2
        %v4633 = vrot.slane %v4601, 2
        %v4634 = vrot.slane %v4602, 2
        %v4635 = vrot.slane %v4603, 2
        %v4644 = vrot.slane %v4596, 3
        %v4645 = vrot.slane %v4597, 3
        %v4646 = vrot.slane %v4598, 3
        %v4647 = vrot.slane %v4599, 3
        %v4648 = vrot.slane %v4600, 3
        %v4649 = vrot.slane %v4601, 3
        %v4650 = vrot.slane %v4602, 3
        %v4651 = vrot.slane %v4603, 3
        %v4660 = vsel %vm209, %v4596, %v4612
        %v4661 = vsel %vm209, %v4597, %v4613
        %v4662 = vsel %vm209, %v4598, %v4614
        %v4663 = vsel %vm209, %v4599, %v4615
        %v4664 = vsel %vm209, %v4600, %v4616
        %v4665 = vsel %vm209, %v4601, %v4617
        %v4666 = vsel %vm209, %v4602, %v4618
        %v4667 = vsel %vm209, %v4603, %v4619
        %v4668 = vsel %vm4465, %v4660, %v4628
        %v4669 = vsel %vm4465, %v4661, %v4629
        %v4670 = vsel %vm4465, %v4662, %v4630
        %v4671 = vsel %vm4465, %v4663, %v4631
        %v4672 = vsel %vm4465, %v4664, %v4632
        %v4673 = vsel %vm4465, %v4665, %v4633
        %v4674 = vsel %vm4465, %v4666, %v4634
        %v4675 = vsel %vm4465, %v4667, %v4635
        %v4676 = vsel %vm4482, %v4668, %v4644
        %v4677 = vsel %vm4482, %v4669, %v4645
        %v4678 = vsel %vm4482, %v4670, %v4646
        %v4679 = vsel %vm4482, %v4671, %v4647
        %v4680 = vsel %vm4482, %v4672, %v4648
        %v4681 = vsel %vm4482, %v4673, %v4649
        %v4682 = vsel %vm4482, %v4674, %v4650
        %v4683 = vsel %vm4482, %v4675, %v4651
        %v4684 = vmax.f32 %v4676, %v4677
        %v4685 = vmax.f32 %v4678, %v4679
        %v4686 = vmax.f32 %v4680, %v4681
        %v4687 = vmax.f32 %v4682, %v4683
        %v4688 = vld [vmem:[%s1 + $0x48] sm:$0xff]
        %v4689 = vld [vmem:[%s1 + $0x50] sm:$0xff]
        %4691 = vset.pattern.permute.xlu0 0
        %4692 = vperm.xlu0 %4691, %v4688
        %v4693 = vpop.permute.xlu0 %4692
        %4695 = vset.pattern.permute.xlu0 0
        %4696 = vperm.xlu0 %4695, %v4689
        %v4697 = vpop.permute.xlu0 %4696
        %v4699 = vunpack.c.l.s4 839922192
        %v4700 = vunpack.c.0.s8 %v4699
        %v4701 = vlaneseq
        %v4702 = vshrl.u32 %v4701, 7
        %v4703 = vsub.s32 %v4700, %v4702
        %v4704 = vrot.slane %v4693, %v4703
        %v4706 = vunpack.c.l.s4 1985246804
        %v4707 = vunpack.c.0.s8 %v4706
        %v4708 = vlaneseq
        %v4709 = vshrl.u32 %v4708, 7
        %v4710 = vsub.s32 %v4707, %v4709
        %v4711 = vrot.slane %v4693, %v4710
        %v4713 = vunpack.c.l.s4 839922192
        %v4714 = vunpack.c.0.s8 %v4713
        %v4715 = vlaneseq
        %v4716 = vshrl.u32 %v4715, 7
        %v4717 = vsub.s32 %v4714, %v4716
        %v4718 = vrot.slane %v4697, %v4717
        %v4720 = vunpack.c.l.s4 1985246804
        %v4721 = vunpack.c.0.s8 %v4720
        %v4722 = vlaneseq
        %v4723 = vshrl.u32 %v4722, 7
        %v4724 = vsub.s32 %v4721, %v4723
        %v4725 = vrot.slane %v4697, %v4724
        %v4730 = vmul.f32 %v4684, %v4704
        %v4731 = vmul.f32 %v4685, %v4711
        %v4732 = vmul.f32 %v4686, %v4718
        %v4733 = vmul.f32 %v4687, %v4725
        %v4738 = vcombine.low %v4730, %v4731
        %v4739 = vcombine.low %v4732, %v4733
        %v4742 = vsel %vm3472, %v4738, 0.0
        %v4743 = vsel %vm3472, %v4739, 0.0
        %v4744 = vadd.f32 %v4742, %v4743
        %v4745 = vrot.slane %v4744, 4
        %v4746 = vadd.f32 %v4744, %v4745
        %v4747 = vrot.slane %v4746, 2
        %v4748 = vadd.f32 %v4746, %v4747
        %v4749 = vrot.slane %v4748, 1
        %v4750 = vadd.f32 %v4748, %v4749
        %v4751 = vsel %vm3472, %v4750, -inf
        %4752 = vmax.xlane.f32.xlu0 %v4751
        %v4753 = vpop.xlane.xlu0 %4752
        %v4754 = vsub.f32 %v4750, %v4753
        %v4755 = vmul.f32 %v4754, 1.442695
        %v4756 = vpow.pop %v4755
        %v4757 = vsel %vm3472, %v4756, 0.0
        %4758 = vadd.xlane.f32.xlu0 %v4757
        %v4759 = vpop.xlane.xlu0 %4758
        %v4760 = vrcp.pop %v4759
        %v4761 = vmul.f32 %v4756, %v4760
        %v4766 = vrot.slane %v4685, 7
        %vm4767 = vcmask 1041409
        %v4768 = vsel %vm4767, %v4766, %v4684
        %v4769 = vrot.slane %v4686, 6
        %vm4770 = vcmask 1042434
        %v4771 = vsel %vm4770, %v4769, %v4768
        %v4772 = vrot.slane %v4687, 5
        %vm4773 = vcmask 1043459
        %v4774 = vsel %vm4773, %v4772, %v4771
        %v4776 = vrot.slane %v4684, 1
        %v4777 = vsel %vm4767, %v4685, %v4776
        %v4778 = vrot.slane %v4686, 7
        %v4779 = vsel %vm4770, %v4778, %v4777
        %v4780 = vrot.slane %v4687, 6
        %v4781 = vsel %vm4773, %v4780, %v4779
        %4782 = vrot.lane.b32.xlu0 %v4781, 8
        %v4783 = vpop.permute.xlu0 %4782
        %v4785 = vrot.slane %v4684, 2
        %v4786 = vrot.slane %v4685, 1
        %v4787 = vsel %vm4767, %v4786, %v4785
        %v4788 = vsel %vm4770, %v4686, %v4787
        %v4789 = vrot.slane %v4687, 7
        %v4790 = vsel %vm4773, %v4789, %v4788
        %4791 = vrot.lane.b32.xlu0 %v4790, 16
        %v4792 = vpop.permute.xlu0 %4791
        %v4794 = vrot.slane %v4684, 3
        %v4795 = vrot.slane %v4685, 2
        %v4796 = vsel %vm4767, %v4795, %v4794
        %v4797 = vrot.slane %v4686, 1
        %v4798 = vsel %vm4770, %v4797, %v4796
        %v4799 = vsel %vm4773, %v4687, %v4798
        %4800 = vrot.lane.b32.xlu0 %v4799, 24
        %v4801 = vpop.permute.xlu0 %4800
        %v4803 = vsel %vm3472, %v4774, %v4783
        %v4804 = vsel %vm3538, %v4803, %v4792
        %v4805 = vsel %vm3604, %v4804, %v4801
        %v4806 = vld [vmem:[%s1 + $0x58] sm:$0xff]
        %v4807 = vld [vmem:[%s1 + $0x60] sm:$0xff]
        %v4808 = vld [vmem:[%s1 + $0x68] sm:$0xff]
        %v4809 = vld [vmem:[%s1 + $0x70] sm:$0xff]
        %v4810 = vld [vmem:[%s1 + $0x78] sm:$0x1]
        %v4811 = vlaneseq
        %v4812 = vshrl.u32 %v4811, 7
        %v4813 = vsub.s32 0, %v4812
        %v4814 = vrot.slane %v4810, %v4813
        %v4816 = vsel %vm3670, %v4805, 0
        %4818 = vmatprep.subr.mxu0 0.0
        %4819 = vmatpush1.msra.mxu0 %v4806
        %4820 = vmatprep.subr.mxu0 0.0
        %4821 = vmatpush1.msra.mxu0 %v4807
        %4822 = vmatprep.subr.mxu0 0.0
        %4823 = vmatpush1.msra.mxu0 %v4808
        %4824 = vmatprep.subr.mxu0 0.0
        %4825 = vmatpush1.msra.mxu0 %v4809
        %4826 = vmatprep.subr.mxu0 0.0
        %4827 = vmatpush1.msra.mxu0 0.0
        %4828 = vmatprep.subr.mxu0 0.0
        %4829 = vmatpush1.msra.mxu0 0.0
        %4830 = vmatprep.subr.mxu0 0.0
        %4831 = vmatpush1.msra.mxu0 0.0
        %4832 = vmatprep.subr.mxu0 0.0
        %4833 = vmatpush1.msra.mxu0 0.0
        %4834 = vmatprep.subr.mxu0 0.0
        %4835 = vmatpush1.msra.mxu0 0.0
        %4836 = vmatprep.subr.mxu0 0.0
        %4837 = vmatpush1.msra.mxu0 0.0
        %4838 = vmatprep.subr.mxu0 0.0
        %4839 = vmatpush1.msra.mxu0 0.0
        %4840 = vmatprep.subr.mxu0 0.0
        %4841 = vmatpush1.msra.mxu0 0.0
        %4842 = vmatprep.subr.mxu0 0.0
        %4843 = vmatpush1.msra.mxu0 0.0
        %4844 = vmatprep.subr.mxu0 0.0
        %4845 = vmatpush1.msra.mxu0 0.0
        %4846 = vmatprep.subr.mxu0 0.0
        %4847 = vmatpush1.msra.mxu0 0.0
        %4848 = vmatprep.subr.mxu0 0.0
        %4849 = vmatpush1.msra.mxu0 0.0
        %4850 = vmatprep.subr.mxu0 0.0
        %4851 = vmatpush1.msra.mxu0 0.0
        %4852 = vmatprep.subr.mxu0 0.0
        %4853 = vmatpush1.msra.mxu0 0.0
        %4854 = vmatprep.subr.mxu0 0.0
        %4855 = vmatpush1.msra.mxu0 0.0
        %4856 = vmatprep.subr.mxu0 0.0
        %4857 = vmatpush1.msra.mxu0 0.0
        %4858 = vmatprep.subr.mxu0 0.0
        %4859 = vmatpush1.msra.mxu0 0.0
        %4860 = vmatprep.subr.mxu0 0.0
        %4861 = vmatpush1.msra.mxu0 0.0
        %4862 = vmatprep.subr.mxu0 0.0
        %4863 = vmatpush1.msra.mxu0 0.0
        %4864 = vmatprep.subr.mxu0 0.0
        %4865 = vmatpush1.msra.mxu0 0.0
        %4866 = vmatprep.subr.mxu0 0.0
        %4867 = vmatpush1.msra.mxu0 0.0
        %4868 = vmatprep.subr.mxu0 0.0
        %4869 = vmatpush1.msra.mxu0 0.0
        %4870 = vmatprep.subr.mxu0 0.0
        %4871 = vmatpush1.msra.mxu0 0.0
        %4872 = vmatprep.subr.mxu0 0.0
        %4873 = vmatpush1.msra.mxu0 0.0
        %4874 = vmatprep.subr.mxu0 0.0
        %4875 = vmatpush1.msra.mxu0 0.0
        %4876 = vmatprep.subr.mxu0 0.0
        %4877 = vmatpush1.msra.mxu0 0.0
        %4878 = vmatprep.subr.mxu0 0.0
        %4879 = vmatpush1.msra.mxu0 0.0
        %4880 = vmatprep.subr.mxu0 0.0
        %4881 = vmatpush1.msra.mxu0 0.0
        %4882 = vmatprep.mubr.f32.mxu0 0.0
        %4883 = vmatmul.mubr.f32.gmra.mrb[0].mxu0 %v4816
        %v4884 = vpop.f32.mrb[0].mxu0
        %v4885 = vadd.f32 %v4814, %v4884
        %v4886 = vpop.f32.mrb[0].mxu0
        %4887 = vdwg.mxu0
        %v4888 = vmax.f32 %v4885, 0.0
        %v4889 = vsel %vm3804, %v4888, 0.0
        %v4890 = vrot.slane %v4889, 4
        %v4891 = vadd.f32 %v4889, %v4890
        %v4892 = vrot.slane %v4891, 2
        %v4893 = vadd.f32 %v4891, %v4892
        %v4894 = vrot.slane %v4893, 1
        %v4895 = vadd.f32 %v4893, %v4894
        %v4896 = vrcp.pop 4.0
        %v4897 = vmul.f32 %v4895, %v4896
        %v4898 = vld [vmem:[%s1 + $0x80] sm:$0xff]
        %v4899 = vld [vmem:[%s1 + $0x88] sm:$0xff]
        %v4900 = vld [vmem:[%s1 + $0x90] sm:$0xff]
        %v4901 = vld [vmem:[%s1 + $0x98] sm:$0xff]
        %v4902 = vld [vmem:[%s1 + $0xa0] sm:$0xff]
        %v4903 = vld [vmem:[%s1 + $0xa8] sm:$0xff]
        %v4904 = vld [vmem:[%s1 + $0xb0] sm:$0xff]
        %v4905 = vld [vmem:[%s1 + $0xb8] sm:$0xff]
        %v4906 = vld [vmem:[%s1 + $0xc0] sm:$0xff]
        %v4907 = vld [vmem:[%s1 + $0xc8] sm:$0xff]
        %v4908 = vld [vmem:[%s1 + $0xd0] sm:$0xff]
        %v4909 = vld [vmem:[%s1 + $0xd8] sm:$0xff]
        %v4910 = vld [vmem:[%s1 + $0xe0] sm:$0xff]
        %v4911 = vld [vmem:[%s1 + $0xe8] sm:$0xff]
        %v4912 = vld [vmem:[%s1 + $0xf0] sm:$0xff]
        %v4913 = vld [vmem:[%s1 + $0xf8] sm:$0xff]
        %v4914 = vld [vmem:[%s1 + $0x100] sm:$0x1]
        %4915 = vmatprep.subr.mxu0 0.0
        %4916 = vmatpush1.msra.mxu0 %v4898
        %4917 = vmatprep.subr.mxu0 0.0
        %4918 = vmatpush1.msra.mxu0 %v4899
        %4919 = vmatprep.subr.mxu0 0.0
        %4920 = vmatpush1.msra.mxu0 %v4900
        %4921 = vmatprep.subr.mxu0 0.0
        %4922 = vmatpush1.msra.mxu0 %v4901
        %4923 = vmatprep.subr.mxu0 0.0
        %4924 = vmatpush1.msra.mxu0 %v4902
        %4925 = vmatprep.subr.mxu0 0.0
        %4926 = vmatpush1.msra.mxu0 %v4903
        %4927 = vmatprep.subr.mxu0 0.0
        %4928 = vmatpush1.msra.mxu0 %v4904
        %4929 = vmatprep.subr.mxu0 0.0
        %4930 = vmatpush1.msra.mxu0 %v4905
        %4931 = vmatprep.subr.mxu0 0.0
        %4932 = vmatpush1.msra.mxu0 %v4906
        %4933 = vmatprep.subr.mxu0 0.0
        %4934 = vmatpush1.msra.mxu0 %v4907
        %4935 = vmatprep.subr.mxu0 0.0
        %4936 = vmatpush1.msra.mxu0 %v4908
        %4937 = vmatprep.subr.mxu0 0.0
        %4938 = vmatpush1.msra.mxu0 %v4909
        %4939 = vmatprep.subr.mxu0 0.0
        %4940 = vmatpush1.msra.mxu0 %v4910
        %4941 = vmatprep.subr.mxu0 0.0
        %4942 = vmatpush1.msra.mxu0 %v4911
        %4943 = vmatprep.subr.mxu0 0.0
        %4944 = vmatpush1.msra.mxu0 %v4912
        %4945 = vmatprep.subr.mxu0 0.0
        %4946 = vmatpush1.msra.mxu0 %v4913
        %4947 = vmatprep.subr.mxu0 0.0
        %4948 = vmatpush1.msra.mxu0 0.0
        %4949 = vmatprep.subr.mxu0 0.0
        %4950 = vmatpush1.msra.mxu0 0.0
        %4951 = vmatprep.subr.mxu0 0.0
        %4952 = vmatpush1.msra.mxu0 0.0
        %4953 = vmatprep.subr.mxu0 0.0
        %4954 = vmatpush1.msra.mxu0 0.0
        %4955 = vmatprep.subr.mxu0 0.0
        %4956 = vmatpush1.msra.mxu0 0.0
        %4957 = vmatprep.subr.mxu0 0.0
        %4958 = vmatpush1.msra.mxu0 0.0
        %4959 = vmatprep.subr.mxu0 0.0
        %4960 = vmatpush1.msra.mxu0 0.0
        %4961 = vmatprep.subr.mxu0 0.0
        %4962 = vmatpush1.msra.mxu0 0.0
        %4963 = vmatprep.subr.mxu0 0.0
        %4964 = vmatpush1.msra.mxu0 0.0
        %4965 = vmatprep.subr.mxu0 0.0
        %4966 = vmatpush1.msra.mxu0 0.0
        %4967 = vmatprep.subr.mxu0 0.0
        %4968 = vmatpush1.msra.mxu0 0.0
        %4969 = vmatprep.subr.mxu0 0.0
        %4970 = vmatpush1.msra.mxu0 0.0
        %4971 = vmatprep.subr.mxu0 0.0
        %4972 = vmatpush1.msra.mxu0 0.0
        %4973 = vmatprep.subr.mxu0 0.0
        %4974 = vmatpush1.msra.mxu0 0.0
        %4975 = vmatprep.subr.mxu0 0.0
        %4976 = vmatpush1.msra.mxu0 0.0
        %4977 = vmatprep.subr.mxu0 0.0
        %4978 = vmatpush1.msra.mxu0 0.0
        %4979 = vmatprep.mubr.f32.mxu0 0.0
        %4980 = vmatmul.mubr.f32.gmra.mrb[0].mxu0 %v4897
        %v4981 = vpop.f32.mrb[0].mxu0
        %v4982 = vadd.f32 %v4914, %v4981
        %v4983 = vpop.f32.mrb[0].mxu0
        %4984 = vdwg.mxu0
        %v4985 = vld [vmem:[%s1 + $0x108] sm:$0xff]
        %v4987 = vsel %vm3472, %v4761, 0
        %4989 = vmatprep.subr.mxu0 0.0
        %4990 = vmatpush1.msra.mxu0 %v4985
        %4991 = vmatprep.subr.mxu0 0.0
        %4992 = vmatpush1.msra.mxu0 0.0
        %4993 = vmatprep.subr.mxu0 0.0
        %4994 = vmatpush1.msra.mxu0 0.0
        %4995 = vmatprep.subr.mxu0 0.0
        %4996 = vmatpush1.msra.mxu0 0.0
        %4997 = vmatprep.subr.mxu0 0.0
        %4998 = vmatpush1.msra.mxu0 0.0
        %4999 = vmatprep.subr.mxu0 0.0
        %5000 = vmatpush1.msra.mxu0 0.0
        %5001 = vmatprep.subr.mxu0 0.0
        %5002 = vmatpush1.msra.mxu0 0.0
        %5003 = vmatprep.subr.mxu0 0.0
        %5004 = vmatpush1.msra.mxu0 0.0
        %5005 = vmatprep.subr.mxu0 0.0
        %5006 = vmatpush1.msra.mxu0 0.0
        %5007 = vmatprep.subr.mxu0 0.0
        %5008 = vmatpush1.msra.mxu0 0.0
        %5009 = vmatprep.subr.mxu0 0.0
        %5010 = vmatpush1.msra.mxu0 0.0
        %5011 = vmatprep.subr.mxu0 0.0
        %5012 = vmatpush1.msra.mxu0 0.0
        %5013 = vmatprep.subr.mxu0 0.0
        %5014 = vmatpush1.msra.mxu0 0.0
        %5015 = vmatprep.subr.mxu0 0.0
        %5016 = vmatpush1.msra.mxu0 0.0
        %5017 = vmatprep.subr.mxu0 0.0
        %5018 = vmatpush1.msra.mxu0 0.0
        %5019 = vmatprep.subr.mxu0 0.0
        %5020 = vmatpush1.msra.mxu0 0.0
        %5021 = vmatprep.subr.mxu0 0.0
        %5022 = vmatpush1.msra.mxu0 0.0
        %5023 = vmatprep.subr.mxu0 0.0
        %5024 = vmatpush1.msra.mxu0 0.0
        %5025 = vmatprep.subr.mxu0 0.0
        %5026 = vmatpush1.msra.mxu0 0.0
        %5027 = vmatprep.subr.mxu0 0.0
        %5028 = vmatpush1.msra.mxu0 0.0
        %5029 = vmatprep.subr.mxu0 0.0
        %5030 = vmatpush1.msra.mxu0 0.0
        %5031 = vmatprep.subr.mxu0 0.0
        %5032 = vmatpush1.msra.mxu0 0.0
        %5033 = vmatprep.subr.mxu0 0.0
        %5034 = vmatpush1.msra.mxu0 0.0
        %5035 = vmatprep.subr.mxu0 0.0
        %5036 = vmatpush1.msra.mxu0 0.0
        %5037 = vmatprep.subr.mxu0 0.0
        %5038 = vmatpush1.msra.mxu0 0.0
        %5039 = vmatprep.subr.mxu0 0.0
        %5040 = vmatpush1.msra.mxu0 0.0
        %5041 = vmatprep.subr.mxu0 0.0
        %5042 = vmatpush1.msra.mxu0 0.0
        %5043 = vmatprep.subr.mxu0 0.0
        %5044 = vmatpush1.msra.mxu0 0.0
        %5045 = vmatprep.subr.mxu0 0.0
        %5046 = vmatpush1.msra.mxu0 0.0
        %5047 = vmatprep.subr.mxu0 0.0
        %5048 = vmatpush1.msra.mxu0 0.0
        %5049 = vmatprep.subr.mxu0 0.0
        %5050 = vmatpush1.msra.mxu0 0.0
        %5051 = vmatprep.subr.mxu0 0.0
        %5052 = vmatpush1.msra.mxu0 0.0
        %5053 = vmatprep.mubr.f32.mxu0 0.0
        %5054 = vmatmul.mubr.f32.gmra.mrb[0].mxu0 %v4987
        %v5055 = vpop.f32.mrb[0].mxu0
        %v5056 = vadd.f32 0.0, %v5055
        %v5057 = vpop.f32.mrb[0].mxu0
        %5058 = vdwg.mxu0
        %v5059 = vmul.f32 %v4982, %v5056
        %v5060 = vld [vmem:[%s1 + $0x110] sm:$0xff]
        %v5061 = vld [vmem:[%s1 + $0x118] sm:$0xff]
        %v5062 = vld [vmem:[%s1 + $0x120] sm:$0xff]
        %v5063 = vld [vmem:[%s1 + $0x128] sm:$0xff]
        %v5064 = vld [vmem:[%s1 + $0x130] sm:$0xff]
        %v5065 = vld [vmem:[%s1 + $0x138] sm:$0xff]
        %v5066 = vld [vmem:[%s1 + $0x140] sm:$0xff]
        %v5067 = vld [vmem:[%s1 + $0x148] sm:$0xff]
        %v5068 = vld [vmem:[%s1 + $0x150] sm:$0x1]
        %vm5069 = vcmask 523264
        %v5071 = vsel %vm5069, %v5059, 0
        %5073 = vmatprep.subr.mxu0 0.0
        %5074 = vmatpush1.msra.mxu0 %v5060
        %5075 = vmatprep.subr.mxu0 0.0
        %5076 = vmatpush1.msra.mxu0 %v5061
        %5077 = vmatprep.subr.mxu0 0.0
        %5078 = vmatpush1.msra.mxu0 %v5062
        %5079 = vmatprep.subr.mxu0 0.0
        %5080 = vmatpush1.msra.mxu0 %v5063
        %5081 = vmatprep.subr.mxu0 0.0
        %5082 = vmatpush1.msra.mxu0 %v5064
        %5083 = vmatprep.subr.mxu0 0.0
        %5084 = vmatpush1.msra.mxu0 %v5065
        %5085 = vmatprep.subr.mxu0 0.0
        %5086 = vmatpush1.msra.mxu0 %v5066
        %5087 = vmatprep.subr.mxu0 0.0
        %5088 = vmatpush1.msra.mxu0 %v5067
        %5089 = vmatprep.subr.mxu0 0.0
        %5090 = vmatpush1.msra.mxu0 0.0
        %5091 = vmatprep.subr.mxu0 0.0
        %5092 = vmatpush1.msra.mxu0 0.0
        %5093 = vmatprep.subr.mxu0 0.0
        %5094 = vmatpush1.msra.mxu0 0.0
        %5095 = vmatprep.subr.mxu0 0.0
        %5096 = vmatpush1.msra.mxu0 0.0
        %5097 = vmatprep.subr.mxu0 0.0
        %5098 = vmatpush1.msra.mxu0 0.0
        %5099 = vmatprep.subr.mxu0 0.0
        %5100 = vmatpush1.msra.mxu0 0.0
        %5101 = vmatprep.subr.mxu0 0.0
        %5102 = vmatpush1.msra.mxu0 0.0
        %5103 = vmatprep.subr.mxu0 0.0
        %5104 = vmatpush1.msra.mxu0 0.0
        %5105 = vmatprep.subr.mxu0 0.0
        %5106 = vmatpush1.msra.mxu0 0.0
        %5107 = vmatprep.subr.mxu0 0.0
        %5108 = vmatpush1.msra.mxu0 0.0
        %5109 = vmatprep.subr.mxu0 0.0
        %5110 = vmatpush1.msra.mxu0 0.0
        %5111 = vmatprep.subr.mxu0 0.0
        %5112 = vmatpush1.msra.mxu0 0.0
        %5113 = vmatprep.subr.mxu0 0.0
        %5114 = vmatpush1.msra.mxu0 0.0
        %5115 = vmatprep.subr.mxu0 0.0
        %5116 = vmatpush1.msra.mxu0 0.0
        %5117 = vmatprep.subr.mxu0 0.0
        %5118 = vmatpush1.msra.mxu0 0.0
        %5119 = vmatprep.subr.mxu0 0.0
        %5120 = vmatpush1.msra.mxu0 0.0
        %5121 = vmatprep.subr.mxu0 0.0
        %5122 = vmatpush1.msra.mxu0 0.0
        %5123 = vmatprep.subr.mxu0 0.0
        %5124 = vmatpush1.msra.mxu0 0.0
        %5125 = vmatprep.subr.mxu0 0.0
        %5126 = vmatpush1.msra.mxu0 0.0
        %5127 = vmatprep.subr.mxu0 0.0
        %5128 = vmatpush1.msra.mxu0 0.0
        %5129 = vmatprep.subr.mxu0 0.0
        %5130 = vmatpush1.msra.mxu0 0.0
        %5131 = vmatprep.subr.mxu0 0.0
        %5132 = vmatpush1.msra.mxu0 0.0
        %5133 = vmatprep.subr.mxu0 0.0
        %5134 = vmatpush1.msra.mxu0 0.0
        %5135 = vmatprep.subr.mxu0 0.0
        %5136 = vmatpush1.msra.mxu0 0.0
        %5137 = vmatprep.mubr.f32.mxu0 0.0
        %5138 = vmatmul.mubr.f32.gmra.mrb[0].mxu0 %v5071
        %v5139 = vpop.f32.mrb[0].mxu0
        %v5140 = vadd.f32 %v5068, %v5139
        %v5141 = vpop.f32.mrb[0].mxu0
        %5142 = vdwg.mxu0
        %v5143 = vmax.f32 %v5140, 0.0
        %v5144 = vld [vmem:[%s1 + $0x158] sm:$0xff]
        %v5145 = vld [vmem:[%s1 + $0x160] sm:$0xff]
        %v5146 = vld [vmem:[%s1 + $0x168] sm:$0xff]
        %v5147 = vld [vmem:[%s1 + $0x170] sm:$0xff]
        %v5148 = vld [vmem:[%s1 + $0x178] sm:$0xff]
        %v5149 = vld [vmem:[%s1 + $0x180] sm:$0xff]
        %v5150 = vld [vmem:[%s1 + $0x188] sm:$0xff]
        %v5151 = vld [vmem:[%s1 + $0x190] sm:$0xff]
        %v5152 = vld [vmem:[%s1 + $0x198] sm:$0xff]
        %v5153 = vld [vmem:[%s1 + $0x1a0] sm:$0xff]
        %v5154 = vld [vmem:[%s1 + $0x1a8] sm:$0xff]
        %v5155 = vld [vmem:[%s1 + $0x1b0] sm:$0xff]
        %v5156 = vld [vmem:[%s1 + $0x1b8] sm:$0xff]
        %v5157 = vld [vmem:[%s1 + $0x1c0] sm:$0xff]
        %v5158 = vld [vmem:[%s1 + $0x1c8] sm:$0xff]
        %v5159 = vld [vmem:[%s1 + $0x1d0] sm:$0xff]
        %v5160 = vld [vmem:[%s1 + $0x1d8] sm:$0x1]
        %5161 = vmatprep.subr.mxu0 0.0
        %5162 = vmatpush1.msra.mxu0 %v5144
        %5163 = vmatprep.subr.mxu0 0.0
        %5164 = vmatpush1.msra.mxu0 %v5145
        %5165 = vmatprep.subr.mxu0 0.0
        %5166 = vmatpush1.msra.mxu0 %v5146
        %5167 = vmatprep.subr.mxu0 0.0
        %5168 = vmatpush1.msra.mxu0 %v5147
        %5169 = vmatprep.subr.mxu0 0.0
        %5170 = vmatpush1.msra.mxu0 %v5148
        %5171 = vmatprep.subr.mxu0 0.0
        %5172 = vmatpush1.msra.mxu0 %v5149
        %5173 = vmatprep.subr.mxu0 0.0
        %5174 = vmatpush1.msra.mxu0 %v5150
        %5175 = vmatprep.subr.mxu0 0.0
        %5176 = vmatpush1.msra.mxu0 %v5151
        %5177 = vmatprep.subr.mxu0 0.0
        %5178 = vmatpush1.msra.mxu0 %v5152
        %5179 = vmatprep.subr.mxu0 0.0
        %5180 = vmatpush1.msra.mxu0 %v5153
        %5181 = vmatprep.subr.mxu0 0.0
        %5182 = vmatpush1.msra.mxu0 %v5154
        %5183 = vmatprep.subr.mxu0 0.0
        %5184 = vmatpush1.msra.mxu0 %v5155
        %5185 = vmatprep.subr.mxu0 0.0
        %5186 = vmatpush1.msra.mxu0 %v5156
        %5187 = vmatprep.subr.mxu0 0.0
        %5188 = vmatpush1.msra.mxu0 %v5157
        %5189 = vmatprep.subr.mxu0 0.0
        %5190 = vmatpush1.msra.mxu0 %v5158
        %5191 = vmatprep.subr.mxu0 0.0
        %5192 = vmatpush1.msra.mxu0 %v5159
        %5193 = vmatprep.subr.mxu0 0.0
        %5194 = vmatpush1.msra.mxu0 0.0
        %5195 = vmatprep.subr.mxu0 0.0
        %5196 = vmatpush1.msra.mxu0 0.0
        %5197 = vmatprep.subr.mxu0 0.0
        %5198 = vmatpush1.msra.mxu0 0.0
        %5199 = vmatprep.subr.mxu0 0.0
        %5200 = vmatpush1.msra.mxu0 0.0
        %5201 = vmatprep.subr.mxu0 0.0
        %5202 = vmatpush1.msra.mxu0 0.0
        %5203 = vmatprep.subr.mxu0 0.0
        %5204 = vmatpush1.msra.mxu0 0.0
        %5205 = vmatprep.subr.mxu0 0.0
        %5206 = vmatpush1.msra.mxu0 0.0
        %5207 = vmatprep.subr.mxu0 0.0
        %5208 = vmatpush1.msra.mxu0 0.0
        %5209 = vmatprep.subr.mxu0 0.0
        %5210 = vmatpush1.msra.mxu0 0.0
        %5211 = vmatprep.subr.mxu0 0.0
        %5212 = vmatpush1.msra.mxu0 0.0
        %5213 = vmatprep.subr.mxu0 0.0
        %5214 = vmatpush1.msra.mxu0 0.0
        %5215 = vmatprep.subr.mxu0 0.0
        %5216 = vmatpush1.msra.mxu0 0.0
        %5217 = vmatprep.subr.mxu0 0.0
        %5218 = vmatpush1.msra.mxu0 0.0
        %5219 = vmatprep.subr.mxu0 0.0
        %5220 = vmatpush1.msra.mxu0 0.0
        %5221 = vmatprep.subr.mxu0 0.0
        %5222 = vmatpush1.msra.mxu0 0.0
        %5223 = vmatprep.subr.mxu0 0.0
        %5224 = vmatpush1.msra.mxu0 0.0
        %5225 = vmatprep.mubr.f32.mxu0 0.0
        %5226 = vmatmul.mubr.f32.gmra.mrb[0].mxu0 %v5143
        %v5227 = vpop.f32.mrb[0].mxu0
        %v5228 = vadd.f32 %v5160, %v5227
        %v5229 = vpop.f32.mrb[0].mxu0
        %5230 = vdwg.mxu0
        %vm5231 = vcmask 57344
        %5232 = vst.msk [vmem:[%s135] sm:$0x1] %vm5231, %v5228
        %s5233 = sand.u32 %s71, 1
        %s5234 = scalar_lea.sflag [#allocation3], %s5233
        %s5235 = sand.u32 %s71, 1
        %s5236 = scalar_lea.vmem [#allocation2], %s5235
        // Predicated region
        $region29: #{forward.1} parent=27 // pred_check
          %p5237 = pneg %p81
        $region30: #{forward.1} parent=27 // pred_check_branch
          %5239 = sbr.rel (%p5237) target = $region32
        $region31: #{forward.1} parent=27 // pred_region
          %s5241 = ssub.s32 16, 16
          %5242 = vsyncadd %s5234, %s5241
          %s5243 = smul.addr %s16, 16
          %s5244 = scalar_lea.hbm %s2, %s5243
          %s5246 = sshll.u32 %s5236, 4
          %s5247 = int_to_ptr.vmem [resolvable:$true] %s5246
          %5249 = dma.vmem_to_hbm [thread:$0]  %s5247, 16, %s5244, %s5234
        $region32: #{forward.1} parent=27 // pred_fallthru
          _
      $region28: #{forward.1} parent=5 // pred_fallthru
        _
      %p5250 = scmp.le.s32.totalorder 2, %s11
      // Predicated region
      $region33: #{forward.1} parent=5 // pred_check
        %p5251 = pneg %p5250
      $region34: #{forward.1} parent=5 // pred_check_branch
        %5253 = sbr.rel (%p5251) target = $region36
      $region35: #{forward.1} parent=5 // pred_region
        %s5254 = ssub.s32 %s11, 2
        // Predicated region
        $region37: #{forward.1} parent=35 // pred_check
          %p5255 = pneg %p87
        $region38: #{forward.1} parent=35 // pred_check_branch
          %5257 = sbr.rel (%p5255) target = $region40
        $region39: #{forward.1} parent=35 // pred_region
          %s5258 = sand.u32 %s72, 1
          %s5259 = scalar_lea.sflag [#allocation3], %s5258
          %s5260 = sand.u32 %s72, 1
          %s5261 = scalar_lea.vmem [#allocation2], %s5260
          %5262 = dma.done %s5259, 16
        $region40: #{forward.1} parent=35 // pred_fallthru
          _
      $region36: #{forward.1} parent=5 // pred_fallthru
        _
    $region6: #{forward.1} parent=1 // loop_footer
      %s15 = sadd.s32 1, %s11
    $region7: #{forward.1} parent=1 // loop_footer_branch
      %10 = sbr.rel target = $region3
    $region8: #{forward.1} parent=1 // loop_exit
      _
    %5263 = vsyncpa [#allocation3], 1
    %s5264 = scalar_lea.sflag [#allocation3], 1
    %5265 = vsyncpa %s5264, 1

</llo_original>
